<compile_context>
chip_gen: v5e
topology: v5e:2x2
jax: 0.10.0
libtpu: 0.0.40
codegen_flags: <defaults>
</compile_context>

<pallas_src>
import numpy as np
import jax
import jax.numpy as jnp
from jax.experimental import pallas as pl
from jax.experimental.pallas import tpu as pltpu


# ----------------------------------------------------------------------------
# Fused decoder kernel
# ----------------------------------------------------------------------------
def decoder_kernel(z_ref, w1fc_ref, b1fc_ref, w2fc_ref, b2fc_ref,
                   dw1_ref, db1_ref, g_ref, bt_ref, dw2_ref, db2_ref,
                   out_ref, x_s):
    f32 = jnp.float32
    bf16 = jnp.bfloat16
    B = z_ref.shape[0]

    # ---- fc1 -> relu -> fc2 -> relu (bf16 MXU operands, f32 accumulation) --
    h1 = jnp.dot(z_ref[...].astype(bf16), w1fc_ref[...],
                 preferred_element_type=f32) + b1fc_ref[...]
    h1 = jnp.maximum(h1, 0.0)                                     # (B, 128)
    h2 = jnp.dot(h1.astype(bf16), w2fc_ref[...],
                 preferred_element_type=f32) + b2fc_ref[...]
    h2 = jnp.maximum(h2, 0.0)                                     # (B, 2048), col = l*64 + c

    # ---- lane->sublane relayout into a zero-padded channels-last scratch ---
    # x_s[b, l+3, c] = x[b, l, c]; rows 0..2 and 35..39 stay zero so the tap
    # windows below read zeros outside the valid length range.
    x_s[...] = jnp.zeros_like(x_s)
    for l in range(32):
        x_s[:, l + 3, :] = h2[:, 64 * l:64 * (l + 1)]

    # ---- ConvTranspose1d #1 (64->32, k8, s2): phase-decomposed, 4 tap matmuls
    # Output column layout: ph*32 + o (even phase | odd phase).
    acc = None
    for t in range(4):
        win = x_s[:, pl.ds(t, 35), :].astype(bf16)                # (B, 35, 64)
        term = jnp.einsum('bmc,cd->bmd', win, dw1_ref[t],
                          preferred_element_type=f32)
        acc = term if acc is None else acc + term
    h = jnp.maximum(acc + db1_ref[...], 0.0)                      # (B, 35, 64)

    # ---- BatchNorm1d: train-mode batch stats, centered variance, f32 -------
    n = jnp.float32(B * 70)
    s = jnp.sum(h, axis=(0, 1), keepdims=True)                    # (1, 1, 64)
    # roll by 32 on the 64-lane axis adds the other phase's partial sum
    # (direction-agnostic for a half-length roll).
    mean = (s + pltpu.roll(s, shift=32, axis=2)) / n              # per-channel mean, both halves
    d = h - mean
    ss = jnp.sum(d * d, axis=(0, 1), keepdims=True)
    var = (ss + pltpu.roll(ss, shift=32, axis=2)) / n
    scale = g_ref[...] * jax.lax.rsqrt(var + 1e-5)                # (1, 1, 64), g/beta host-pretiled
    hn = d * scale + bt_ref[...]

    # ---- ConvTranspose1d #2 (32->nF, k2, s2): one block-diagonal matmul -----
    out = jnp.einsum('bmd,de->bme', hn.astype(bf16), dw2_ref[...],
                     preferred_element_type=f32) + db2_ref[...]   # (B, 35, 4*nF)
    out_ref[...] = out


# ----------------------------------------------------------------------------
# Host-side (trace-time) weight re-layout: pure constant folding.
# ----------------------------------------------------------------------------
def prep_decoder_params(params, n_features):
    f32, bf16 = jnp.float32, jnp.bfloat16

    w1fc = jnp.transpose(params['fc1_w']).astype(bf16)                 # (z_dim, 128)
    b1fc = params['fc1_b'].reshape(1, -1).astype(f32)

    # fc2 columns permuted from NCL order (c*32 + l) to channels-last (l*64 + c)
    w2fc = (jnp.transpose(params['fc2_w'])                             # (128, 2048)
            .reshape(128, 64, 32).transpose(0, 2, 1).reshape(128, 2048)
            .astype(bf16))
    b2fc = params['fc2_b'].reshape(64, 32).T.reshape(1, -1).astype(f32)

    # Deconv1: per-window-offset tap weights, even|odd phases along N.
    # Window offset t reads x[b, m - (3-t), :], so dw1[t] holds tap j = 3 - t.
    w1 = params['dc1_w']                                               # (64, 32, 8)
    taps = []
    for t in range(4):
        j = 3 - t
        taps.append(jnp.concatenate([w1[:, :, 2 * j], w1[:, :, 2 * j + 1]],
                                    axis=1))                           # (64, 64)
    dw1 = jnp.stack(taps, axis=0).astype(bf16)                         # (4, 64, 64)
    db1 = jnp.tile(params['dc1_b'], 2).reshape(1, 1, -1).astype(f32)   # (1, 1, 64)

    # BatchNorm gamma/beta pre-tiled to both phase halves (64 lanes).
    g64 = jnp.tile(params['bn_g'], 2).reshape(1, 1, -1).astype(f32)    # (1, 1, 64)
    bt64 = jnp.tile(params['bn_b'], 2).reshape(1, 1, -1).astype(f32)

    # Deconv2: block-diagonal (even-phase | odd-phase) x (tap0 | tap1).
    w2 = params['dc2_w']                                               # (32, nF, 2)
    w2cat = jnp.concatenate([w2[:, :, 0], w2[:, :, 1]], axis=1)        # (32, 2*nF)
    zero = jnp.zeros_like(w2cat)
    dw2 = jnp.concatenate(
        [jnp.concatenate([w2cat, zero], axis=1),
         jnp.concatenate([zero, w2cat], axis=1)], axis=0).astype(bf16)  # (64, 4*nF)
    db2 = jnp.tile(params['dc2_b'], 4).reshape(1, 1, -1).astype(f32)    # (1, 1, 4*nF)

    return (w1fc, b1fc, w2fc, b2fc, dw1, db1, g64, bt64, dw2, db2)


def decoder_forward(z, prep, n_features):
    """Mirrors Decoder.forward; returns (B, nFeatures, 140) float32 (NCL)."""
    B = z.shape[0]
    out35 = pl.pallas_call(
        decoder_kernel,
        out_shape=jax.ShapeDtypeStruct((B, 35, 4 * n_features), jnp.float32),
        scratch_shapes=[pltpu.VMEM((B, 40, 64), jnp.float32)],
    )(z.astype(jnp.float32), *prep)

    # lane index d*nF + f of out35 maps to output position 4*m + d:
    out = out35.reshape(B, 140, n_features)       # pure reshape (no interleave op)
    return jnp.transpose(out, (0, 2, 1))          # (B, nF, 140) NCL


# ----------------------------------------------------------------------------
# Pure numpy reference of the PyTorch forward (train-mode BatchNorm).
# ----------------------------------------------------------------------------
def reference_forward(z, p, n_features):
    z = np.asarray(z, np.float64)
    B = z.shape[0]
    h = np.maximum(z @ np.asarray(p['fc1_w'], np.float64).T
                   + np.asarray(p['fc1_b'], np.float64), 0.0)
    h = np.maximum(h @ np.asarray(p['fc2_w'], np.float64).T
                   + np.asarray(p['fc2_b'], np.float64), 0.0)
    x = h.reshape(B, 64, 32)

    W1 = np.asarray(p['dc1_w'], np.float64)              # (64, 32, 8)
    y = np.zeros((B, 32, 70))
    contrib = np.einsum('ncl,cok->nokl', x, W1)
    for k in range(8):
        y[:, :, k:k + 2 * 32:2] += contrib[:, :, k, :]
    y += np.asarray(p['dc1_b'], np.float64)[None, :, None]
    y = np.maximum(y, 0.0)

    mean = y.mean(axis=(0, 2))
    var = y.var(axis=(0, 2))
    g = np.asarray(p['bn_g'], np.float64)
    bt = np.asarray(p['bn_b'], np.float64)
    yn = ((y - mean[None, :, None]) / np.sqrt(var[None, :, None] + 1e-5)
          * g[None, :, None] + bt[None, :, None])

    W2 = np.asarray(p['dc2_w'], np.float64)               # (32, nF, 2)
    out = np.zeros((B, n_features, 140))
    contrib2 = np.einsum('ncl,cok->nokl', yn, W2)
    for k in range(2):
        out[:, :, k:k + 2 * 70:2] += contrib2[:, :, k, :]
    out += np.asarray(p['dc2_b'], np.float64)[None, :, None]
    return out


if __name__ == "__main__":
    B, Z_DIM, N_FEATURES = 2, 32, 6

    key = jax.random.PRNGKey(0)
    ks = jax.random.split(key, 9)
    params = {
        'fc1_w': 0.10 * jax.random.normal(ks[0], (128, Z_DIM), jnp.float32),
        'fc1_b': 0.10 * jax.random.normal(ks[1], (128,), jnp.float32),
        'fc2_w': 0.05 * jax.random.normal(ks[2], (64 * 32, 128), jnp.float32),
        'fc2_b': 0.05 * jax.random.normal(ks[3], (64 * 32,), jnp.float32),
        'dc1_w': 0.10 * jax.random.normal(ks[4], (64, 32, 8), jnp.float32),
        'dc1_b': 0.10 * jax.random.normal(ks[5], (32,), jnp.float32),
        'bn_g': jnp.ones((32,), jnp.float32),
        'bn_b': jnp.zeros((32,), jnp.float32),
        'dc2_w': 0.10 * jax.random.normal(ks[6], (32, N_FEATURES, 2),
                                          jnp.float32),
        'dc2_b': 0.10 * jax.random.normal(ks[7], (N_FEATURES,), jnp.float32),
    }
    z = jax.random.normal(ks[8], (B, Z_DIM), jnp.float32)

    prep = prep_decoder_params(params, N_FEATURES)        # one-time, off hot path
    fwd = jax.jit(lambda zz: decoder_forward(zz, prep, N_FEATURES))
    out = jax.block_until_ready(fwd(z))
    assert out.shape == (B, N_FEATURES, 140), out.shape

    ref = reference_forward(z, params, N_FEATURES)
    np.testing.assert_allclose(np.asarray(out, np.float64), ref,
                               rtol=5e-2, atol=5e-2)
    print("KERNEL_OK")
</pallas_src>

<mosaic_0001>
module attributes {stable_mosaic.version = 11 : i64} {
  func.func @decoder_kernel(%arg0: memref<2x32xf32, #tpu.memory_space<vmem>>, %arg1: memref<32x128xbf16, #tpu.memory_space<vmem>>, %arg2: memref<1x128xf32, #tpu.memory_space<vmem>>, %arg3: memref<128x2048xbf16, #tpu.memory_space<vmem>>, %arg4: memref<1x2048xf32, #tpu.memory_space<vmem>>, %arg5: memref<4x64x64xbf16, #tpu.memory_space<vmem>>, %arg6: memref<1x1x64xf32, #tpu.memory_space<vmem>>, %arg7: memref<1x1x64xf32, #tpu.memory_space<vmem>>, %arg8: memref<1x1x64xf32, #tpu.memory_space<vmem>>, %arg9: memref<64x24xbf16, #tpu.memory_space<vmem>>, %arg10: memref<1x1x24xf32, #tpu.memory_space<vmem>>, %arg11: memref<2x35x24xf32, #tpu.memory_space<vmem>>, %arg12: memref<2x40x64xf32, #tpu.memory_space<vmem>>) attributes {dimension_semantics = [], scalar_prefetch = 0 : i64, scratch_operands = 1 : i64, tpu.core_type = #tpu.core_type<tc>} {
    %c0 = arith.constant 0 : index
    %c0_0 = arith.constant 0 : index
    %0 = vector.load %arg0[%c0, %c0_0] : memref<2x32xf32, #tpu.memory_space<vmem>>, vector<2x32xf32>
    %1 = arith.truncf %0 : vector<2x32xf32> to vector<2x32xbf16>
    %c0_1 = arith.constant 0 : index
    %c0_2 = arith.constant 0 : index
    %2 = vector.load %arg1[%c0_1, %c0_2] : memref<32x128xbf16, #tpu.memory_space<vmem>>, vector<32x128xbf16>
    %cst = arith.constant dense<0.000000e+00> : vector<2x128xf32>
    %3 = tpu.matmul %1, %2, %cst {dimension_numbers = #tpu.dot_dimension_numbers<[1], [0], [0], [1], [0, 0, 1, 1], [], []>} : vector<2x32xbf16>, vector<32x128xbf16>, vector<2x128xf32> -> vector<2x128xf32>
    %c0_3 = arith.constant 0 : index
    %c0_4 = arith.constant 0 : index
    %4 = vector.load %arg2[%c0_3, %c0_4] : memref<1x128xf32, #tpu.memory_space<vmem>>, vector<1x128xf32>
    %5 = vector.broadcast %4 : vector<1x128xf32> to vector<2x128xf32>
    %6 = arith.addf %3, %5 : vector<2x128xf32>
    %cst_5 = arith.constant 0.000000e+00 : f32
    %7 = vector.broadcast %cst_5 : f32 to vector<2x128xf32>
    %8 = arith.maximumf %6, %7 : vector<2x128xf32>
    %9 = arith.truncf %8 : vector<2x128xf32> to vector<2x128xbf16>
    %c0_6 = arith.constant 0 : index
    %c0_7 = arith.constant 0 : index
    %10 = vector.load %arg3[%c0_6, %c0_7] : memref<128x2048xbf16, #tpu.memory_space<vmem>>, vector<128x2048xbf16>
    %cst_8 = arith.constant dense<0.000000e+00> : vector<2x2048xf32>
    %11 = tpu.matmul %9, %10, %cst_8 {dimension_numbers = #tpu.dot_dimension_numbers<[1], [0], [0], [1], [0, 0, 1, 1], [], []>} : vector<2x128xbf16>, vector<128x2048xbf16>, vector<2x2048xf32> -> vector<2x2048xf32>
    %c0_9 = arith.constant 0 : index
    %c0_10 = arith.constant 0 : index
    %12 = vector.load %arg4[%c0_9, %c0_10] : memref<1x2048xf32, #tpu.memory_space<vmem>>, vector<1x2048xf32>
    %13 = vector.broadcast %12 : vector<1x2048xf32> to vector<2x2048xf32>
    %14 = arith.addf %11, %13 : vector<2x2048xf32>
    %cst_11 = arith.constant 0.000000e+00 : f32
    %15 = vector.broadcast %cst_11 : f32 to vector<2x2048xf32>
    %16 = arith.maximumf %14, %15 : vector<2x2048xf32>
    %cst_12 = arith.constant 0.000000e+00 : f32
    %17 = vector.broadcast %cst_12 : f32 to vector<2x40x64xf32>
    %c0_13 = arith.constant 0 : index
    %c0_14 = arith.constant 0 : index
    %c0_15 = arith.constant 0 : index
    %18 = vector.load %arg12[%c0_13, %c0_14, %c0_15] : memref<2x40x64xf32, #tpu.memory_space<vmem>>, vector<2x40x64xf32>
    tpu.vector_store %arg12[%c0_13, %c0_14, %c0_15], %17 {strides = array<i32>} : memref<2x40x64xf32, #tpu.memory_space<vmem>>, vector<2x40x64xf32>,
    %19 = vector.extract_strided_slice %16 {offsets = [0, 0], sizes = [2, 64], strides = [1, 1]} : vector<2x2048xf32> to vector<2x64xf32>
    %c0_16 = arith.constant 0 : index
    %c3 = arith.constant 3 : index
    %c0_17 = arith.constant 0 : index
    %20 = vector.load %arg12[%c0_16, %c3, %c0_17] : memref<2x40x64xf32, #tpu.memory_space<vmem>>, vector<2x1x64xf32>
    %21 = vector.shape_cast %20 : vector<2x1x64xf32> to vector<2x64xf32>
    %22 = vector.shape_cast %19 : vector<2x64xf32> to vector<2x1x64xf32>
    tpu.vector_store %arg12[%c0_16, %c3, %c0_17], %22 {strides = array<i32>} : memref<2x40x64xf32, #tpu.memory_space<vmem>>, vector<2x1x64xf32>,
    %23 = vector.extract_strided_slice %16 {offsets = [0, 64], sizes = [2, 64], strides = [1, 1]} : vector<2x2048xf32> to vector<2x64xf32>
    %c0_18 = arith.constant 0 : index
    %c4 = arith.constant 4 : index
    %c0_19 = arith.constant 0 : index
    %24 = vector.load %arg12[%c0_18, %c4, %c0_19] : memref<2x40x64xf32, #tpu.memory_space<vmem>>, vector<2x1x64xf32>
    %25 = vector.shape_cast %24 : vector<2x1x64xf32> to vector<2x64xf32>
    %26 = vector.shape_cast %23 : vector<2x64xf32> to vector<2x1x64xf32>
    tpu.vector_store %arg12[%c0_18, %c4, %c0_19], %26 {strides = array<i32>} : memref<2x40x64xf32, #tpu.memory_space<vmem>>, vector<2x1x64xf32>,
    %27 = vector.extract_strided_slice %16 {offsets = [0, 128], sizes = [2, 64], strides = [1, 1]} : vector<2x2048xf32> to vector<2x64xf32>
    %c0_20 = arith.constant 0 : index
    %c5 = arith.constant 5 : index
    %c0_21 = arith.constant 0 : index
    %28 = vector.load %arg12[%c0_20, %c5, %c0_21] : memref<2x40x64xf32, #tpu.memory_space<vmem>>, vector<2x1x64xf32>
    %29 = vector.shape_cast %28 : vector<2x1x64xf32> to vector<2x64xf32>
    %30 = vector.shape_cast %27 : vector<2x64xf32> to vector<2x1x64xf32>
    tpu.vector_store %arg12[%c0_20, %c5, %c0_21], %30 {strides = array<i32>} : memref<2x40x64xf32, #tpu.memory_space<vmem>>, vector<2x1x64xf32>,
    %31 = vector.extract_strided_slice %16 {offsets = [0, 192], sizes = [2, 64], strides = [1, 1]} : vector<2x2048xf32> to vector<2x64xf32>
    %c0_22 = arith.constant 0 : index
    %c6 = arith.constant 6 : index
    %c0_23 = arith.constant 0 : index
    %32 = vector.load %arg12[%c0_22, %c6, %c0_23] : memref<2x40x64xf32, #tpu.memory_space<vmem>>, vector<2x1x64xf32>
    %33 = vector.shape_cast %32 : vector<2x1x64xf32> to vector<2x64xf32>
    %34 = vector.shape_cast %31 : vector<2x64xf32> to vector<2x1x64xf32>
    tpu.vector_store %arg12[%c0_22, %c6, %c0_23], %34 {strides = array<i32>} : memref<2x40x64xf32, #tpu.memory_space<vmem>>, vector<2x1x64xf32>,
    %35 = vector.extract_strided_slice %16 {offsets = [0, 256], sizes = [2, 64], strides = [1, 1]} : vector<2x2048xf32> to vector<2x64xf32>
    %c0_24 = arith.constant 0 : index
    %c7 = arith.constant 7 : index
    %c0_25 = arith.constant 0 : index
    %36 = vector.load %arg12[%c0_24, %c7, %c0_25] : memref<2x40x64xf32, #tpu.memory_space<vmem>>, vector<2x1x64xf32>
    %37 = vector.shape_cast %36 : vector<2x1x64xf32> to vector<2x64xf32>
    %38 = vector.shape_cast %35 : vector<2x64xf32> to vector<2x1x64xf32>
    tpu.vector_store %arg12[%c0_24, %c7, %c0_25], %38 {strides = array<i32>} : memref<2x40x64xf32, #tpu.memory_space<vmem>>, vector<2x1x64xf32>,
    %39 = vector.extract_strided_slice %16 {offsets = [0, 320], sizes = [2, 64], strides = [1, 1]} : vector<2x2048xf32> to vector<2x64xf32>
    %c0_26 = arith.constant 0 : index
    %c8 = arith.constant 8 : index
    %c0_27 = arith.constant 0 : index
    %40 = vector.load %arg12[%c0_26, %c8, %c0_27] : memref<2x40x64xf32, #tpu.memory_space<vmem>>, vector<2x1x64xf32>
    %41 = vector.shape_cast %40 : vector<2x1x64xf32> to vector<2x64xf32>
    %42 = vector.shape_cast %39 : vector<2x64xf32> to vector<2x1x64xf32>
    tpu.vector_store %arg12[%c0_26, %c8, %c0_27], %42 {strides = array<i32>} : memref<2x40x64xf32, #tpu.memory_space<vmem>>, vector<2x1x64xf32>,
    %43 = vector.extract_strided_slice %16 {offsets = [0, 384], sizes = [2, 64], strides = [1, 1]} : vector<2x2048xf32> to vector<2x64xf32>
    %c0_28 = arith.constant 0 : index
    %c9 = arith.constant 9 : index
    %c0_29 = arith.constant 0 : index
    %44 = vector.load %arg12[%c0_28, %c9, %c0_29] : memref<2x40x64xf32, #tpu.memory_space<vmem>>, vector<2x1x64xf32>
    %45 = vector.shape_cast %44 : vector<2x1x64xf32> to vector<2x64xf32>
    %46 = vector.shape_cast %43 : vector<2x64xf32> to vector<2x1x64xf32>
    tpu.vector_store %arg12[%c0_28, %c9, %c0_29], %46 {strides = array<i32>} : memref<2x40x64xf32, #tpu.memory_space<vmem>>, vector<2x1x64xf32>,
    %47 = vector.extract_strided_slice %16 {offsets = [0, 448], sizes = [2, 64], strides = [1, 1]} : vector<2x2048xf32> to vector<2x64xf32>
    %c0_30 = arith.constant 0 : index
    %c10 = arith.constant 10 : index
    %c0_31 = arith.constant 0 : index
    %48 = vector.load %arg12[%c0_30, %c10, %c0_31] : memref<2x40x64xf32, #tpu.memory_space<vmem>>, vector<2x1x64xf32>
    %49 = vector.shape_cast %48 : vector<2x1x64xf32> to vector<2x64xf32>
    %50 = vector.shape_cast %47 : vector<2x64xf32> to vector<2x1x64xf32>
    tpu.vector_store %arg12[%c0_30, %c10, %c0_31], %50 {strides = array<i32>} : memref<2x40x64xf32, #tpu.memory_space<vmem>>, vector<2x1x64xf32>,
    %51 = vector.extract_strided_slice %16 {offsets = [0, 512], sizes = [2, 64], strides = [1, 1]} : vector<2x2048xf32> to vector<2x64xf32>
    %c0_32 = arith.constant 0 : index
    %c11 = arith.constant 11 : index
    %c0_33 = arith.constant 0 : index
    %52 = vector.load %arg12[%c0_32, %c11, %c0_33] : memref<2x40x64xf32, #tpu.memory_space<vmem>>, vector<2x1x64xf32>
    %53 = vector.shape_cast %52 : vector<2x1x64xf32> to vector<2x64xf32>
    %54 = vector.shape_cast %51 : vector<2x64xf32> to vector<2x1x64xf32>
    tpu.vector_store %arg12[%c0_32, %c11, %c0_33], %54 {strides = array<i32>} : memref<2x40x64xf32, #tpu.memory_space<vmem>>, vector<2x1x64xf32>,
    %55 = vector.extract_strided_slice %16 {offsets = [0, 576], sizes = [2, 64], strides = [1, 1]} : vector<2x2048xf32> to vector<2x64xf32>
    %c0_34 = arith.constant 0 : index
    %c12 = arith.constant 12 : index
    %c0_35 = arith.constant 0 : index
    %56 = vector.load %arg12[%c0_34, %c12, %c0_35] : memref<2x40x64xf32, #tpu.memory_space<vmem>>, vector<2x1x64xf32>
    %57 = vector.shape_cast %56 : vector<2x1x64xf32> to vector<2x64xf32>
    %58 = vector.shape_cast %55 : vector<2x64xf32> to vector<2x1x64xf32>
    tpu.vector_store %arg12[%c0_34, %c12, %c0_35], %58 {strides = array<i32>} : memref<2x40x64xf32, #tpu.memory_space<vmem>>, vector<2x1x64xf32>,
    %59 = vector.extract_strided_slice %16 {offsets = [0, 640], sizes = [2, 64], strides = [1, 1]} : vector<2x2048xf32> to vector<2x64xf32>
    %c0_36 = arith.constant 0 : index
    %c13 = arith.constant 13 : index
    %c0_37 = arith.constant 0 : index
    %60 = vector.load %arg12[%c0_36, %c13, %c0_37] : memref<2x40x64xf32, #tpu.memory_space<vmem>>, vector<2x1x64xf32>
    %61 = vector.shape_cast %60 : vector<2x1x64xf32> to vector<2x64xf32>
    %62 = vector.shape_cast %59 : vector<2x64xf32> to vector<2x1x64xf32>
    tpu.vector_store %arg12[%c0_36, %c13, %c0_37], %62 {strides = array<i32>} : memref<2x40x64xf32, #tpu.memory_space<vmem>>, vector<2x1x64xf32>,
    %63 = vector.extract_strided_slice %16 {offsets = [0, 704], sizes = [2, 64], strides = [1, 1]} : vector<2x2048xf32> to vector<2x64xf32>
    %c0_38 = arith.constant 0 : index
    %c14 = arith.constant 14 : index
    %c0_39 = arith.constant 0 : index
    %64 = vector.load %arg12[%c0_38, %c14, %c0_39] : memref<2x40x64xf32, #tpu.memory_space<vmem>>, vector<2x1x64xf32>
    %65 = vector.shape_cast %64 : vector<2x1x64xf32> to vector<2x64xf32>
    %66 = vector.shape_cast %63 : vector<2x64xf32> to vector<2x1x64xf32>
    tpu.vector_store %arg12[%c0_38, %c14, %c0_39], %66 {strides = array<i32>} : memref<2x40x64xf32, #tpu.memory_space<vmem>>, vector<2x1x64xf32>,
    %67 = vector.extract_strided_slice %16 {offsets = [0, 768], sizes = [2, 64], strides = [1, 1]} : vector<2x2048xf32> to vector<2x64xf32>
    %c0_40 = arith.constant 0 : index
    %c15 = arith.constant 15 : index
    %c0_41 = arith.constant 0 : index
    %68 = vector.load %arg12[%c0_40, %c15, %c0_41] : memref<2x40x64xf32, #tpu.memory_space<vmem>>, vector<2x1x64xf32>
    %69 = vector.shape_cast %68 : vector<2x1x64xf32> to vector<2x64xf32>
    %70 = vector.shape_cast %67 : vector<2x64xf32> to vector<2x1x64xf32>
    tpu.vector_store %arg12[%c0_40, %c15, %c0_41], %70 {strides = array<i32>} : memref<2x40x64xf32, #tpu.memory_space<vmem>>, vector<2x1x64xf32>,
    %71 = vector.extract_strided_slice %16 {offsets = [0, 832], sizes = [2, 64], strides = [1, 1]} : vector<2x2048xf32> to vector<2x64xf32>
    %c0_42 = arith.constant 0 : index
    %c16 = arith.constant 16 : index
    %c0_43 = arith.constant 0 : index
    %72 = vector.load %arg12[%c0_42, %c16, %c0_43] : memref<2x40x64xf32, #tpu.memory_space<vmem>>, vector<2x1x64xf32>
    %73 = vector.shape_cast %72 : vector<2x1x64xf32> to vector<2x64xf32>
    %74 = vector.shape_cast %71 : vector<2x64xf32> to vector<2x1x64xf32>
    tpu.vector_store %arg12[%c0_42, %c16, %c0_43], %74 {strides = array<i32>} : memref<2x40x64xf32, #tpu.memory_space<vmem>>, vector<2x1x64xf32>,
    %75 = vector.extract_strided_slice %16 {offsets = [0, 896], sizes = [2, 64], strides = [1, 1]} : vector<2x2048xf32> to vector<2x64xf32>
    %c0_44 = arith.constant 0 : index
    %c17 = arith.constant 17 : index
    %c0_45 = arith.constant 0 : index
    %76 = vector.load %arg12[%c0_44, %c17, %c0_45] : memref<2x40x64xf32, #tpu.memory_space<vmem>>, vector<2x1x64xf32>
    %77 = vector.shape_cast %76 : vector<2x1x64xf32> to vector<2x64xf32>
    %78 = vector.shape_cast %75 : vector<2x64xf32> to vector<2x1x64xf32>
    tpu.vector_store %arg12[%c0_44, %c17, %c0_45], %78 {strides = array<i32>} : memref<2x40x64xf32, #tpu.memory_space<vmem>>, vector<2x1x64xf32>,
    %79 = vector.extract_strided_slice %16 {offsets = [0, 960], sizes = [2, 64], strides = [1, 1]} : vector<2x2048xf32> to vector<2x64xf32>
    %c0_46 = arith.constant 0 : index
    %c18 = arith.constant 18 : index
    %c0_47 = arith.constant 0 : index
    %80 = vector.load %arg12[%c0_46, %c18, %c0_47] : memref<2x40x64xf32, #tpu.memory_space<vmem>>, vector<2x1x64xf32>
    %81 = vector.shape_cast %80 : vector<2x1x64xf32> to vector<2x64xf32>
    %82 = vector.shape_cast %79 : vector<2x64xf32> to vector<2x1x64xf32>
    tpu.vector_store %arg12[%c0_46, %c18, %c0_47], %82 {strides = array<i32>} : memref<2x40x64xf32, #tpu.memory_space<vmem>>, vector<2x1x64xf32>,
    %83 = vector.extract_strided_slice %16 {offsets = [0, 1024], sizes = [2, 64], strides = [1, 1]} : vector<2x2048xf32> to vector<2x64xf32>
    %c0_48 = arith.constant 0 : index
    %c19 = arith.constant 19 : index
    %c0_49 = arith.constant 0 : index
    %84 = vector.load %arg12[%c0_48, %c19, %c0_49] : memref<2x40x64xf32, #tpu.memory_space<vmem>>, vector<2x1x64xf32>
    %85 = vector.shape_cast %84 : vector<2x1x64xf32> to vector<2x64xf32>
    %86 = vector.shape_cast %83 : vector<2x64xf32> to vector<2x1x64xf32>
    tpu.vector_store %arg12[%c0_48, %c19, %c0_49], %86 {strides = array<i32>} : memref<2x40x64xf32, #tpu.memory_space<vmem>>, vector<2x1x64xf32>,
    %87 = vector.extract_strided_slice %16 {offsets = [0, 1088], sizes = [2, 64], strides = [1, 1]} : vector<2x2048xf32> to vector<2x64xf32>
    %c0_50 = arith.constant 0 : index
    %c20 = arith.constant 20 : index
    %c0_51 = arith.constant 0 : index
    %88 = vector.load %arg12[%c0_50, %c20, %c0_51] : memref<2x40x64xf32, #tpu.memory_space<vmem>>, vector<2x1x64xf32>
    %89 = vector.shape_cast %88 : vector<2x1x64xf32> to vector<2x64xf32>
    %90 = vector.shape_cast %87 : vector<2x64xf32> to vector<2x1x64xf32>
    tpu.vector_store %arg12[%c0_50, %c20, %c0_51], %90 {strides = array<i32>} : memref<2x40x64xf32, #tpu.memory_space<vmem>>, vector<2x1x64xf32>,
    %91 = vector.extract_strided_slice %16 {offsets = [0, 1152], sizes = [2, 64], strides = [1, 1]} : vector<2x2048xf32> to vector<2x64xf32>
    %c0_52 = arith.constant 0 : index
    %c21 = arith.constant 21 : index
    %c0_53 = arith.constant 0 : index
    %92 = vector.load %arg12[%c0_52, %c21, %c0_53] : memref<2x40x64xf32, #tpu.memory_space<vmem>>, vector<2x1x64xf32>
    %93 = vector.shape_cast %92 : vector<2x1x64xf32> to vector<2x64xf32>
    %94 = vector.shape_cast %91 : vector<2x64xf32> to vector<2x1x64xf32>
    tpu.vector_store %arg12[%c0_52, %c21, %c0_53], %94 {strides = array<i32>} : memref<2x40x64xf32, #tpu.memory_space<vmem>>, vector<2x1x64xf32>,
    %95 = vector.extract_strided_slice %16 {offsets = [0, 1216], sizes = [2, 64], strides = [1, 1]} : vector<2x2048xf32> to vector<2x64xf32>
    %c0_54 = arith.constant 0 : index
    %c22 = arith.constant 22 : index
    %c0_55 = arith.constant 0 : index
    %96 = vector.load %arg12[%c0_54, %c22, %c0_55] : memref<2x40x64xf32, #tpu.memory_space<vmem>>, vector<2x1x64xf32>
    %97 = vector.shape_cast %96 : vector<2x1x64xf32> to vector<2x64xf32>
    %98 = vector.shape_cast %95 : vector<2x64xf32> to vector<2x1x64xf32>
    tpu.vector_store %arg12[%c0_54, %c22, %c0_55], %98 {strides = array<i32>} : memref<2x40x64xf32, #tpu.memory_space<vmem>>, vector<2x1x64xf32>,
    %99 = vector.extract_strided_slice %16 {offsets = [0, 1280], sizes = [2, 64], strides = [1, 1]} : vector<2x2048xf32> to vector<2x64xf32>
    %c0_56 = arith.constant 0 : index
    %c23 = arith.constant 23 : index
    %c0_57 = arith.constant 0 : index
    %100 = vector.load %arg12[%c0_56, %c23, %c0_57] : memref<2x40x64xf32, #tpu.memory_space<vmem>>, vector<2x1x64xf32>
    %101 = vector.shape_cast %100 : vector<2x1x64xf32> to vector<2x64xf32>
    %102 = vector.shape_cast %99 : vector<2x64xf32> to vector<2x1x64xf32>
    tpu.vector_store %arg12[%c0_56, %c23, %c0_57], %102 {strides = array<i32>} : memref<2x40x64xf32, #tpu.memory_space<vmem>>, vector<2x1x64xf32>,
    %103 = vector.extract_strided_slice %16 {offsets = [0, 1344], sizes = [2, 64], strides = [1, 1]} : vector<2x2048xf32> to vector<2x64xf32>
    %c0_58 = arith.constant 0 : index
    %c24 = arith.constant 24 : index
    %c0_59 = arith.constant 0 : index
    %104 = vector.load %arg12[%c0_58, %c24, %c0_59] : memref<2x40x64xf32, #tpu.memory_space<vmem>>, vector<2x1x64xf32>
    %105 = vector.shape_cast %104 : vector<2x1x64xf32> to vector<2x64xf32>
    %106 = vector.shape_cast %103 : vector<2x64xf32> to vector<2x1x64xf32>
    tpu.vector_store %arg12[%c0_58, %c24, %c0_59], %106 {strides = array<i32>} : memref<2x40x64xf32, #tpu.memory_space<vmem>>, vector<2x1x64xf32>,
    %107 = vector.extract_strided_slice %16 {offsets = [0, 1408], sizes = [2, 64], strides = [1, 1]} : vector<2x2048xf32> to vector<2x64xf32>
    %c0_60 = arith.constant 0 : index
    %c25 = arith.constant 25 : index
    %c0_61 = arith.constant 0 : index
    %108 = vector.load %arg12[%c0_60, %c25, %c0_61] : memref<2x40x64xf32, #tpu.memory_space<vmem>>, vector<2x1x64xf32>
    %109 = vector.shape_cast %108 : vector<2x1x64xf32> to vector<2x64xf32>
    %110 = vector.shape_cast %107 : vector<2x64xf32> to vector<2x1x64xf32>
    tpu.vector_store %arg12[%c0_60, %c25, %c0_61], %110 {strides = array<i32>} : memref<2x40x64xf32, #tpu.memory_space<vmem>>, vector<2x1x64xf32>,
    %111 = vector.extract_strided_slice %16 {offsets = [0, 1472], sizes = [2, 64], strides = [1, 1]} : vector<2x2048xf32> to vector<2x64xf32>
    %c0_62 = arith.constant 0 : index
    %c26 = arith.constant 26 : index
    %c0_63 = arith.constant 0 : index
    %112 = vector.load %arg12[%c0_62, %c26, %c0_63] : memref<2x40x64xf32, #tpu.memory_space<vmem>>, vector<2x1x64xf32>
    %113 = vector.shape_cast %112 : vector<2x1x64xf32> to vector<2x64xf32>
    %114 = vector.shape_cast %111 : vector<2x64xf32> to vector<2x1x64xf32>
    tpu.vector_store %arg12[%c0_62, %c26, %c0_63], %114 {strides = array<i32>} : memref<2x40x64xf32, #tpu.memory_space<vmem>>, vector<2x1x64xf32>,
    %115 = vector.extract_strided_slice %16 {offsets = [0, 1536], sizes = [2, 64], strides = [1, 1]} : vector<2x2048xf32> to vector<2x64xf32>
    %c0_64 = arith.constant 0 : index
    %c27 = arith.constant 27 : index
    %c0_65 = arith.constant 0 : index
    %116 = vector.load %arg12[%c0_64, %c27, %c0_65] : memref<2x40x64xf32, #tpu.memory_space<vmem>>, vector<2x1x64xf32>
    %117 = vector.shape_cast %116 : vector<2x1x64xf32> to vector<2x64xf32>
    %118 = vector.shape_cast %115 : vector<2x64xf32> to vector<2x1x64xf32>
    tpu.vector_store %arg12[%c0_64, %c27, %c0_65], %118 {strides = array<i32>} : memref<2x40x64xf32, #tpu.memory_space<vmem>>, vector<2x1x64xf32>,
    %119 = vector.extract_strided_slice %16 {offsets = [0, 1600], sizes = [2, 64], strides = [1, 1]} : vector<2x2048xf32> to vector<2x64xf32>
    %c0_66 = arith.constant 0 : index
    %c28 = arith.constant 28 : index
    %c0_67 = arith.constant 0 : index
    %120 = vector.load %arg12[%c0_66, %c28, %c0_67] : memref<2x40x64xf32, #tpu.memory_space<vmem>>, vector<2x1x64xf32>
    %121 = vector.shape_cast %120 : vector<2x1x64xf32> to vector<2x64xf32>
    %122 = vector.shape_cast %119 : vector<2x64xf32> to vector<2x1x64xf32>
    tpu.vector_store %arg12[%c0_66, %c28, %c0_67], %122 {strides = array<i32>} : memref<2x40x64xf32, #tpu.memory_space<vmem>>, vector<2x1x64xf32>,
    %123 = vector.extract_strided_slice %16 {offsets = [0, 1664], sizes = [2, 64], strides = [1, 1]} : vector<2x2048xf32> to vector<2x64xf32>
    %c0_68 = arith.constant 0 : index
    %c29 = arith.constant 29 : index
    %c0_69 = arith.constant 0 : index
    %124 = vector.load %arg12[%c0_68, %c29, %c0_69] : memref<2x40x64xf32, #tpu.memory_space<vmem>>, vector<2x1x64xf32>
    %125 = vector.shape_cast %124 : vector<2x1x64xf32> to vector<2x64xf32>
    %126 = vector.shape_cast %123 : vector<2x64xf32> to vector<2x1x64xf32>
    tpu.vector_store %arg12[%c0_68, %c29, %c0_69], %126 {strides = array<i32>} : memref<2x40x64xf32, #tpu.memory_space<vmem>>, vector<2x1x64xf32>,
    %127 = vector.extract_strided_slice %16 {offsets = [0, 1728], sizes = [2, 64], strides = [1, 1]} : vector<2x2048xf32> to vector<2x64xf32>
    %c0_70 = arith.constant 0 : index
    %c30 = arith.constant 30 : index
    %c0_71 = arith.constant 0 : index
    %128 = vector.load %arg12[%c0_70, %c30, %c0_71] : memref<2x40x64xf32, #tpu.memory_space<vmem>>, vector<2x1x64xf32>
    %129 = vector.shape_cast %128 : vector<2x1x64xf32> to vector<2x64xf32>
    %130 = vector.shape_cast %127 : vector<2x64xf32> to vector<2x1x64xf32>
    tpu.vector_store %arg12[%c0_70, %c30, %c0_71], %130 {strides = array<i32>} : memref<2x40x64xf32, #tpu.memory_space<vmem>>, vector<2x1x64xf32>,
    %131 = vector.extract_strided_slice %16 {offsets = [0, 1792], sizes = [2, 64], strides = [1, 1]} : vector<2x2048xf32> to vector<2x64xf32>
    %c0_72 = arith.constant 0 : index
    %c31 = arith.constant 31 : index
    %c0_73 = arith.constant 0 : index
    %132 = vector.load %arg12[%c0_72, %c31, %c0_73] : memref<2x40x64xf32, #tpu.memory_space<vmem>>, vector<2x1x64xf32>
    %133 = vector.shape_cast %132 : vector<2x1x64xf32> to vector<2x64xf32>
    %134 = vector.shape_cast %131 : vector<2x64xf32> to vector<2x1x64xf32>
    tpu.vector_store %arg12[%c0_72, %c31, %c0_73], %134 {strides = array<i32>} : memref<2x40x64xf32, #tpu.memory_space<vmem>>, vector<2x1x64xf32>,
    %135 = vector.extract_strided_slice %16 {offsets = [0, 1856], sizes = [2, 64], strides = [1, 1]} : vector<2x2048xf32> to vector<2x64xf32>
    %c0_74 = arith.constant 0 : index
    %c32 = arith.constant 32 : index
    %c0_75 = arith.constant 0 : index
    %136 = vector.load %arg12[%c0_74, %c32, %c0_75] : memref<2x40x64xf32, #tpu.memory_space<vmem>>, vector<2x1x64xf32>
    %137 = vector.shape_cast %136 : vector<2x1x64xf32> to vector<2x64xf32>
    %138 = vector.shape_cast %135 : vector<2x64xf32> to vector<2x1x64xf32>
    tpu.vector_store %arg12[%c0_74, %c32, %c0_75], %138 {strides = array<i32>} : memref<2x40x64xf32, #tpu.memory_space<vmem>>, vector<2x1x64xf32>,
    %139 = vector.extract_strided_slice %16 {offsets = [0, 1920], sizes = [2, 64], strides = [1, 1]} : vector<2x2048xf32> to vector<2x64xf32>
    %c0_76 = arith.constant 0 : index
    %c33 = arith.constant 33 : index
    %c0_77 = arith.constant 0 : index
    %140 = vector.load %arg12[%c0_76, %c33, %c0_77] : memref<2x40x64xf32, #tpu.memory_space<vmem>>, vector<2x1x64xf32>
    %141 = vector.shape_cast %140 : vector<2x1x64xf32> to vector<2x64xf32>
    %142 = vector.shape_cast %139 : vector<2x64xf32> to vector<2x1x64xf32>
    tpu.vector_store %arg12[%c0_76, %c33, %c0_77], %142 {strides = array<i32>} : memref<2x40x64xf32, #tpu.memory_space<vmem>>, vector<2x1x64xf32>,
    %143 = vector.extract_strided_slice %16 {offsets = [0, 1984], sizes = [2, 64], strides = [1, 1]} : vector<2x2048xf32> to vector<2x64xf32>
    %c0_78 = arith.constant 0 : index
    %c34 = arith.constant 34 : index
    %c0_79 = arith.constant 0 : index
    %144 = vector.load %arg12[%c0_78, %c34, %c0_79] : memref<2x40x64xf32, #tpu.memory_space<vmem>>, vector<2x1x64xf32>
    %145 = vector.shape_cast %144 : vector<2x1x64xf32> to vector<2x64xf32>
    %146 = vector.shape_cast %143 : vector<2x64xf32> to vector<2x1x64xf32>
    tpu.vector_store %arg12[%c0_78, %c34, %c0_79], %146 {strides = array<i32>} : memref<2x40x64xf32, #tpu.memory_space<vmem>>, vector<2x1x64xf32>,
    %c0_80 = arith.constant 0 : index
    %c0_81 = arith.constant 0 : index
    %c0_82 = arith.constant 0 : index
    %147 = vector.load %arg12[%c0_80, %c0_81, %c0_82] : memref<2x40x64xf32, #tpu.memory_space<vmem>>, vector<2x35x64xf32>
    %148 = arith.truncf %147 : vector<2x35x64xf32> to vector<2x35x64xbf16>
    %c0_83 = arith.constant 0 : index
    %c0_84 = arith.constant 0 : index
    %c0_85 = arith.constant 0 : index
    %149 = vector.load %arg5[%c0_83, %c0_84, %c0_85] : memref<4x64x64xbf16, #tpu.memory_space<vmem>>, vector<1x64x64xbf16>
    %150 = vector.shape_cast %149 : vector<1x64x64xbf16> to vector<64x64xbf16>
    "tpu.trace_start"() <{level = 10 : i32, message = "bmc,cd->bmd"}> : () -> ()
    %cst_86 = arith.constant dense<0.000000e+00> : vector<2x35x64xf32>
    %151 = tpu.matmul %148, %150, %cst_86 {dimension_numbers = #tpu.dot_dimension_numbers<[2], [0], [0, 1], [1], [0, 0, 0, 1, 1, 1], [], []>} : vector<2x35x64xbf16>, vector<64x64xbf16>, vector<2x35x64xf32> -> vector<2x35x64xf32>
    "tpu.trace_stop"() : () -> ()
    %c0_87 = arith.constant 0 : index
    %c1 = arith.constant 1 : index
    %c0_88 = arith.constant 0 : index
    %152 = vector.load %arg12[%c0_87, %c1, %c0_88] : memref<2x40x64xf32, #tpu.memory_space<vmem>>, vector<2x35x64xf32>
    %153 = arith.truncf %152 : vector<2x35x64xf32> to vector<2x35x64xbf16>
    %c1_89 = arith.constant 1 : index
    %c0_90 = arith.constant 0 : index
    %c0_91 = arith.constant 0 : index
    %154 = vector.load %arg5[%c1_89, %c0_90, %c0_91] : memref<4x64x64xbf16, #tpu.memory_space<vmem>>, vector<1x64x64xbf16>
    %155 = vector.shape_cast %154 : vector<1x64x64xbf16> to vector<64x64xbf16>
    "tpu.trace_start"() <{level = 10 : i32, message = "bmc,cd->bmd"}> : () -> ()
    %cst_92 = arith.constant dense<0.000000e+00> : vector<2x35x64xf32>
    %156 = tpu.matmul %153, %155, %cst_92 {dimension_numbers = #tpu.dot_dimension_numbers<[2], [0], [0, 1], [1], [0, 0, 0, 1, 1, 1], [], []>} : vector<2x35x64xbf16>, vector<64x64xbf16>, vector<2x35x64xf32> -> vector<2x35x64xf32>
    "tpu.trace_stop"() : () -> ()
    %157 = arith.addf %151, %156 : vector<2x35x64xf32>
    %c0_93 = arith.constant 0 : index
    %c2 = arith.constant 2 : index
    %c0_94 = arith.constant 0 : index
    %158 = vector.load %arg12[%c0_93, %c2, %c0_94] : memref<2x40x64xf32, #tpu.memory_space<vmem>>, vector<2x35x64xf32>
    %159 = arith.truncf %158 : vector<2x35x64xf32> to vector<2x35x64xbf16>
    %c2_95 = arith.constant 2 : index
    %c0_96 = arith.constant 0 : index
    %c0_97 = arith.constant 0 : index
    %160 = vector.load %arg5[%c2_95, %c0_96, %c0_97] : memref<4x64x64xbf16, #tpu.memory_space<vmem>>, vector<1x64x64xbf16>
    %161 = vector.shape_cast %160 : vector<1x64x64xbf16> to vector<64x64xbf16>
    "tpu.trace_start"() <{level = 10 : i32, message = "bmc,cd->bmd"}> : () -> ()
    %cst_98 = arith.constant dense<0.000000e+00> : vector<2x35x64xf32>
    %162 = tpu.matmul %159, %161, %cst_98 {dimension_numbers = #tpu.dot_dimension_numbers<[2], [0], [0, 1], [1], [0, 0, 0, 1, 1, 1], [], []>} : vector<2x35x64xbf16>, vector<64x64xbf16>, vector<2x35x64xf32> -> vector<2x35x64xf32>
    "tpu.trace_stop"() : () -> ()
    %163 = arith.addf %157, %162 : vector<2x35x64xf32>
    %c0_99 = arith.constant 0 : index
    %c3_100 = arith.constant 3 : index
    %c0_101 = arith.constant 0 : index
    %164 = vector.load %arg12[%c0_99, %c3_100, %c0_101] : memref<2x40x64xf32, #tpu.memory_space<vmem>>, vector<2x35x64xf32>
    %165 = arith.truncf %164 : vector<2x35x64xf32> to vector<2x35x64xbf16>
    %c3_102 = arith.constant 3 : index
    %c0_103 = arith.constant 0 : index
    %c0_104 = arith.constant 0 : index
    %166 = vector.load %arg5[%c3_102, %c0_103, %c0_104] : memref<4x64x64xbf16, #tpu.memory_space<vmem>>, vector<1x64x64xbf16>
    %167 = vector.shape_cast %166 : vector<1x64x64xbf16> to vector<64x64xbf16>
    "tpu.trace_start"() <{level = 10 : i32, message = "bmc,cd->bmd"}> : () -> ()
    %cst_105 = arith.constant dense<0.000000e+00> : vector<2x35x64xf32>
    %168 = tpu.matmul %165, %167, %cst_105 {dimension_numbers = #tpu.dot_dimension_numbers<[2], [0], [0, 1], [1], [0, 0, 0, 1, 1, 1], [], []>} : vector<2x35x64xbf16>, vector<64x64xbf16>, vector<2x35x64xf32> -> vector<2x35x64xf32>
    "tpu.trace_stop"() : () -> ()
    %169 = arith.addf %163, %168 : vector<2x35x64xf32>
    %c0_106 = arith.constant 0 : index
    %c0_107 = arith.constant 0 : index
    %c0_108 = arith.constant 0 : index
    %170 = vector.load %arg6[%c0_106, %c0_107, %c0_108] : memref<1x1x64xf32, #tpu.memory_space<vmem>>, vector<1x1x64xf32>
    %171 = vector.broadcast %170 : vector<1x1x64xf32> to vector<2x35x64xf32>
    %172 = arith.addf %169, %171 : vector<2x35x64xf32>
    %cst_109 = arith.constant 0.000000e+00 : f32
    %173 = vector.broadcast %cst_109 : f32 to vector<2x35x64xf32>
    %174 = arith.maximumf %172, %173 : vector<2x35x64xf32>
    %cst_110 = arith.constant dense<0.000000e+00> : vector<64xf32>
    %175 = vector.multi_reduction <add>, %174, %cst_110 [0, 1] : vector<2x35x64xf32> to vector<64xf32>
    %176 = vector.shape_cast %175 : vector<64xf32> to vector<1x1x64xf32>
    %c32_i32 = arith.constant 32 : i32
    %177 = tpu.dynamic_rotate %176 by %c32_i32 dim 2 : vector<1x1x64xf32>, i32 -> vector<1x1x64xf32>
    %178 = arith.addf %176, %177 : vector<1x1x64xf32>
    %cst_111 = arith.constant 1.400000e+02 : f32
    %179 = vector.broadcast %cst_111 : f32 to vector<1x1x64xf32>
    %180 = arith.divf %178, %179 : vector<1x1x64xf32>
    %181 = vector.broadcast %180 : vector<1x1x64xf32> to vector<2x35x64xf32>
    %182 = arith.subf %174, %181 : vector<2x35x64xf32>
    %183 = arith.mulf %182, %182 : vector<2x35x64xf32>
    %cst_112 = arith.constant dense<0.000000e+00> : vector<64xf32>
    %184 = vector.multi_reduction <add>, %183, %cst_112 [0, 1] : vector<2x35x64xf32> to vector<64xf32>
    %185 = vector.shape_cast %184 : vector<64xf32> to vector<1x1x64xf32>
    %c32_i32_113 = arith.constant 32 : i32
    %186 = tpu.dynamic_rotate %185 by %c32_i32_113 dim 2 : vector<1x1x64xf32>, i32 -> vector<1x1x64xf32>
    %187 = arith.addf %185, %186 : vector<1x1x64xf32>
    %cst_114 = arith.constant 1.400000e+02 : f32
    %188 = vector.broadcast %cst_114 : f32 to vector<1x1x64xf32>
    %189 = arith.divf %187, %188 : vector<1x1x64xf32>
    %c0_115 = arith.constant 0 : index
    %c0_116 = arith.constant 0 : index
    %c0_117 = arith.constant 0 : index
    %190 = vector.load %arg7[%c0_115, %c0_116, %c0_117] : memref<1x1x64xf32, #tpu.memory_space<vmem>>, vector<1x1x64xf32>
    %cst_118 = arith.constant 9.99999974E-6 : f32
    %191 = vector.broadcast %cst_118 : f32 to vector<1x1x64xf32>
    %192 = arith.addf %189, %191 : vector<1x1x64xf32>
    %193 = math.rsqrt %192 : vector<1x1x64xf32>
    %194 = arith.mulf %190, %193 : vector<1x1x64xf32>
    %195 = vector.broadcast %194 : vector<1x1x64xf32> to vector<2x35x64xf32>
    %196 = arith.mulf %182, %195 : vector<2x35x64xf32>
    %c0_119 = arith.constant 0 : index
    %c0_120 = arith.constant 0 : index
    %c0_121 = arith.constant 0 : index
    %197 = vector.load %arg8[%c0_119, %c0_120, %c0_121] : memref<1x1x64xf32, #tpu.memory_space<vmem>>, vector<1x1x64xf32>
    %198 = vector.broadcast %197 : vector<1x1x64xf32> to vector<2x35x64xf32>
    %199 = arith.addf %196, %198 : vector<2x35x64xf32>
    %200 = arith.truncf %199 : vector<2x35x64xf32> to vector<2x35x64xbf16>
    %c0_122 = arith.constant 0 : index
    %c0_123 = arith.constant 0 : index
    %201 = vector.load %arg9[%c0_122, %c0_123] : memref<64x24xbf16, #tpu.memory_space<vmem>>, vector<64x24xbf16>
    "tpu.trace_start"() <{level = 10 : i32, message = "bmd,de->bme"}> : () -> ()
    %cst_124 = arith.constant dense<0.000000e+00> : vector<2x35x24xf32>
    %202 = tpu.matmul %200, %201, %cst_124 {dimension_numbers = #tpu.dot_dimension_numbers<[2], [0], [0, 1], [1], [0, 0, 0, 1, 1, 1], [], []>} : vector<2x35x64xbf16>, vector<64x24xbf16>, vector<2x35x24xf32> -> vector<2x35x24xf32>
    "tpu.trace_stop"() : () -> ()
    %c0_125 = arith.constant 0 : index
    %c0_126 = arith.constant 0 : index
    %c0_127 = arith.constant 0 : index
    %203 = vector.load %arg10[%c0_125, %c0_126, %c0_127] : memref<1x1x24xf32, #tpu.memory_space<vmem>>, vector<1x1x24xf32>
    %204 = vector.broadcast %203 : vector<1x1x24xf32> to vector<2x35x24xf32>
    %205 = arith.addf %202, %204 : vector<2x35x24xf32>
    %c0_128 = arith.constant 0 : index
    %c0_129 = arith.constant 0 : index
    %c0_130 = arith.constant 0 : index
    %206 = vector.load %arg11[%c0_128, %c0_129, %c0_130] : memref<2x35x24xf32, #tpu.memory_space<vmem>>, vector<2x35x24xf32>
    tpu.vector_store %arg11[%c0_128, %c0_129, %c0_130], %205 {strides = array<i32>} : memref<2x35x24xf32, #tpu.memory_space<vmem>>, vector<2x35x24xf32>,
    return
  }
}

</mosaic_0001>

<llo_original>
// kernel: _lambda_.1
$region0: #{_lambda_.1}
  #allocation0 [shape = 'u32[]', space=smem, size = 0x4, offset = 0x4, fixed_abs, tag = 'smem constant byte address 0x4 - core index']
  #allocation1 [shape = 'u32[72,128]{1,0:T(1,128)}', space=vmem, size = 0x9000, scoped, tag = 'internal scratch']
  #allocation2 [shape = 'f32[2,40,64]{2,1,0:T(8,128)}', space=vmem, size = 0xa000, scoped, tag = 'scratch operand']
  %s0 = inlined_call_operand.vmem [shape: f32[2,32], index: 0, kind: input, shape index: {}]
  %s1 = inlined_call_operand.hbm [shape: bf16[32,128], index: 1, kind: input, shape index: {}]
  %s2 = inlined_call_operand.vmem [shape: f32[1,128], index: 2, kind: input, shape index: {}]
  %s3 = inlined_call_operand.hbm [shape: bf16[128,2048], index: 3, kind: input, shape index: {}]
  %s4 = inlined_call_operand.hbm [shape: f32[1,2048], index: 4, kind: input, shape index: {}]
  %s5 = inlined_call_operand.hbm [shape: bf16[4,64,64], index: 5, kind: input, shape index: {}]
  %s6 = inlined_call_operand.vmem [shape: f32[1,1,64], index: 6, kind: input, shape index: {}]
  %s7 = inlined_call_operand.vmem [shape: f32[1,1,64], index: 7, kind: input, shape index: {}]
  %s8 = inlined_call_operand.vmem [shape: f32[1,1,64], index: 8, kind: input, shape index: {}]
  %s9 = inlined_call_operand.hbm [shape: bf16[64,24], index: 9, kind: input, shape index: {}]
  %s10 = inlined_call_operand.vmem [shape: f32[1,1,24], index: 10, kind: input, shape index: {}]
  %s11 = inlined_call_operand.vmem [shape: f32[2,35,24], index: 11, kind: output, shape index: {}]
  %s12 = sld [smem:[#allocation0]]
  $region74: #{_lambda_.1} parent=0
    _
  %s14 = ssub.s32 1, %s12
  %s15 = scalar_select 0, %s14, %s12
  $region1: #{_lambda_.1} parent=0
    #allocation3 [shape = 'u8[8192]{0}', space=vmem, size = 0x2000, scoped, tag = 'input window, operand 1, single buffered']
    #allocation4 [shape = 's32[1]{0}', space=sflag, size = 0x4, scoped, tag = 'scoped memory for _lambda_.1']
    #allocation5 [shape = 'u8[524288]{0}', space=vmem, size = 0x80000, scoped, tag = 'input window, operand 3, single buffered']
    #allocation6 [shape = 's32[1]{0}', space=sflag, size = 0x4, scoped, tag = 'scoped memory for _lambda_.1']
    #allocation7 [shape = 'u8[8192]{0}', space=vmem, size = 0x2000, scoped, tag = 'input window, operand 4, single buffered']
    #allocation8 [shape = 'u8[65536]{0}', space=vmem, size = 0x10000, scoped, tag = 'input window, operand 5, single buffered']
    #allocation9 [shape = 's32[1]{0}', space=sflag, size = 0x4, scoped, tag = 'scoped memory for _lambda_.1']
    #allocation10 [shape = 'u8[16384]{0}', space=vmem, size = 0x4000, scoped, tag = 'input window, operand 9, single buffered']
    %16 = vsyncpa [#allocation4], 0
    %17 = vsyncpa [#allocation6], 0
    %18 = vsyncpa [#allocation9], 0
    // Predicated region
    $region2: #{_lambda_.1} parent=1 // pred_check
      _
    $region3: #{_lambda_.1} parent=1 // pred_check_branch
      %20 = sbr.rel (0) target = $region5
    $region4: #{_lambda_.1} parent=1 // pred_region
      _
    $region5: #{_lambda_.1} parent=1 // pred_fallthru
      _
    // Predicated region
    $region6: #{_lambda_.1} parent=1 // pred_check
      _
    $region7: #{_lambda_.1} parent=1 // pred_check_branch
      %22 = sbr.rel (0) target = $region9
    $region8: #{_lambda_.1} parent=1 // pred_region
      %24 = vsyncadd [#allocation4], 0
      %s25 = sshll.u32 %s1, 4
      %s26 = int_to_ptr.hbm [resolvable:$true] %s25
      %s27 = sshll.u32 [#allocation3], 4
      %s28 = int_to_ptr.vmem [resolvable:$true] %s27
      %33 = dma.hbm_to_vmem [thread:$0]  %s26, 256, %s28, [#allocation4], 64, 64, 4
    $region9: #{_lambda_.1} parent=1 // pred_fallthru
      _
    // Predicated region
    $region10: #{_lambda_.1} parent=1 // pred_check
      _
    $region11: #{_lambda_.1} parent=1 // pred_check_branch
      %35 = sbr.rel (0) target = $region13
    $region12: #{_lambda_.1} parent=1 // pred_region
      _
    $region13: #{_lambda_.1} parent=1 // pred_fallthru
      _
    // Predicated region
    $region14: #{_lambda_.1} parent=1 // pred_check
      _
    $region15: #{_lambda_.1} parent=1 // pred_check_branch
      %37 = sbr.rel (0) target = $region17
    $region16: #{_lambda_.1} parent=1 // pred_region
      %39 = vsyncadd [#allocation6], 0
      %s40 = sshll.u32 %s3, 4
      %s41 = int_to_ptr.hbm [resolvable:$true] %s40
      %s42 = sshll.u32 [#allocation5], 4
      %s43 = int_to_ptr.vmem [resolvable:$true] %s42
      %48 = dma.hbm_to_vmem [thread:$0]  %s41, 16384, %s43, [#allocation6], 1024, 1024, 64
    $region17: #{_lambda_.1} parent=1 // pred_fallthru
      _
    // Predicated region
    $region18: #{_lambda_.1} parent=1 // pred_check
      _
    $region19: #{_lambda_.1} parent=1 // pred_check_branch
      %50 = sbr.rel (0) target = $region21
    $region20: #{_lambda_.1} parent=1 // pred_region
      %52 = vsyncadd [#allocation6], 0
      %s54 = sshll.u32 %s4, 4
      %s55 = int_to_ptr.hbm [resolvable:$true] %s54
      %s56 = sshll.u32 [#allocation7], 4
      %s57 = int_to_ptr.vmem [resolvable:$true] %s56
      %59 = dma.hbm_to_vmem [thread:$0]  %s55, 256, %s57, [#allocation6]
    $region21: #{_lambda_.1} parent=1 // pred_fallthru
      _
    // Predicated region
    $region22: #{_lambda_.1} parent=1 // pred_check
      _
    $region23: #{_lambda_.1} parent=1 // pred_check_branch
      %61 = sbr.rel (0) target = $region25
    $region24: #{_lambda_.1} parent=1 // pred_region
      %63 = vsyncadd [#allocation9], 0
      %s64 = sshll.u32 %s5, 4
      %s65 = int_to_ptr.hbm [resolvable:$true] %s64
      %s66 = sshll.u32 [#allocation8], 4
      %s67 = int_to_ptr.vmem [resolvable:$true] %s66
      %72 = dma.hbm_to_vmem [thread:$0]  %s65, 2048, %s67, [#allocation9], 64, 64, 4
    $region25: #{_lambda_.1} parent=1 // pred_fallthru
      _
    // Predicated region
    $region26: #{_lambda_.1} parent=1 // pred_check
      _
    $region27: #{_lambda_.1} parent=1 // pred_check_branch
      %74 = sbr.rel (0) target = $region29
    $region28: #{_lambda_.1} parent=1 // pred_region
      _
    $region29: #{_lambda_.1} parent=1 // pred_fallthru
      _
    // Predicated region
    $region30: #{_lambda_.1} parent=1 // pred_check
      _
    $region31: #{_lambda_.1} parent=1 // pred_check_branch
      %76 = sbr.rel (0) target = $region33
    $region32: #{_lambda_.1} parent=1 // pred_region
      _
    $region33: #{_lambda_.1} parent=1 // pred_fallthru
      _
    // Predicated region
    $region34: #{_lambda_.1} parent=1 // pred_check
      _
    $region35: #{_lambda_.1} parent=1 // pred_check_branch
      %78 = sbr.rel (0) target = $region37
    $region36: #{_lambda_.1} parent=1 // pred_region
      _
    $region37: #{_lambda_.1} parent=1 // pred_fallthru
      _
    // Predicated region
    $region38: #{_lambda_.1} parent=1 // pred_check
      _
    $region39: #{_lambda_.1} parent=1 // pred_check_branch
      %80 = sbr.rel (0) target = $region41
    $region40: #{_lambda_.1} parent=1 // pred_region
      %82 = vsyncadd [#allocation9], 0
      %s83 = sshll.u32 %s9, 4
      %s84 = int_to_ptr.hbm [resolvable:$true] %s83
      %s85 = sshll.u32 [#allocation10], 4
      %s86 = int_to_ptr.vmem [resolvable:$true] %s85
      %91 = dma.hbm_to_vmem [thread:$0]  %s84, 512, %s86, [#allocation9], 64, 64, 4
    $region41: #{_lambda_.1} parent=1 // pred_fallthru
      _
    // Predicated region
    $region42: #{_lambda_.1} parent=1 // pred_check
      _
    $region43: #{_lambda_.1} parent=1 // pred_check_branch
      %93 = sbr.rel (0) target = $region45
    $region44: #{_lambda_.1} parent=1 // pred_region
      _
    $region45: #{_lambda_.1} parent=1 // pred_fallthru
      _
    // Predicated region
    $region46: #{_lambda_.1} parent=1 // pred_check
      _
    $region47: #{_lambda_.1} parent=1 // pred_check_branch
      %95 = sbr.rel (0) target = $region49
    $region48: #{_lambda_.1} parent=1 // pred_region
      %97 = dma.done [#allocation4], 256
    $region49: #{_lambda_.1} parent=1 // pred_fallthru
      _
    // Predicated region
    $region50: #{_lambda_.1} parent=1 // pred_check
      _
    $region51: #{_lambda_.1} parent=1 // pred_check_branch
      %99 = sbr.rel (0) target = $region53
    $region52: #{_lambda_.1} parent=1 // pred_region
      %101 = dma.done [#allocation6], 16384
    $region53: #{_lambda_.1} parent=1 // pred_fallthru
      _
    // Predicated region
    $region54: #{_lambda_.1} parent=1 // pred_check
      _
    $region55: #{_lambda_.1} parent=1 // pred_check_branch
      %103 = sbr.rel (0) target = $region57
    $region56: #{_lambda_.1} parent=1 // pred_region
      %105 = dma.done [#allocation6], 256
    $region57: #{_lambda_.1} parent=1 // pred_fallthru
      _
    // Predicated region
    $region58: #{_lambda_.1} parent=1 // pred_check
      _
    $region59: #{_lambda_.1} parent=1 // pred_check_branch
      %107 = sbr.rel (0) target = $region61
    $region60: #{_lambda_.1} parent=1 // pred_region
      %109 = dma.done [#allocation9], 2048
    $region61: #{_lambda_.1} parent=1 // pred_fallthru
      _
    // Predicated region
    $region62: #{_lambda_.1} parent=1 // pred_check
      _
    $region63: #{_lambda_.1} parent=1 // pred_check_branch
      %111 = sbr.rel (0) target = $region65
    $region64: #{_lambda_.1} parent=1 // pred_region
      %113 = dma.done [#allocation9], 512
    $region65: #{_lambda_.1} parent=1 // pred_fallthru
      _
    %v115 = vld [vmem:[%s0] sm:$0x3]
    %v116 = vpack.c.bf16 %v115, %v115
    %v117 = vld [vmem:[#allocation3] sm:$0xf]
    %v118 = vld [vmem:[#allocation3 + $0x4] sm:$0xf]
    %v119 = vld [vmem:[#allocation3 + $0x8] sm:$0xf]
    %v120 = vld [vmem:[#allocation3 + $0xc] sm:$0xf]
    %v121 = vld [vmem:[%s2] sm:$0x1]
    %v123 = vperm.slane %v121, 0
    %v129 = vunpack.c.l.b16 %v117
    %v130 = vunpack.c.l.b16 %v118
    %v131 = vunpack.c.l.b16 %v119
    %v132 = vunpack.c.l.b16 %v120
    %v133 = vpack.c.b16 %v130, %v129
    %v134 = vpack.c.b16 %v132, %v131
    %vm137 = vcmask 261120
    %v139 = vsel %vm137, %v116, 0
    %141 = vmatpush.bf16.msra.mxu0 0
    %142 = vmatpush.bf16.msra.mxu0 0
    %143 = vmatpush.bf16.msra.mxu0 0
    %144 = vmatpush.bf16.msra.mxu0 0
    %145 = vmatpush.bf16.msra.mxu0 0
    %146 = vmatpush.bf16.msra.mxu0 0
    %147 = vmatpush.bf16.msra.mxu0 %v134
    %148 = vmatpush.bf16.msra.mxu0 %v133
    %149 = vmatmul.bf16.gmra.mxu0 %v139
    %v150 = vpop.f32.mrf.mxu0
    %v151 = vadd.f32 %v123, %v150
    %v152 = vpop.f32.mrf.mxu0
    %153 = vdwg.mxu0
    %v154 = vmax.f32 %v151, 0.0
    %v155 = vpack.c.bf16 %v154, %v154
    %v156 = vld [vmem:[#allocation5] sm:$0xff]
    %v157 = vld [vmem:[#allocation5 + $0x8] sm:$0xff]
    %v158 = vld [vmem:[#allocation5 + $0x10] sm:$0xff]
    %v159 = vld [vmem:[#allocation5 + $0x18] sm:$0xff]
    %v160 = vld [vmem:[#allocation5 + $0x20] sm:$0xff]
    %v161 = vld [vmem:[#allocation5 + $0x28] sm:$0xff]
    %v162 = vld [vmem:[#allocation5 + $0x30] sm:$0xff]
    %v163 = vld [vmem:[#allocation5 + $0x38] sm:$0xff]
    %v164 = vld [vmem:[#allocation5 + $0x40] sm:$0xff]
    %v165 = vld [vmem:[#allocation5 + $0x48] sm:$0xff]
    %v166 = vld [vmem:[#allocation5 + $0x50] sm:$0xff]
    %v167 = vld [vmem:[#allocation5 + $0x58] sm:$0xff]
    %v168 = vld [vmem:[#allocation5 + $0x60] sm:$0xff]
    %v169 = vld [vmem:[#allocation5 + $0x68] sm:$0xff]
    %v170 = vld [vmem:[#allocation5 + $0x70] sm:$0xff]
    %v171 = vld [vmem:[#allocation5 + $0x78] sm:$0xff]
    %v172 = vld [vmem:[#allocation5 + $0x80] sm:$0xff]
    %v173 = vld [vmem:[#allocation5 + $0x88] sm:$0xff]
    %v174 = vld [vmem:[#allocation5 + $0x90] sm:$0xff]
    %v175 = vld [vmem:[#allocation5 + $0x98] sm:$0xff]
    %v176 = vld [vmem:[#allocation5 + $0xa0] sm:$0xff]
    %v177 = vld [vmem:[#allocation5 + $0xa8] sm:$0xff]
    %v178 = vld [vmem:[#allocation5 + $0xb0] sm:$0xff]
    %v179 = vld [vmem:[#allocation5 + $0xb8] sm:$0xff]
    %v180 = vld [vmem:[#allocation5 + $0xc0] sm:$0xff]
    %v181 = vld [vmem:[#allocation5 + $0xc8] sm:$0xff]
    %v182 = vld [vmem:[#allocation5 + $0xd0] sm:$0xff]
    %v183 = vld [vmem:[#allocation5 + $0xd8] sm:$0xff]
    %v184 = vld [vmem:[#allocation5 + $0xe0] sm:$0xff]
    %v185 = vld [vmem:[#allocation5 + $0xe8] sm:$0xff]
    %v186 = vld [vmem:[#allocation5 + $0xf0] sm:$0xff]
    %v187 = vld [vmem:[#allocation5 + $0xf8] sm:$0xff]
    %v188 = vld [vmem:[#allocation5 + $0x100] sm:$0xff]
    %v189 = vld [vmem:[#allocation5 + $0x108] sm:$0xff]
    %v190 = vld [vmem:[#allocation5 + $0x110] sm:$0xff]
    %v191 = vld [vmem:[#allocation5 + $0x118] sm:$0xff]
    %v192 = vld [vmem:[#allocation5 + $0x120] sm:$0xff]
    %v193 = vld [vmem:[#allocation5 + $0x128] sm:$0xff]
    %v194 = vld [vmem:[#allocation5 + $0x130] sm:$0xff]
    %v195 = vld [vmem:[#allocation5 + $0x138] sm:$0xff]
    %v196 = vld [vmem:[#allocation5 + $0x140] sm:$0xff]
    %v197 = vld [vmem:[#allocation5 + $0x148] sm:$0xff]
    %v198 = vld [vmem:[#allocation5 + $0x150] sm:$0xff]
    %v199 = vld [vmem:[#allocation5 + $0x158] sm:$0xff]
    %v200 = vld [vmem:[#allocation5 + $0x160] sm:$0xff]
    %v201 = vld [vmem:[#allocation5 + $0x168] sm:$0xff]
    %v202 = vld [vmem:[#allocation5 + $0x170] sm:$0xff]
    %v203 = vld [vmem:[#allocation5 + $0x178] sm:$0xff]
    %v204 = vld [vmem:[#allocation5 + $0x180] sm:$0xff]
    %v205 = vld [vmem:[#allocation5 + $0x188] sm:$0xff]
    %v206 = vld [vmem:[#allocation5 + $0x190] sm:$0xff]
    %v207 = vld [vmem:[#allocation5 + $0x198] sm:$0xff]
    %v208 = vld [vmem:[#allocation5 + $0x1a0] sm:$0xff]
    %v209 = vld [vmem:[#allocation5 + $0x1a8] sm:$0xff]
    %v210 = vld [vmem:[#allocation5 + $0x1b0] sm:$0xff]
    %v211 = vld [vmem:[#allocation5 + $0x1b8] sm:$0xff]
    %v212 = vld [vmem:[#allocation5 + $0x1c0] sm:$0xff]
    %v213 = vld [vmem:[#allocation5 + $0x1c8] sm:$0xff]
    %v214 = vld [vmem:[#allocation5 + $0x1d0] sm:$0xff]
    %v215 = vld [vmem:[#allocation5 + $0x1d8] sm:$0xff]
    %v216 = vld [vmem:[#allocation5 + $0x1e0] sm:$0xff]
    %v217 = vld [vmem:[#allocation5 + $0x1e8] sm:$0xff]
    %v218 = vld [vmem:[#allocation5 + $0x1f0] sm:$0xff]
    %v219 = vld [vmem:[#allocation5 + $0x1f8] sm:$0xff]
    %v220 = vld [vmem:[#allocation5 + $0x200] sm:$0xff]
    %v221 = vld [vmem:[#allocation5 + $0x208] sm:$0xff]
    %v222 = vld [vmem:[#allocation5 + $0x210] sm:$0xff]
    %v223 = vld [vmem:[#allocation5 + $0x218] sm:$0xff]
    %v224 = vld [vmem:[#allocation5 + $0x220] sm:$0xff]
    %v225 = vld [vmem:[#allocation5 + $0x228] sm:$0xff]
    %v226 = vld [vmem:[#allocation5 + $0x230] sm:$0xff]
    %v227 = vld [vmem:[#allocation5 + $0x238] sm:$0xff]
    %v228 = vld [vmem:[#allocation5 + $0x240] sm:$0xff]
    %v229 = vld [vmem:[#allocation5 + $0x248] sm:$0xff]
    %v230 = vld [vmem:[#allocation5 + $0x250] sm:$0xff]
    %v231 = vld [vmem:[#allocation5 + $0x258] sm:$0xff]
    %v232 = vld [vmem:[#allocation5 + $0x260] sm:$0xff]
    %v233 = vld [vmem:[#allocation5 + $0x268] sm:$0xff]
    %v234 = vld [vmem:[#allocation5 + $0x270] sm:$0xff]
    %v235 = vld [vmem:[#allocation5 + $0x278] sm:$0xff]
    %v236 = vld [vmem:[#allocation5 + $0x280] sm:$0xff]
    %v237 = vld [vmem:[#allocation5 + $0x288] sm:$0xff]
    %v238 = vld [vmem:[#allocation5 + $0x290] sm:$0xff]
    %v239 = vld [vmem:[#allocation5 + $0x298] sm:$0xff]
    %v240 = vld [vmem:[#allocation5 + $0x2a0] sm:$0xff]
    %v241 = vld [vmem:[#allocation5 + $0x2a8] sm:$0xff]
    %v242 = vld [vmem:[#allocation5 + $0x2b0] sm:$0xff]
    %v243 = vld [vmem:[#allocation5 + $0x2b8] sm:$0xff]
    %v244 = vld [vmem:[#allocation5 + $0x2c0] sm:$0xff]
    %v245 = vld [vmem:[#allocation5 + $0x2c8] sm:$0xff]
    %v246 = vld [vmem:[#allocation5 + $0x2d0] sm:$0xff]
    %v247 = vld [vmem:[#allocation5 + $0x2d8] sm:$0xff]
    %v248 = vld [vmem:[#allocation5 + $0x2e0] sm:$0xff]
    %v249 = vld [vmem:[#allocation5 + $0x2e8] sm:$0xff]
    %v250 = vld [vmem:[#allocation5 + $0x2f0] sm:$0xff]
    %v251 = vld [vmem:[#allocation5 + $0x2f8] sm:$0xff]
    %v252 = vld [vmem:[#allocation5 + $0x300] sm:$0xff]
    %v253 = vld [vmem:[#allocation5 + $0x308] sm:$0xff]
    %v254 = vld [vmem:[#allocation5 + $0x310] sm:$0xff]
    %v255 = vld [vmem:[#allocation5 + $0x318] sm:$0xff]
    %v256 = vld [vmem:[#allocation5 + $0x320] sm:$0xff]
    %v257 = vld [vmem:[#allocation5 + $0x328] sm:$0xff]
    %v258 = vld [vmem:[#allocation5 + $0x330] sm:$0xff]
    %v259 = vld [vmem:[#allocation5 + $0x338] sm:$0xff]
    %v260 = vld [vmem:[#allocation5 + $0x340] sm:$0xff]
    %v261 = vld [vmem:[#allocation5 + $0x348] sm:$0xff]
    %v262 = vld [vmem:[#allocation5 + $0x350] sm:$0xff]
    %v263 = vld [vmem:[#allocation5 + $0x358] sm:$0xff]
    %v264 = vld [vmem:[#allocation5 + $0x360] sm:$0xff]
    %v265 = vld [vmem:[#allocation5 + $0x368] sm:$0xff]
    %v266 = vld [vmem:[#allocation5 + $0x370] sm:$0xff]
    %v267 = vld [vmem:[#allocation5 + $0x378] sm:$0xff]
    %v268 = vld [vmem:[#allocation5 + $0x380] sm:$0xff]
    %v269 = vld [vmem:[#allocation5 + $0x388] sm:$0xff]
    %v270 = vld [vmem:[#allocation5 + $0x390] sm:$0xff]
    %v271 = vld [vmem:[#allocation5 + $0x398] sm:$0xff]
    %v272 = vld [vmem:[#allocation5 + $0x3a0] sm:$0xff]
    %v273 = vld [vmem:[#allocation5 + $0x3a8] sm:$0xff]
    %v274 = vld [vmem:[#allocation5 + $0x3b0] sm:$0xff]
    %v275 = vld [vmem:[#allocation5 + $0x3b8] sm:$0xff]
    %v276 = vld [vmem:[#allocation5 + $0x3c0] sm:$0xff]
    %v277 = vld [vmem:[#allocation5 + $0x3c8] sm:$0xff]
    %v278 = vld [vmem:[#allocation5 + $0x3d0] sm:$0xff]
    %v279 = vld [vmem:[#allocation5 + $0x3d8] sm:$0xff]
    %v280 = vld [vmem:[#allocation5 + $0x3e0] sm:$0xff]
    %v281 = vld [vmem:[#allocation5 + $0x3e8] sm:$0xff]
    %v282 = vld [vmem:[#allocation5 + $0x3f0] sm:$0xff]
    %v283 = vld [vmem:[#allocation5 + $0x3f8] sm:$0xff]
    %v284 = vld [vmem:[#allocation7] sm:$0xff]
    %v285 = vld [vmem:[#allocation7 + $0x8] sm:$0xff]
    %v288 = vperm.slane %v284, 0
    %v289 = vperm.slane %v284, 1
    %v290 = vperm.slane %v284, 2
    %v291 = vperm.slane %v284, 3
    %v292 = vperm.slane %v284, 4
    %v293 = vperm.slane %v284, 5
    %v294 = vperm.slane %v284, 6
    %v295 = vperm.slane %v284, 7
    %v296 = vperm.slane %v285, 0
    %v297 = vperm.slane %v285, 1
    %v298 = vperm.slane %v285, 2
    %v299 = vperm.slane %v285, 3
    %v300 = vperm.slane %v285, 4
    %v301 = vperm.slane %v285, 5
    %v302 = vperm.slane %v285, 6
    %v303 = vperm.slane %v285, 7
    %v448 = vunpack.c.l.b16 %v156
    %v449 = vunpack.c.h.b16 %v156
    %v450 = vunpack.c.l.b16 %v157
    %v451 = vunpack.c.h.b16 %v157
    %v452 = vunpack.c.l.b16 %v158
    %v453 = vunpack.c.h.b16 %v158
    %v454 = vunpack.c.l.b16 %v159
    %v455 = vunpack.c.h.b16 %v159
    %v456 = vunpack.c.l.b16 %v160
    %v457 = vunpack.c.h.b16 %v160
    %v458 = vunpack.c.l.b16 %v161
    %v459 = vunpack.c.h.b16 %v161
    %v460 = vunpack.c.l.b16 %v162
    %v461 = vunpack.c.h.b16 %v162
    %v462 = vunpack.c.l.b16 %v163
    %v463 = vunpack.c.h.b16 %v163
    %v464 = vunpack.c.l.b16 %v164
    %v465 = vunpack.c.h.b16 %v164
    %v466 = vunpack.c.l.b16 %v165
    %v467 = vunpack.c.h.b16 %v165
    %v468 = vunpack.c.l.b16 %v166
    %v469 = vunpack.c.h.b16 %v166
    %v470 = vunpack.c.l.b16 %v167
    %v471 = vunpack.c.h.b16 %v167
    %v472 = vunpack.c.l.b16 %v168
    %v473 = vunpack.c.h.b16 %v168
    %v474 = vunpack.c.l.b16 %v169
    %v475 = vunpack.c.h.b16 %v169
    %v476 = vunpack.c.l.b16 %v170
    %v477 = vunpack.c.h.b16 %v170
    %v478 = vunpack.c.l.b16 %v171
    %v479 = vunpack.c.h.b16 %v171
    %v480 = vunpack.c.l.b16 %v172
    %v481 = vunpack.c.h.b16 %v172
    %v482 = vunpack.c.l.b16 %v173
    %v483 = vunpack.c.h.b16 %v173
    %v484 = vunpack.c.l.b16 %v174
    %v485 = vunpack.c.h.b16 %v174
    %v486 = vunpack.c.l.b16 %v175
    %v487 = vunpack.c.h.b16 %v175
    %v488 = vunpack.c.l.b16 %v176
    %v489 = vunpack.c.h.b16 %v176
    %v490 = vunpack.c.l.b16 %v177
    %v491 = vunpack.c.h.b16 %v177
    %v492 = vunpack.c.l.b16 %v178
    %v493 = vunpack.c.h.b16 %v178
    %v494 = vunpack.c.l.b16 %v179
    %v495 = vunpack.c.h.b16 %v179
    %v496 = vunpack.c.l.b16 %v180
    %v497 = vunpack.c.h.b16 %v180
    %v498 = vunpack.c.l.b16 %v181
    %v499 = vunpack.c.h.b16 %v181
    %v500 = vunpack.c.l.b16 %v182
    %v501 = vunpack.c.h.b16 %v182
    %v502 = vunpack.c.l.b16 %v183
    %v503 = vunpack.c.h.b16 %v183
    %v504 = vunpack.c.l.b16 %v184
    %v505 = vunpack.c.h.b16 %v184
    %v506 = vunpack.c.l.b16 %v185
    %v507 = vunpack.c.h.b16 %v185
    %v508 = vunpack.c.l.b16 %v186
    %v509 = vunpack.c.h.b16 %v186
    %v510 = vunpack.c.l.b16 %v187
    %v511 = vunpack.c.h.b16 %v187
    %v512 = vunpack.c.l.b16 %v188
    %v513 = vunpack.c.h.b16 %v188
    %v514 = vunpack.c.l.b16 %v189
    %v515 = vunpack.c.h.b16 %v189
    %v516 = vunpack.c.l.b16 %v190
    %v517 = vunpack.c.h.b16 %v190
    %v518 = vunpack.c.l.b16 %v191
    %v519 = vunpack.c.h.b16 %v191
    %v520 = vunpack.c.l.b16 %v192
    %v521 = vunpack.c.h.b16 %v192
    %v522 = vunpack.c.l.b16 %v193
    %v523 = vunpack.c.h.b16 %v193
    %v524 = vunpack.c.l.b16 %v194
    %v525 = vunpack.c.h.b16 %v194
    %v526 = vunpack.c.l.b16 %v195
    %v527 = vunpack.c.h.b16 %v195
    %v528 = vunpack.c.l.b16 %v196
    %v529 = vunpack.c.h.b16 %v196
    %v530 = vunpack.c.l.b16 %v197
    %v531 = vunpack.c.h.b16 %v197
    %v532 = vunpack.c.l.b16 %v198
    %v533 = vunpack.c.h.b16 %v198
    %v534 = vunpack.c.l.b16 %v199
    %v535 = vunpack.c.h.b16 %v199
    %v536 = vunpack.c.l.b16 %v200
    %v537 = vunpack.c.h.b16 %v200
    %v538 = vunpack.c.l.b16 %v201
    %v539 = vunpack.c.h.b16 %v201
    %v540 = vunpack.c.l.b16 %v202
    %v541 = vunpack.c.h.b16 %v202
    %v542 = vunpack.c.l.b16 %v203
    %v543 = vunpack.c.h.b16 %v203
    %v544 = vunpack.c.l.b16 %v204
    %v545 = vunpack.c.h.b16 %v204
    %v546 = vunpack.c.l.b16 %v205
    %v547 = vunpack.c.h.b16 %v205
    %v548 = vunpack.c.l.b16 %v206
    %v549 = vunpack.c.h.b16 %v206
    %v550 = vunpack.c.l.b16 %v207
    %v551 = vunpack.c.h.b16 %v207
    %v552 = vunpack.c.l.b16 %v208
    %v553 = vunpack.c.h.b16 %v208
    %v554 = vunpack.c.l.b16 %v209
    %v555 = vunpack.c.h.b16 %v209
    %v556 = vunpack.c.l.b16 %v210
    %v557 = vunpack.c.h.b16 %v210
    %v558 = vunpack.c.l.b16 %v211
    %v559 = vunpack.c.h.b16 %v211
    %v560 = vunpack.c.l.b16 %v212
    %v561 = vunpack.c.h.b16 %v212
    %v562 = vunpack.c.l.b16 %v213
    %v563 = vunpack.c.h.b16 %v213
    %v564 = vunpack.c.l.b16 %v214
    %v565 = vunpack.c.h.b16 %v214
    %v566 = vunpack.c.l.b16 %v215
    %v567 = vunpack.c.h.b16 %v215
    %v568 = vunpack.c.l.b16 %v216
    %v569 = vunpack.c.h.b16 %v216
    %v570 = vunpack.c.l.b16 %v217
    %v571 = vunpack.c.h.b16 %v217
    %v572 = vunpack.c.l.b16 %v218
    %v573 = vunpack.c.h.b16 %v218
    %v574 = vunpack.c.l.b16 %v219
    %v575 = vunpack.c.h.b16 %v219
    %v576 = vunpack.c.l.b16 %v220
    %v577 = vunpack.c.h.b16 %v220
    %v578 = vunpack.c.l.b16 %v221
    %v579 = vunpack.c.h.b16 %v221
    %v580 = vunpack.c.l.b16 %v222
    %v581 = vunpack.c.h.b16 %v222
    %v582 = vunpack.c.l.b16 %v223
    %v583 = vunpack.c.h.b16 %v223
    %v584 = vunpack.c.l.b16 %v224
    %v585 = vunpack.c.h.b16 %v224
    %v586 = vunpack.c.l.b16 %v225
    %v587 = vunpack.c.h.b16 %v225
    %v588 = vunpack.c.l.b16 %v226
    %v589 = vunpack.c.h.b16 %v226
    %v590 = vunpack.c.l.b16 %v227
    %v591 = vunpack.c.h.b16 %v227
    %v592 = vunpack.c.l.b16 %v228
    %v593 = vunpack.c.h.b16 %v228
    %v594 = vunpack.c.l.b16 %v229
    %v595 = vunpack.c.h.b16 %v229
    %v596 = vunpack.c.l.b16 %v230
    %v597 = vunpack.c.h.b16 %v230
    %v598 = vunpack.c.l.b16 %v231
    %v599 = vunpack.c.h.b16 %v231
    %v600 = vunpack.c.l.b16 %v232
    %v601 = vunpack.c.h.b16 %v232
    %v602 = vunpack.c.l.b16 %v233
    %v603 = vunpack.c.h.b16 %v233
    %v604 = vunpack.c.l.b16 %v234
    %v605 = vunpack.c.h.b16 %v234
    %v606 = vunpack.c.l.b16 %v235
    %v607 = vunpack.c.h.b16 %v235
    %v608 = vunpack.c.l.b16 %v236
    %v609 = vunpack.c.h.b16 %v236
    %v610 = vunpack.c.l.b16 %v237
    %v611 = vunpack.c.h.b16 %v237
    %v612 = vunpack.c.l.b16 %v238
    %v613 = vunpack.c.h.b16 %v238
    %v614 = vunpack.c.l.b16 %v239
    %v615 = vunpack.c.h.b16 %v239
    %v616 = vunpack.c.l.b16 %v240
    %v617 = vunpack.c.h.b16 %v240
    %v618 = vunpack.c.l.b16 %v241
    %v619 = vunpack.c.h.b16 %v241
    %v620 = vunpack.c.l.b16 %v242
    %v621 = vunpack.c.h.b16 %v242
    %v622 = vunpack.c.l.b16 %v243
    %v623 = vunpack.c.h.b16 %v243
    %v624 = vunpack.c.l.b16 %v244
    %v625 = vunpack.c.h.b16 %v244
    %v626 = vunpack.c.l.b16 %v245
    %v627 = vunpack.c.h.b16 %v245
    %v628 = vunpack.c.l.b16 %v246
    %v629 = vunpack.c.h.b16 %v246
    %v630 = vunpack.c.l.b16 %v247
    %v631 = vunpack.c.h.b16 %v247
    %v632 = vunpack.c.l.b16 %v248
    %v633 = vunpack.c.h.b16 %v248
    %v634 = vunpack.c.l.b16 %v249
    %v635 = vunpack.c.h.b16 %v249
    %v636 = vunpack.c.l.b16 %v250
    %v637 = vunpack.c.h.b16 %v250
    %v638 = vunpack.c.l.b16 %v251
    %v639 = vunpack.c.h.b16 %v251
    %v640 = vunpack.c.l.b16 %v252
    %v641 = vunpack.c.h.b16 %v252
    %v642 = vunpack.c.l.b16 %v253
    %v643 = vunpack.c.h.b16 %v253
    %v644 = vunpack.c.l.b16 %v254
    %v645 = vunpack.c.h.b16 %v254
    %v646 = vunpack.c.l.b16 %v255
    %v647 = vunpack.c.h.b16 %v255
    %v648 = vunpack.c.l.b16 %v256
    %v649 = vunpack.c.h.b16 %v256
    %v650 = vunpack.c.l.b16 %v257
    %v651 = vunpack.c.h.b16 %v257
    %v652 = vunpack.c.l.b16 %v258
    %v653 = vunpack.c.h.b16 %v258
    %v654 = vunpack.c.l.b16 %v259
    %v655 = vunpack.c.h.b16 %v259
    %v656 = vunpack.c.l.b16 %v260
    %v657 = vunpack.c.h.b16 %v260
    %v658 = vunpack.c.l.b16 %v261
    %v659 = vunpack.c.h.b16 %v261
    %v660 = vunpack.c.l.b16 %v262
    %v661 = vunpack.c.h.b16 %v262
    %v662 = vunpack.c.l.b16 %v263
    %v663 = vunpack.c.h.b16 %v263
    %v664 = vunpack.c.l.b16 %v264
    %v665 = vunpack.c.h.b16 %v264
    %v666 = vunpack.c.l.b16 %v265
    %v667 = vunpack.c.h.b16 %v265
    %v668 = vunpack.c.l.b16 %v266
    %v669 = vunpack.c.h.b16 %v266
    %v670 = vunpack.c.l.b16 %v267
    %v671 = vunpack.c.h.b16 %v267
    %v672 = vunpack.c.l.b16 %v268
    %v673 = vunpack.c.h.b16 %v268
    %v674 = vunpack.c.l.b16 %v269
    %v675 = vunpack.c.h.b16 %v269
    %v676 = vunpack.c.l.b16 %v270
    %v677 = vunpack.c.h.b16 %v270
    %v678 = vunpack.c.l.b16 %v271
    %v679 = vunpack.c.h.b16 %v271
    %v680 = vunpack.c.l.b16 %v272
    %v681 = vunpack.c.h.b16 %v272
    %v682 = vunpack.c.l.b16 %v273
    %v683 = vunpack.c.h.b16 %v273
    %v684 = vunpack.c.l.b16 %v274
    %v685 = vunpack.c.h.b16 %v274
    %v686 = vunpack.c.l.b16 %v275
    %v687 = vunpack.c.h.b16 %v275
    %v688 = vunpack.c.l.b16 %v276
    %v689 = vunpack.c.h.b16 %v276
    %v690 = vunpack.c.l.b16 %v277
    %v691 = vunpack.c.h.b16 %v277
    %v692 = vunpack.c.l.b16 %v278
    %v693 = vunpack.c.h.b16 %v278
    %v694 = vunpack.c.l.b16 %v279
    %v695 = vunpack.c.h.b16 %v279
    %v696 = vunpack.c.l.b16 %v280
    %v697 = vunpack.c.h.b16 %v280
    %v698 = vunpack.c.l.b16 %v281
    %v699 = vunpack.c.h.b16 %v281
    %v700 = vunpack.c.l.b16 %v282
    %v701 = vunpack.c.h.b16 %v282
    %v702 = vunpack.c.l.b16 %v283
    %v703 = vunpack.c.h.b16 %v283
    %v704 = vpack.c.b16 %v464, %v448
    %v705 = vpack.c.b16 %v465, %v449
    %v706 = vpack.c.b16 %v466, %v450
    %v707 = vpack.c.b16 %v467, %v451
    %v708 = vpack.c.b16 %v468, %v452
    %v709 = vpack.c.b16 %v469, %v453
    %v710 = vpack.c.b16 %v470, %v454
    %v711 = vpack.c.b16 %v471, %v455
    %v712 = vpack.c.b16 %v472, %v456
    %v713 = vpack.c.b16 %v473, %v457
    %v714 = vpack.c.b16 %v474, %v458
    %v715 = vpack.c.b16 %v475, %v459
    %v716 = vpack.c.b16 %v476, %v460
    %v717 = vpack.c.b16 %v477, %v461
    %v718 = vpack.c.b16 %v478, %v462
    %v719 = vpack.c.b16 %v479, %v463
    %v720 = vpack.c.b16 %v496, %v480
    %v721 = vpack.c.b16 %v497, %v481
    %v722 = vpack.c.b16 %v498, %v482
    %v723 = vpack.c.b16 %v499, %v483
    %v724 = vpack.c.b16 %v500, %v484
    %v725 = vpack.c.b16 %v501, %v485
    %v726 = vpack.c.b16 %v502, %v486
    %v727 = vpack.c.b16 %v503, %v487
    %v728 = vpack.c.b16 %v504, %v488
    %v729 = vpack.c.b16 %v505, %v489
    %v730 = vpack.c.b16 %v506, %v490
    %v731 = vpack.c.b16 %v507, %v491
    %v732 = vpack.c.b16 %v508, %v492
    %v733 = vpack.c.b16 %v509, %v493
    %v734 = vpack.c.b16 %v510, %v494
    %v735 = vpack.c.b16 %v511, %v495
    %v736 = vpack.c.b16 %v528, %v512
    %v737 = vpack.c.b16 %v529, %v513
    %v738 = vpack.c.b16 %v530, %v514
    %v739 = vpack.c.b16 %v531, %v515
    %v740 = vpack.c.b16 %v532, %v516
    %v741 = vpack.c.b16 %v533, %v517
    %v742 = vpack.c.b16 %v534, %v518
    %v743 = vpack.c.b16 %v535, %v519
    %v744 = vpack.c.b16 %v536, %v520
    %v745 = vpack.c.b16 %v537, %v521
    %v746 = vpack.c.b16 %v538, %v522
    %v747 = vpack.c.b16 %v539, %v523
    %v748 = vpack.c.b16 %v540, %v524
    %v749 = vpack.c.b16 %v541, %v525
    %v750 = vpack.c.b16 %v542, %v526
    %v751 = vpack.c.b16 %v543, %v527
    %v752 = vpack.c.b16 %v560, %v544
    %v753 = vpack.c.b16 %v561, %v545
    %v754 = vpack.c.b16 %v562, %v546
    %v755 = vpack.c.b16 %v563, %v547
    %v756 = vpack.c.b16 %v564, %v548
    %v757 = vpack.c.b16 %v565, %v549
    %v758 = vpack.c.b16 %v566, %v550
    %v759 = vpack.c.b16 %v567, %v551
    %v760 = vpack.c.b16 %v568, %v552
    %v761 = vpack.c.b16 %v569, %v553
    %v762 = vpack.c.b16 %v570, %v554
    %v763 = vpack.c.b16 %v571, %v555
    %v764 = vpack.c.b16 %v572, %v556
    %v765 = vpack.c.b16 %v573, %v557
    %v766 = vpack.c.b16 %v574, %v558
    %v767 = vpack.c.b16 %v575, %v559
    %v768 = vpack.c.b16 %v592, %v576
    %v769 = vpack.c.b16 %v593, %v577
    %v770 = vpack.c.b16 %v594, %v578
    %v771 = vpack.c.b16 %v595, %v579
    %v772 = vpack.c.b16 %v596, %v580
    %v773 = vpack.c.b16 %v597, %v581
    %v774 = vpack.c.b16 %v598, %v582
    %v775 = vpack.c.b16 %v599, %v583
    %v776 = vpack.c.b16 %v600, %v584
    %v777 = vpack.c.b16 %v601, %v585
    %v778 = vpack.c.b16 %v602, %v586
    %v779 = vpack.c.b16 %v603, %v587
    %v780 = vpack.c.b16 %v604, %v588
    %v781 = vpack.c.b16 %v605, %v589
    %v782 = vpack.c.b16 %v606, %v590
    %v783 = vpack.c.b16 %v607, %v591
    %v784 = vpack.c.b16 %v624, %v608
    %v785 = vpack.c.b16 %v625, %v609
    %v786 = vpack.c.b16 %v626, %v610
    %v787 = vpack.c.b16 %v627, %v611
    %v788 = vpack.c.b16 %v628, %v612
    %v789 = vpack.c.b16 %v629, %v613
    %v790 = vpack.c.b16 %v630, %v614
    %v791 = vpack.c.b16 %v631, %v615
    %v792 = vpack.c.b16 %v632, %v616
    %v793 = vpack.c.b16 %v633, %v617
    %v794 = vpack.c.b16 %v634, %v618
    %v795 = vpack.c.b16 %v635, %v619
    %v796 = vpack.c.b16 %v636, %v620
    %v797 = vpack.c.b16 %v637, %v621
    %v798 = vpack.c.b16 %v638, %v622
    %v799 = vpack.c.b16 %v639, %v623
    %v800 = vpack.c.b16 %v656, %v640
    %v801 = vpack.c.b16 %v657, %v641
    %v802 = vpack.c.b16 %v658, %v642
    %v803 = vpack.c.b16 %v659, %v643
    %v804 = vpack.c.b16 %v660, %v644
    %v805 = vpack.c.b16 %v661, %v645
    %v806 = vpack.c.b16 %v662, %v646
    %v807 = vpack.c.b16 %v663, %v647
    %v808 = vpack.c.b16 %v664, %v648
    %v809 = vpack.c.b16 %v665, %v649
    %v810 = vpack.c.b16 %v666, %v650
    %v811 = vpack.c.b16 %v667, %v651
    %v812 = vpack.c.b16 %v668, %v652
    %v813 = vpack.c.b16 %v669, %v653
    %v814 = vpack.c.b16 %v670, %v654
    %v815 = vpack.c.b16 %v671, %v655
    %v816 = vpack.c.b16 %v688, %v672
    %v817 = vpack.c.b16 %v689, %v673
    %v818 = vpack.c.b16 %v690, %v674
    %v819 = vpack.c.b16 %v691, %v675
    %v820 = vpack.c.b16 %v692, %v676
    %v821 = vpack.c.b16 %v693, %v677
    %v822 = vpack.c.b16 %v694, %v678
    %v823 = vpack.c.b16 %v695, %v679
    %v824 = vpack.c.b16 %v696, %v680
    %v825 = vpack.c.b16 %v697, %v681
    %v826 = vpack.c.b16 %v698, %v682
    %v827 = vpack.c.b16 %v699, %v683
    %v828 = vpack.c.b16 %v700, %v684
    %v829 = vpack.c.b16 %v701, %v685
    %v830 = vpack.c.b16 %v702, %v686
    %v831 = vpack.c.b16 %v703, %v687
    %960 = vmatpush.bf16.msra.mxu0 %v816
    %961 = vmatpush.bf16.msra.mxu0 %v800
    %962 = vmatpush.bf16.msra.mxu0 %v784
    %963 = vmatpush.bf16.msra.mxu0 %v768
    %964 = vmatpush.bf16.msra.mxu0 %v752
    %965 = vmatpush.bf16.msra.mxu0 %v736
    %966 = vmatpush.bf16.msra.mxu0 %v720
    %967 = vmatpush.bf16.msra.mxu0 %v704
    %968 = vmatmul.bf16.gmra.mxu0 %v155
    %v969 = vpop.f32.mrf.mxu0
    %v970 = vadd.f32 %v288, %v969
    %v971 = vpop.f32.mrf.mxu0
    %972 = vdwg.mxu0
    %973 = vmatpush.bf16.msra.mxu0 %v817
    %974 = vmatpush.bf16.msra.mxu0 %v801
    %975 = vmatpush.bf16.msra.mxu0 %v785
    %976 = vmatpush.bf16.msra.mxu0 %v769
    %977 = vmatpush.bf16.msra.mxu0 %v753
    %978 = vmatpush.bf16.msra.mxu0 %v737
    %979 = vmatpush.bf16.msra.mxu0 %v721
    %980 = vmatpush.bf16.msra.mxu0 %v705
    %981 = vmatmul.bf16.gmra.mxu0 %v155
    %v982 = vpop.f32.mrf.mxu0
    %v983 = vadd.f32 %v289, %v982
    %v984 = vpop.f32.mrf.mxu0
    %985 = vdwg.mxu0
    %986 = vmatpush.bf16.msra.mxu0 %v818
    %987 = vmatpush.bf16.msra.mxu0 %v802
    %988 = vmatpush.bf16.msra.mxu0 %v786
    %989 = vmatpush.bf16.msra.mxu0 %v770
    %990 = vmatpush.bf16.msra.mxu0 %v754
    %991 = vmatpush.bf16.msra.mxu0 %v738
    %992 = vmatpush.bf16.msra.mxu0 %v722
    %993 = vmatpush.bf16.msra.mxu0 %v706
    %994 = vmatmul.bf16.gmra.mxu0 %v155
    %v995 = vpop.f32.mrf.mxu0
    %v996 = vadd.f32 %v290, %v995
    %v997 = vpop.f32.mrf.mxu0
    %998 = vdwg.mxu0
    %999 = vmatpush.bf16.msra.mxu0 %v819
    %1000 = vmatpush.bf16.msra.mxu0 %v803
    %1001 = vmatpush.bf16.msra.mxu0 %v787
    %1002 = vmatpush.bf16.msra.mxu0 %v771
    %1003 = vmatpush.bf16.msra.mxu0 %v755
    %1004 = vmatpush.bf16.msra.mxu0 %v739
    %1005 = vmatpush.bf16.msra.mxu0 %v723
    %1006 = vmatpush.bf16.msra.mxu0 %v707
    %1007 = vmatmul.bf16.gmra.mxu0 %v155
    %v1008 = vpop.f32.mrf.mxu0
    %v1009 = vadd.f32 %v291, %v1008
    %v1010 = vpop.f32.mrf.mxu0
    %1011 = vdwg.mxu0
    %1012 = vmatpush.bf16.msra.mxu0 %v820
    %1013 = vmatpush.bf16.msra.mxu0 %v804
    %1014 = vmatpush.bf16.msra.mxu0 %v788
    %1015 = vmatpush.bf16.msra.mxu0 %v772
    %1016 = vmatpush.bf16.msra.mxu0 %v756
    %1017 = vmatpush.bf16.msra.mxu0 %v740
    %1018 = vmatpush.bf16.msra.mxu0 %v724
    %1019 = vmatpush.bf16.msra.mxu0 %v708
    %1020 = vmatmul.bf16.gmra.mxu0 %v155
    %v1021 = vpop.f32.mrf.mxu0
    %v1022 = vadd.f32 %v292, %v1021
    %v1023 = vpop.f32.mrf.mxu0
    %1024 = vdwg.mxu0
    %1025 = vmatpush.bf16.msra.mxu0 %v821
    %1026 = vmatpush.bf16.msra.mxu0 %v805
    %1027 = vmatpush.bf16.msra.mxu0 %v789
    %1028 = vmatpush.bf16.msra.mxu0 %v773
    %1029 = vmatpush.bf16.msra.mxu0 %v757
    %1030 = vmatpush.bf16.msra.mxu0 %v741
    %1031 = vmatpush.bf16.msra.mxu0 %v725
    %1032 = vmatpush.bf16.msra.mxu0 %v709
    %1033 = vmatmul.bf16.gmra.mxu0 %v155
    %v1034 = vpop.f32.mrf.mxu0
    %v1035 = vadd.f32 %v293, %v1034
    %v1036 = vpop.f32.mrf.mxu0
    %1037 = vdwg.mxu0
    %1038 = vmatpush.bf16.msra.mxu0 %v822
    %1039 = vmatpush.bf16.msra.mxu0 %v806
    %1040 = vmatpush.bf16.msra.mxu0 %v790
    %1041 = vmatpush.bf16.msra.mxu0 %v774
    %1042 = vmatpush.bf16.msra.mxu0 %v758
    %1043 = vmatpush.bf16.msra.mxu0 %v742
    %1044 = vmatpush.bf16.msra.mxu0 %v726
    %1045 = vmatpush.bf16.msra.mxu0 %v710
    %1046 = vmatmul.bf16.gmra.mxu0 %v155
    %v1047 = vpop.f32.mrf.mxu0
    %v1048 = vadd.f32 %v294, %v1047
    %v1049 = vpop.f32.mrf.mxu0
    %1050 = vdwg.mxu0
    %1051 = vmatpush.bf16.msra.mxu0 %v823
    %1052 = vmatpush.bf16.msra.mxu0 %v807
    %1053 = vmatpush.bf16.msra.mxu0 %v791
    %1054 = vmatpush.bf16.msra.mxu0 %v775
    %1055 = vmatpush.bf16.msra.mxu0 %v759
    %1056 = vmatpush.bf16.msra.mxu0 %v743
    %1057 = vmatpush.bf16.msra.mxu0 %v727
    %1058 = vmatpush.bf16.msra.mxu0 %v711
    %1059 = vmatmul.bf16.gmra.mxu0 %v155
    %v1060 = vpop.f32.mrf.mxu0
    %v1061 = vadd.f32 %v295, %v1060
    %v1062 = vpop.f32.mrf.mxu0
    %1063 = vdwg.mxu0
    %1064 = vmatpush.bf16.msra.mxu0 %v824
    %1065 = vmatpush.bf16.msra.mxu0 %v808
    %1066 = vmatpush.bf16.msra.mxu0 %v792
    %1067 = vmatpush.bf16.msra.mxu0 %v776
    %1068 = vmatpush.bf16.msra.mxu0 %v760
    %1069 = vmatpush.bf16.msra.mxu0 %v744
    %1070 = vmatpush.bf16.msra.mxu0 %v728
    %1071 = vmatpush.bf16.msra.mxu0 %v712
    %1072 = vmatmul.bf16.gmra.mxu0 %v155
    %v1073 = vpop.f32.mrf.mxu0
    %v1074 = vadd.f32 %v296, %v1073
    %v1075 = vpop.f32.mrf.mxu0
    %1076 = vdwg.mxu0
    %1077 = vmatpush.bf16.msra.mxu0 %v825
    %1078 = vmatpush.bf16.msra.mxu0 %v809
    %1079 = vmatpush.bf16.msra.mxu0 %v793
    %1080 = vmatpush.bf16.msra.mxu0 %v777
    %1081 = vmatpush.bf16.msra.mxu0 %v761
    %1082 = vmatpush.bf16.msra.mxu0 %v745
    %1083 = vmatpush.bf16.msra.mxu0 %v729
    %1084 = vmatpush.bf16.msra.mxu0 %v713
    %1085 = vmatmul.bf16.gmra.mxu0 %v155
    %v1086 = vpop.f32.mrf.mxu0
    %v1087 = vadd.f32 %v297, %v1086
    %v1088 = vpop.f32.mrf.mxu0
    %1089 = vdwg.mxu0
    %1090 = vmatpush.bf16.msra.mxu0 %v826
    %1091 = vmatpush.bf16.msra.mxu0 %v810
    %1092 = vmatpush.bf16.msra.mxu0 %v794
    %1093 = vmatpush.bf16.msra.mxu0 %v778
    %1094 = vmatpush.bf16.msra.mxu0 %v762
    %1095 = vmatpush.bf16.msra.mxu0 %v746
    %1096 = vmatpush.bf16.msra.mxu0 %v730
    %1097 = vmatpush.bf16.msra.mxu0 %v714
    %1098 = vmatmul.bf16.gmra.mxu0 %v155
    %v1099 = vpop.f32.mrf.mxu0
    %v1100 = vadd.f32 %v298, %v1099
    %v1101 = vpop.f32.mrf.mxu0
    %1102 = vdwg.mxu0
    %1103 = vmatpush.bf16.msra.mxu0 %v827
    %1104 = vmatpush.bf16.msra.mxu0 %v811
    %1105 = vmatpush.bf16.msra.mxu0 %v795
    %1106 = vmatpush.bf16.msra.mxu0 %v779
    %1107 = vmatpush.bf16.msra.mxu0 %v763
    %1108 = vmatpush.bf16.msra.mxu0 %v747
    %1109 = vmatpush.bf16.msra.mxu0 %v731
    %1110 = vmatpush.bf16.msra.mxu0 %v715
    %1111 = vmatmul.bf16.gmra.mxu0 %v155
    %v1112 = vpop.f32.mrf.mxu0
    %v1113 = vadd.f32 %v299, %v1112
    %v1114 = vpop.f32.mrf.mxu0
    %1115 = vdwg.mxu0
    %1116 = vmatpush.bf16.msra.mxu0 %v828
    %1117 = vmatpush.bf16.msra.mxu0 %v812
    %1118 = vmatpush.bf16.msra.mxu0 %v796
    %1119 = vmatpush.bf16.msra.mxu0 %v780
    %1120 = vmatpush.bf16.msra.mxu0 %v764
    %1121 = vmatpush.bf16.msra.mxu0 %v748
    %1122 = vmatpush.bf16.msra.mxu0 %v732
    %1123 = vmatpush.bf16.msra.mxu0 %v716
    %1124 = vmatmul.bf16.gmra.mxu0 %v155
    %v1125 = vpop.f32.mrf.mxu0
    %v1126 = vadd.f32 %v300, %v1125
    %v1127 = vpop.f32.mrf.mxu0
    %1128 = vdwg.mxu0
    %1129 = vmatpush.bf16.msra.mxu0 %v829
    %1130 = vmatpush.bf16.msra.mxu0 %v813
    %1131 = vmatpush.bf16.msra.mxu0 %v797
    %1132 = vmatpush.bf16.msra.mxu0 %v781
    %1133 = vmatpush.bf16.msra.mxu0 %v765
    %1134 = vmatpush.bf16.msra.mxu0 %v749
    %1135 = vmatpush.bf16.msra.mxu0 %v733
    %1136 = vmatpush.bf16.msra.mxu0 %v717
    %1137 = vmatmul.bf16.gmra.mxu0 %v155
    %v1138 = vpop.f32.mrf.mxu0
    %v1139 = vadd.f32 %v301, %v1138
    %v1140 = vpop.f32.mrf.mxu0
    %1141 = vdwg.mxu0
    %1142 = vmatpush.bf16.msra.mxu0 %v830
    %1143 = vmatpush.bf16.msra.mxu0 %v814
    %1144 = vmatpush.bf16.msra.mxu0 %v798
    %1145 = vmatpush.bf16.msra.mxu0 %v782
    %1146 = vmatpush.bf16.msra.mxu0 %v766
    %1147 = vmatpush.bf16.msra.mxu0 %v750
    %1148 = vmatpush.bf16.msra.mxu0 %v734
    %1149 = vmatpush.bf16.msra.mxu0 %v718
    %1150 = vmatmul.bf16.gmra.mxu0 %v155
    %v1151 = vpop.f32.mrf.mxu0
    %v1152 = vadd.f32 %v302, %v1151
    %v1153 = vpop.f32.mrf.mxu0
    %1154 = vdwg.mxu0
    %1155 = vmatpush.bf16.msra.mxu0 %v831
    %1156 = vmatpush.bf16.msra.mxu0 %v815
    %1157 = vmatpush.bf16.msra.mxu0 %v799
    %1158 = vmatpush.bf16.msra.mxu0 %v783
    %1159 = vmatpush.bf16.msra.mxu0 %v767
    %1160 = vmatpush.bf16.msra.mxu0 %v751
    %1161 = vmatpush.bf16.msra.mxu0 %v735
    %1162 = vmatpush.bf16.msra.mxu0 %v719
    %1163 = vmatmul.bf16.gmra.mxu0 %v155
    %v1164 = vpop.f32.mrf.mxu0
    %v1165 = vadd.f32 %v303, %v1164
    %v1166 = vpop.f32.mrf.mxu0
    %1167 = vdwg.mxu0
    %v1168 = vmax.f32 %v970, 0.0
    %v1169 = vmax.f32 %v983, 0.0
    %v1170 = vmax.f32 %v996, 0.0
    %v1171 = vmax.f32 %v1009, 0.0
    %v1172 = vmax.f32 %v1022, 0.0
    %v1173 = vmax.f32 %v1035, 0.0
    %v1174 = vmax.f32 %v1048, 0.0
    %v1175 = vmax.f32 %v1061, 0.0
    %v1176 = vmax.f32 %v1074, 0.0
    %v1177 = vmax.f32 %v1087, 0.0
    %v1178 = vmax.f32 %v1100, 0.0
    %v1179 = vmax.f32 %v1113, 0.0
    %v1180 = vmax.f32 %v1126, 0.0
    %v1181 = vmax.f32 %v1139, 0.0
    %v1182 = vmax.f32 %v1152, 0.0
    %v1183 = vmax.f32 %v1165, 0.0
    %vm1184 = vcmask 523264
    %1185 = vst.msk [vmem:[#allocation2] sm:$0xff] %vm1184, 0.0
    %1186 = vst.msk [vmem:[#allocation2 + $0x8] sm:$0xff] %vm1184, 0.0
    %1187 = vst.msk [vmem:[#allocation2 + $0x10] sm:$0xff] %vm1184, 0.0
    %1188 = vst.msk [vmem:[#allocation2 + $0x18] sm:$0xff] %vm1184, 0.0
    %1189 = vst.msk [vmem:[#allocation2 + $0x20] sm:$0xff] %vm1184, 0.0
    %1190 = vst.msk [vmem:[#allocation2 + $0x28] sm:$0xff] %vm1184, 0.0
    %1191 = vst.msk [vmem:[#allocation2 + $0x30] sm:$0xff] %vm1184, 0.0
    %1192 = vst.msk [vmem:[#allocation2 + $0x38] sm:$0xff] %vm1184, 0.0
    %1193 = vst.msk [vmem:[#allocation2 + $0x40] sm:$0xff] %vm1184, 0.0
    %1194 = vst.msk [vmem:[#allocation2 + $0x48] sm:$0xff] %vm1184, 0.0
    %v1196 = vrot.slane %v1168, 1
    %vm1198 = vcmask 516096
    %1199 = vst.msk [vmem:[#allocation2 + $0x3] sm:$0x1] %vm1198, %v1168
    %1200 = vst.msk [vmem:[#allocation2 + $0x2b] sm:$0x1] %vm1198, %v1196
    %v1201 = vperm.slane %v1168, 0
    %v1202 = vperm.slane %v1196, 0
    %1203 = vrot.lane.b32.xlu0 %v1201, 64
    %v1204 = vpop.permute.xlu0 %1203
    %1205 = vrot.lane.b32.xlu0 %v1202, 64
    %v1206 = vpop.permute.xlu0 %1205
    %1209 = vst.msk [vmem:[#allocation2 + $0x4] sm:$0x1] %vm1198, %v1204
    %1210 = vst.msk [vmem:[#allocation2 + $0x2c] sm:$0x1] %vm1198, %v1206
    %v1212 = vrot.slane %v1169, 1
    %1214 = vst.msk [vmem:[#allocation2 + $0x5] sm:$0x1] %vm1198, %v1169
    %1215 = vst.msk [vmem:[#allocation2 + $0x2d] sm:$0x1] %vm1198, %v1212
    %v1216 = vperm.slane %v1169, 0
    %v1217 = vperm.slane %v1212, 0
    %1218 = vrot.lane.b32.xlu0 %v1216, 64
    %v1219 = vpop.permute.xlu0 %1218
    %1220 = vrot.lane.b32.xlu0 %v1217, 64
    %v1221 = vpop.permute.xlu0 %1220
    %1224 = vst.msk [vmem:[#allocation2 + $0x6] sm:$0x1] %vm1198, %v1219
    %1225 = vst.msk [vmem:[#allocation2 + $0x2e] sm:$0x1] %vm1198, %v1221
    %v1227 = vrot.slane %v1170, 1
    %1229 = vst.msk [vmem:[#allocation2 + $0x7] sm:$0x1] %vm1198, %v1170
    %1230 = vst.msk [vmem:[#allocation2 + $0x2f] sm:$0x1] %vm1198, %v1227
    %v1231 = vperm.slane %v1170, 0
    %v1232 = vperm.slane %v1227, 0
    %1233 = vrot.lane.b32.xlu0 %v1231, 64
    %v1234 = vpop.permute.xlu0 %1233
    %1235 = vrot.lane.b32.xlu0 %v1232, 64
    %v1236 = vpop.permute.xlu0 %1235
    %1239 = vst.msk [vmem:[#allocation2 + $0x8] sm:$0x1] %vm1198, %v1234
    %1240 = vst.msk [vmem:[#allocation2 + $0x30] sm:$0x1] %vm1198, %v1236
    %v1242 = vrot.slane %v1171, 1
    %1244 = vst.msk [vmem:[#allocation2 + $0x9] sm:$0x1] %vm1198, %v1171
    %1245 = vst.msk [vmem:[#allocation2 + $0x31] sm:$0x1] %vm1198, %v1242
    %v1246 = vperm.slane %v1171, 0
    %v1247 = vperm.slane %v1242, 0
    %1248 = vrot.lane.b32.xlu0 %v1246, 64
    %v1249 = vpop.permute.xlu0 %1248
    %1250 = vrot.lane.b32.xlu0 %v1247, 64
    %v1251 = vpop.permute.xlu0 %1250
    %1254 = vst.msk [vmem:[#allocation2 + $0xa] sm:$0x1] %vm1198, %v1249
    %1255 = vst.msk [vmem:[#allocation2 + $0x32] sm:$0x1] %vm1198, %v1251
    %v1257 = vrot.slane %v1172, 1
    %1259 = vst.msk [vmem:[#allocation2 + $0xb] sm:$0x1] %vm1198, %v1172
    %1260 = vst.msk [vmem:[#allocation2 + $0x33] sm:$0x1] %vm1198, %v1257
    %v1261 = vperm.slane %v1172, 0
    %v1262 = vperm.slane %v1257, 0
    %1263 = vrot.lane.b32.xlu0 %v1261, 64
    %v1264 = vpop.permute.xlu0 %1263
    %1265 = vrot.lane.b32.xlu0 %v1262, 64
    %v1266 = vpop.permute.xlu0 %1265
    %1269 = vst.msk [vmem:[#allocation2 + $0xc] sm:$0x1] %vm1198, %v1264
    %1270 = vst.msk [vmem:[#allocation2 + $0x34] sm:$0x1] %vm1198, %v1266
    %v1272 = vrot.slane %v1173, 1
    %1274 = vst.msk [vmem:[#allocation2 + $0xd] sm:$0x1] %vm1198, %v1173
    %1275 = vst.msk [vmem:[#allocation2 + $0x35] sm:$0x1] %vm1198, %v1272
    %v1276 = vperm.slane %v1173, 0
    %v1277 = vperm.slane %v1272, 0
    %1278 = vrot.lane.b32.xlu0 %v1276, 64
    %v1279 = vpop.permute.xlu0 %1278
    %1280 = vrot.lane.b32.xlu0 %v1277, 64
    %v1281 = vpop.permute.xlu0 %1280
    %1284 = vst.msk [vmem:[#allocation2 + $0xe] sm:$0x1] %vm1198, %v1279
    %1285 = vst.msk [vmem:[#allocation2 + $0x36] sm:$0x1] %vm1198, %v1281
    %v1287 = vrot.slane %v1174, 1
    %1289 = vst.msk [vmem:[#allocation2 + $0xf] sm:$0x1] %vm1198, %v1174
    %1290 = vst.msk [vmem:[#allocation2 + $0x37] sm:$0x1] %vm1198, %v1287
    %v1291 = vperm.slane %v1174, 0
    %v1292 = vperm.slane %v1287, 0
    %1293 = vrot.lane.b32.xlu0 %v1291, 64
    %v1294 = vpop.permute.xlu0 %1293
    %1295 = vrot.lane.b32.xlu0 %v1292, 64
    %v1296 = vpop.permute.xlu0 %1295
    %1299 = vst.msk [vmem:[#allocation2 + $0x10] sm:$0x1] %vm1198, %v1294
    %1300 = vst.msk [vmem:[#allocation2 + $0x38] sm:$0x1] %vm1198, %v1296
    %v1302 = vrot.slane %v1175, 1
    %1304 = vst.msk [vmem:[#allocation2 + $0x11] sm:$0x1] %vm1198, %v1175
    %1305 = vst.msk [vmem:[#allocation2 + $0x39] sm:$0x1] %vm1198, %v1302
    %v1306 = vperm.slane %v1175, 0
    %v1307 = vperm.slane %v1302, 0
    %1308 = vrot.lane.b32.xlu0 %v1306, 64
    %v1309 = vpop.permute.xlu0 %1308
    %1310 = vrot.lane.b32.xlu0 %v1307, 64
    %v1311 = vpop.permute.xlu0 %1310
    %1314 = vst.msk [vmem:[#allocation2 + $0x12] sm:$0x1] %vm1198, %v1309
    %1315 = vst.msk [vmem:[#allocation2 + $0x3a] sm:$0x1] %vm1198, %v1311
    %v1317 = vrot.slane %v1176, 1
    %1319 = vst.msk [vmem:[#allocation2 + $0x13] sm:$0x1] %vm1198, %v1176
    %1320 = vst.msk [vmem:[#allocation2 + $0x3b] sm:$0x1] %vm1198, %v1317
    %v1321 = vperm.slane %v1176, 0
    %v1322 = vperm.slane %v1317, 0
    %1323 = vrot.lane.b32.xlu0 %v1321, 64
    %v1324 = vpop.permute.xlu0 %1323
    %1325 = vrot.lane.b32.xlu0 %v1322, 64
    %v1326 = vpop.permute.xlu0 %1325
    %1329 = vst.msk [vmem:[#allocation2 + $0x14] sm:$0x1] %vm1198, %v1324
    %1330 = vst.msk [vmem:[#allocation2 + $0x3c] sm:$0x1] %vm1198, %v1326
    %v1332 = vrot.slane %v1177, 1
    %1334 = vst.msk [vmem:[#allocation2 + $0x15] sm:$0x1] %vm1198, %v1177
    %1335 = vst.msk [vmem:[#allocation2 + $0x3d] sm:$0x1] %vm1198, %v1332
    %v1336 = vperm.slane %v1177, 0
    %v1337 = vperm.slane %v1332, 0
    %1338 = vrot.lane.b32.xlu0 %v1336, 64
    %v1339 = vpop.permute.xlu0 %1338
    %1340 = vrot.lane.b32.xlu0 %v1337, 64
    %v1341 = vpop.permute.xlu0 %1340
    %1344 = vst.msk [vmem:[#allocation2 + $0x16] sm:$0x1] %vm1198, %v1339
    %1345 = vst.msk [vmem:[#allocation2 + $0x3e] sm:$0x1] %vm1198, %v1341
    %v1347 = vrot.slane %v1178, 1
    %1349 = vst.msk [vmem:[#allocation2 + $0x17] sm:$0x1] %vm1198, %v1178
    %1350 = vst.msk [vmem:[#allocation2 + $0x3f] sm:$0x1] %vm1198, %v1347
    %v1351 = vperm.slane %v1178, 0
    %v1352 = vperm.slane %v1347, 0
    %1353 = vrot.lane.b32.xlu0 %v1351, 64
    %v1354 = vpop.permute.xlu0 %1353
    %1355 = vrot.lane.b32.xlu0 %v1352, 64
    %v1356 = vpop.permute.xlu0 %1355
    %1359 = vst.msk [vmem:[#allocation2 + $0x18] sm:$0x1] %vm1198, %v1354
    %1360 = vst.msk [vmem:[#allocation2 + $0x40] sm:$0x1] %vm1198, %v1356
    %v1362 = vrot.slane %v1179, 1
    %1364 = vst.msk [vmem:[#allocation2 + $0x19] sm:$0x1] %vm1198, %v1179
    %1365 = vst.msk [vmem:[#allocation2 + $0x41] sm:$0x1] %vm1198, %v1362
    %v1366 = vperm.slane %v1179, 0
    %v1367 = vperm.slane %v1362, 0
    %1368 = vrot.lane.b32.xlu0 %v1366, 64
    %v1369 = vpop.permute.xlu0 %1368
    %1370 = vrot.lane.b32.xlu0 %v1367, 64
    %v1371 = vpop.permute.xlu0 %1370
    %1374 = vst.msk [vmem:[#allocation2 + $0x1a] sm:$0x1] %vm1198, %v1369
    %1375 = vst.msk [vmem:[#allocation2 + $0x42] sm:$0x1] %vm1198, %v1371
    %v1377 = vrot.slane %v1180, 1
    %1379 = vst.msk [vmem:[#allocation2 + $0x1b] sm:$0x1] %vm1198, %v1180
    %1380 = vst.msk [vmem:[#allocation2 + $0x43] sm:$0x1] %vm1198, %v1377
    %v1381 = vperm.slane %v1180, 0
    %v1382 = vperm.slane %v1377, 0
    %1383 = vrot.lane.b32.xlu0 %v1381, 64
    %v1384 = vpop.permute.xlu0 %1383
    %1385 = vrot.lane.b32.xlu0 %v1382, 64
    %v1386 = vpop.permute.xlu0 %1385
    %1389 = vst.msk [vmem:[#allocation2 + $0x1c] sm:$0x1] %vm1198, %v1384
    %1390 = vst.msk [vmem:[#allocation2 + $0x44] sm:$0x1] %vm1198, %v1386
    %v1392 = vrot.slane %v1181, 1
    %1394 = vst.msk [vmem:[#allocation2 + $0x1d] sm:$0x1] %vm1198, %v1181
    %1395 = vst.msk [vmem:[#allocation2 + $0x45] sm:$0x1] %vm1198, %v1392
    %v1396 = vperm.slane %v1181, 0
    %v1397 = vperm.slane %v1392, 0
    %1398 = vrot.lane.b32.xlu0 %v1396, 64
    %v1399 = vpop.permute.xlu0 %1398
    %1400 = vrot.lane.b32.xlu0 %v1397, 64
    %v1401 = vpop.permute.xlu0 %1400
    %1404 = vst.msk [vmem:[#allocation2 + $0x1e] sm:$0x1] %vm1198, %v1399
    %1405 = vst.msk [vmem:[#allocation2 + $0x46] sm:$0x1] %vm1198, %v1401
    %v1407 = vrot.slane %v1182, 1
    %1409 = vst.msk [vmem:[#allocation2 + $0x1f] sm:$0x1] %vm1198, %v1182
    %1410 = vst.msk [vmem:[#allocation2 + $0x47] sm:$0x1] %vm1198, %v1407
    %v1411 = vperm.slane %v1182, 0
    %v1412 = vperm.slane %v1407, 0
    %1413 = vrot.lane.b32.xlu0 %v1411, 64
    %v1414 = vpop.permute.xlu0 %1413
    %1415 = vrot.lane.b32.xlu0 %v1412, 64
    %v1416 = vpop.permute.xlu0 %1415
    %1419 = vst.msk [vmem:[#allocation2 + $0x20] sm:$0x1] %vm1198, %v1414
    %1420 = vst.msk [vmem:[#allocation2 + $0x48] sm:$0x1] %vm1198, %v1416
    %v1422 = vrot.slane %v1183, 1
    %1424 = vst.msk [vmem:[#allocation2 + $0x21] sm:$0x1] %vm1198, %v1183
    %1425 = vst.msk [vmem:[#allocation2 + $0x49] sm:$0x1] %vm1198, %v1422
    %v1426 = vperm.slane %v1183, 0
    %v1427 = vperm.slane %v1422, 0
    %1428 = vrot.lane.b32.xlu0 %v1426, 64
    %v1429 = vpop.permute.xlu0 %1428
    %1430 = vrot.lane.b32.xlu0 %v1427, 64
    %v1431 = vpop.permute.xlu0 %1430
    %1434 = vst.msk [vmem:[#allocation2 + $0x22] sm:$0x1] %vm1198, %v1429
    %1435 = vst.msk [vmem:[#allocation2 + $0x4a] sm:$0x1] %vm1198, %v1431
    %v1436 = vld [vmem:[#allocation2] sm:$0xff]
    %v1437 = vld [vmem:[#allocation2 + $0x8] sm:$0xff]
    %v1438 = vld [vmem:[#allocation2 + $0x10] sm:$0xff]
    %v1439 = vld [vmem:[#allocation2 + $0x18] sm:$0xff]
    %v1440 = vld [vmem:[#allocation2 + $0x20] sm:$0x7]
    %v1441 = vld [vmem:[#allocation2 + $0x28] sm:$0xff]
    %v1442 = vld [vmem:[#allocation2 + $0x30] sm:$0xff]
    %v1443 = vld [vmem:[#allocation2 + $0x38] sm:$0xff]
    %v1444 = vld [vmem:[#allocation2 + $0x40] sm:$0xff]
    %v1445 = vld [vmem:[#allocation2 + $0x48] sm:$0x7]
    %v1446 = vpack.c.bf16 %v1436, %v1436
    %v1447 = vpack.c.bf16 %v1437, %v1437
    %v1448 = vpack.c.bf16 %v1438, %v1438
    %v1449 = vpack.c.bf16 %v1439, %v1439
    %v1450 = vpack.c.bf16 %v1440, %v1440
    %v1451 = vpack.c.bf16 %v1441, %v1441
    %v1452 = vpack.c.bf16 %v1442, %v1442
    %v1453 = vpack.c.bf16 %v1443, %v1443
    %v1454 = vpack.c.bf16 %v1444, %v1444
    %v1455 = vpack.c.bf16 %v1445, %v1445
    %v1456 = vld [vmem:[#allocation8] sm:$0xf]
    %v1457 = vld [vmem:[#allocation8 + $0x4] sm:$0xf]
    %v1458 = vld [vmem:[#allocation8 + $0x8] sm:$0xf]
    %v1459 = vld [vmem:[#allocation8 + $0xc] sm:$0xf]
    %v1460 = vld [vmem:[#allocation8 + $0x10] sm:$0xf]
    %v1461 = vld [vmem:[#allocation8 + $0x14] sm:$0xf]
    %v1462 = vld [vmem:[#allocation8 + $0x18] sm:$0xf]
    %v1463 = vld [vmem:[#allocation8 + $0x1c] sm:$0xf]
    %v1464 = vld [vmem:[#allocation2 + $0x1] sm:$0xff]
    %v1465 = vld [vmem:[#allocation2 + $0x9] sm:$0xff]
    %v1466 = vld [vmem:[#allocation2 + $0x11] sm:$0xff]
    %v1467 = vld [vmem:[#allocation2 + $0x19] sm:$0xff]
    %v1468 = vld [vmem:[#allocation2 + $0x21] sm:$0x7]
    %v1469 = vld [vmem:[#allocation2 + $0x29] sm:$0xff]
    %v1470 = vld [vmem:[#allocation2 + $0x31] sm:$0xff]
    %v1471 = vld [vmem:[#allocation2 + $0x39] sm:$0xff]
    %v1472 = vld [vmem:[#allocation2 + $0x41] sm:$0xff]
    %v1473 = vld [vmem:[#allocation2 + $0x49] sm:$0x7]
    %v1474 = vpack.c.bf16 %v1464, %v1464
    %v1475 = vpack.c.bf16 %v1465, %v1465
    %v1476 = vpack.c.bf16 %v1466, %v1466
    %v1477 = vpack.c.bf16 %v1467, %v1467
    %v1478 = vpack.c.bf16 %v1468, %v1468
    %v1479 = vpack.c.bf16 %v1469, %v1469
    %v1480 = vpack.c.bf16 %v1470, %v1470
    %v1481 = vpack.c.bf16 %v1471, %v1471
    %v1482 = vpack.c.bf16 %v1472, %v1472
    %v1483 = vpack.c.bf16 %v1473, %v1473
    %s1484 = scalar_lea.vmem [#allocation8], 32
    %v1485 = vld [vmem:[%s1484] sm:$0xf]
    %v1486 = vld [vmem:[%s1484 + $0x4] sm:$0xf]
    %v1487 = vld [vmem:[%s1484 + $0x8] sm:$0xf]
    %v1488 = vld [vmem:[%s1484 + $0xc] sm:$0xf]
    %v1489 = vld [vmem:[%s1484 + $0x10] sm:$0xf]
    %v1490 = vld [vmem:[%s1484 + $0x14] sm:$0xf]
    %v1491 = vld [vmem:[%s1484 + $0x18] sm:$0xf]
    %v1492 = vld [vmem:[%s1484 + $0x1c] sm:$0xf]
    %v1503 = vrot.slane %v1474, 3
    %v1504 = vrot.slane %v1475, 3
    %v1505 = vrot.slane %v1476, 3
    %v1506 = vrot.slane %v1477, 3
    %v1507 = vrot.slane %v1478, 3
    %v1508 = vrot.slane %v1479, 3
    %v1509 = vrot.slane %v1480, 3
    %v1510 = vrot.slane %v1481, 3
    %v1511 = vrot.slane %v1482, 3
    %v1512 = vrot.slane %v1483, 3
    %vm1513 = vcmask 1040384
    %v1516 = vsel %vm1513, %v1474, %v1503
    %vm1518 = vcmask 1041409
    %v1519 = vsel %vm1518, %v1474, %v1503
    %v1521 = vrot.slane %v1519, 1
    %vm1522 = vcmask 1042434
    %v1523 = vsel %vm1522, %v1474, %v1503
    %v1525 = vrot.slane %v1523, 2
    %vm1526 = vcmask 1043459
    %v1527 = vsel %vm1526, %v1474, %v1503
    %v1529 = vrot.slane %v1527, 3
    %v1532 = vsel %vm1513, %v1475, %v1504
    %v1534 = vsel %vm1518, %v1475, %v1504
    %v1536 = vrot.slane %v1534, 1
    %v1537 = vsel %vm1522, %v1475, %v1504
    %v1539 = vrot.slane %v1537, 2
    %v1540 = vsel %vm1526, %v1475, %v1504
    %v1542 = vrot.slane %v1540, 3
    %v1545 = vsel %vm1513, %v1476, %v1505
    %v1547 = vsel %vm1518, %v1476, %v1505
    %v1549 = vrot.slane %v1547, 1
    %v1550 = vsel %vm1522, %v1476, %v1505
    %v1552 = vrot.slane %v1550, 2
    %v1553 = vsel %vm1526, %v1476, %v1505
    %v1555 = vrot.slane %v1553, 3
    %v1558 = vsel %vm1513, %v1477, %v1506
    %v1560 = vsel %vm1518, %v1477, %v1506
    %v1562 = vrot.slane %v1560, 1
    %v1563 = vsel %vm1522, %v1477, %v1506
    %v1565 = vrot.slane %v1563, 2
    %v1566 = vsel %vm1526, %v1477, %v1506
    %v1568 = vrot.slane %v1566, 3
    %v1571 = vsel %vm1513, %v1478, %v1507
    %v1573 = vsel %vm1518, %v1478, %v1507
    %v1575 = vrot.slane %v1573, 1
    %v1578 = vsel %vm1513, %v1479, %v1508
    %v1580 = vsel %vm1518, %v1479, %v1508
    %v1582 = vrot.slane %v1580, 1
    %v1583 = vsel %vm1522, %v1479, %v1508
    %v1585 = vrot.slane %v1583, 2
    %v1586 = vsel %vm1526, %v1479, %v1508
    %v1588 = vrot.slane %v1586, 3
    %v1591 = vsel %vm1513, %v1480, %v1509
    %v1593 = vsel %vm1518, %v1480, %v1509
    %v1595 = vrot.slane %v1593, 1
    %v1596 = vsel %vm1522, %v1480, %v1509
    %v1598 = vrot.slane %v1596, 2
    %v1599 = vsel %vm1526, %v1480, %v1509
    %v1601 = vrot.slane %v1599, 3
    %v1604 = vsel %vm1513, %v1481, %v1510
    %v1606 = vsel %vm1518, %v1481, %v1510
    %v1608 = vrot.slane %v1606, 1
    %v1609 = vsel %vm1522, %v1481, %v1510
    %v1611 = vrot.slane %v1609, 2
    %v1612 = vsel %vm1526, %v1481, %v1510
    %v1614 = vrot.slane %v1612, 3
    %v1617 = vsel %vm1513, %v1482, %v1511
    %v1619 = vsel %vm1518, %v1482, %v1511
    %v1621 = vrot.slane %v1619, 1
    %v1622 = vsel %vm1522, %v1482, %v1511
    %v1624 = vrot.slane %v1622, 2
    %v1625 = vsel %vm1526, %v1482, %v1511
    %v1627 = vrot.slane %v1625, 3
    %v1630 = vsel %vm1513, %v1483, %v1512
    %v1632 = vsel %vm1518, %v1483, %v1512
    %v1634 = vrot.slane %v1632, 1
    %v1635 = vunpack.i.l.s16 %v1516
    %v1636 = vunpack.i.h.s16 %v1516
    %v1637 = vunpack.i.l.s16 %v1521
    %v1638 = vunpack.i.h.s16 %v1521
    %v1639 = vunpack.i.l.s16 %v1525
    %v1640 = vunpack.i.h.s16 %v1525
    %v1641 = vunpack.i.l.s16 %v1529
    %v1642 = vunpack.i.h.s16 %v1529
    %v1643 = vunpack.i.l.s16 %v1532
    %v1644 = vunpack.i.h.s16 %v1532
    %v1645 = vunpack.i.l.s16 %v1536
    %v1646 = vunpack.i.h.s16 %v1536
    %v1647 = vunpack.i.l.s16 %v1539
    %v1648 = vunpack.i.h.s16 %v1539
    %v1649 = vunpack.i.l.s16 %v1542
    %v1650 = vunpack.i.h.s16 %v1542
    %v1651 = vunpack.i.l.s16 %v1545
    %v1652 = vunpack.i.h.s16 %v1545
    %v1653 = vunpack.i.l.s16 %v1549
    %v1654 = vunpack.i.h.s16 %v1549
    %v1655 = vunpack.i.l.s16 %v1552
    %v1656 = vunpack.i.h.s16 %v1552
    %v1657 = vunpack.i.l.s16 %v1555
    %v1658 = vunpack.i.h.s16 %v1555
    %v1659 = vunpack.i.l.s16 %v1558
    %v1660 = vunpack.i.h.s16 %v1558
    %v1661 = vunpack.i.l.s16 %v1562
    %v1662 = vunpack.i.h.s16 %v1562
    %v1663 = vunpack.i.l.s16 %v1565
    %v1664 = vunpack.i.h.s16 %v1565
    %v1665 = vunpack.i.l.s16 %v1568
    %v1666 = vunpack.i.h.s16 %v1568
    %v1667 = vunpack.i.l.s16 %v1571
    %v1668 = vunpack.i.h.s16 %v1571
    %v1669 = vunpack.i.l.s16 %v1575
    %v1670 = vunpack.i.l.s16 %v1578
    %v1671 = vunpack.i.h.s16 %v1578
    %v1672 = vunpack.i.l.s16 %v1582
    %v1673 = vunpack.i.h.s16 %v1582
    %v1674 = vunpack.i.l.s16 %v1585
    %v1675 = vunpack.i.h.s16 %v1585
    %v1676 = vunpack.i.l.s16 %v1588
    %v1677 = vunpack.i.h.s16 %v1588
    %v1678 = vunpack.i.l.s16 %v1591
    %v1679 = vunpack.i.h.s16 %v1591
    %v1680 = vunpack.i.l.s16 %v1595
    %v1681 = vunpack.i.h.s16 %v1595
    %v1682 = vunpack.i.l.s16 %v1598
    %v1683 = vunpack.i.h.s16 %v1598
    %v1684 = vunpack.i.l.s16 %v1601
    %v1685 = vunpack.i.h.s16 %v1601
    %v1686 = vunpack.i.l.s16 %v1604
    %v1687 = vunpack.i.h.s16 %v1604
    %v1688 = vunpack.i.l.s16 %v1608
    %v1689 = vunpack.i.h.s16 %v1608
    %v1690 = vunpack.i.l.s16 %v1611
    %v1691 = vunpack.i.h.s16 %v1611
    %v1692 = vunpack.i.l.s16 %v1614
    %v1693 = vunpack.i.h.s16 %v1614
    %v1694 = vunpack.i.l.s16 %v1617
    %v1695 = vunpack.i.h.s16 %v1617
    %v1696 = vunpack.i.l.s16 %v1621
    %v1697 = vunpack.i.h.s16 %v1621
    %v1698 = vunpack.i.l.s16 %v1624
    %v1699 = vunpack.i.h.s16 %v1624
    %v1700 = vunpack.i.l.s16 %v1627
    %v1701 = vunpack.i.h.s16 %v1627
    %v1702 = vunpack.i.l.s16 %v1630
    %v1703 = vunpack.i.h.s16 %v1630
    %v1704 = vunpack.i.l.s16 %v1634
    %v1705 = vpack.i.b16 %v1636, %v1635
    %v1706 = vpack.i.b16 %v1638, %v1637
    %v1707 = vpack.i.b16 %v1640, %v1639
    %v1708 = vpack.i.b16 %v1642, %v1641
    %v1709 = vpack.i.b16 %v1644, %v1643
    %v1710 = vpack.i.b16 %v1646, %v1645
    %v1711 = vpack.i.b16 %v1648, %v1647
    %v1712 = vpack.i.b16 %v1650, %v1649
    %v1713 = vpack.i.b16 %v1652, %v1651
    %v1714 = vpack.i.b16 %v1654, %v1653
    %v1715 = vpack.i.b16 %v1656, %v1655
    %v1716 = vpack.i.b16 %v1658, %v1657
    %v1717 = vpack.i.b16 %v1660, %v1659
    %v1718 = vpack.i.b16 %v1662, %v1661
    %v1719 = vpack.i.b16 %v1664, %v1663
    %v1720 = vpack.i.b16 %v1666, %v1665
    %v1721 = vpack.i.b16 %v1668, %v1667
    %v1722 = vpack.i.b16 %v1670, %v1669
    %v1723 = vpack.i.b16 %v1672, %v1671
    %v1724 = vpack.i.b16 %v1674, %v1673
    %v1725 = vpack.i.b16 %v1676, %v1675
    %v1726 = vpack.i.b16 %v1678, %v1677
    %v1727 = vpack.i.b16 %v1680, %v1679
    %v1728 = vpack.i.b16 %v1682, %v1681
    %v1729 = vpack.i.b16 %v1684, %v1683
    %v1730 = vpack.i.b16 %v1686, %v1685
    %v1731 = vpack.i.b16 %v1688, %v1687
    %v1732 = vpack.i.b16 %v1690, %v1689
    %v1733 = vpack.i.b16 %v1692, %v1691
    %v1734 = vpack.i.b16 %v1694, %v1693
    %v1735 = vpack.i.b16 %v1696, %v1695
    %v1736 = vpack.i.b16 %v1698, %v1697
    %v1737 = vpack.i.b16 %v1700, %v1699
    %v1738 = vpack.i.b16 %v1702, %v1701
    %v1739 = vpack.i.b16 %v1704, %v1703
    %1741 = vst [vmem:[#allocation1] ss:$9 sm:$0xff] %v1705
    %s1743 = scalar_lea.vmem [#allocation1], 1
    %1744 = vst [vmem:[%s1743] ss:$9 sm:$0xff] %v1706
    %s1746 = scalar_lea.vmem [#allocation1], 2
    %1747 = vst [vmem:[%s1746] ss:$9 sm:$0xff] %v1707
    %s1749 = scalar_lea.vmem [#allocation1], 3
    %1750 = vst [vmem:[%s1749] ss:$9 sm:$0xff] %v1708
    %s1752 = scalar_lea.vmem [#allocation1], 4
    %1753 = vst [vmem:[%s1752] ss:$9 sm:$0xff] %v1709
    %s1755 = scalar_lea.vmem [#allocation1], 5
    %1756 = vst [vmem:[%s1755] ss:$9 sm:$0xff] %v1710
    %s1758 = scalar_lea.vmem [#allocation1], 6
    %1759 = vst [vmem:[%s1758] ss:$9 sm:$0xff] %v1711
    %s1761 = scalar_lea.vmem [#allocation1], 7
    %1762 = vst [vmem:[%s1761] ss:$9 sm:$0xff] %v1712
    %v1763 = vld [vmem:[#allocation1] sm:$0xff]
    %1765 = vst [vmem:[#allocation1] ss:$9 sm:$0xff] %v1713
    %1767 = vst [vmem:[%s1743] ss:$9 sm:$0xff] %v1714
    %1769 = vst [vmem:[%s1746] ss:$9 sm:$0xff] %v1715
    %1771 = vst [vmem:[%s1749] ss:$9 sm:$0xff] %v1716
    %1773 = vst [vmem:[%s1752] ss:$9 sm:$0xff] %v1717
    %1775 = vst [vmem:[%s1755] ss:$9 sm:$0xff] %v1718
    %1777 = vst [vmem:[%s1758] ss:$9 sm:$0xff] %v1719
    %1779 = vst [vmem:[%s1761] ss:$9 sm:$0xff] %v1720
    %v1780 = vld [vmem:[#allocation1] sm:$0xff]
    %1782 = vst [vmem:[#allocation1] ss:$9 sm:$0xff] %v1721
    %1784 = vst [vmem:[%s1743] ss:$9 sm:$0xff] %v1722
    %1786 = vst [vmem:[%s1746] ss:$9 sm:$0xff] %v1723
    %1788 = vst [vmem:[%s1749] ss:$9 sm:$0xff] %v1724
    %1790 = vst [vmem:[%s1752] ss:$9 sm:$0xff] %v1725
    %1792 = vst [vmem:[%s1755] ss:$9 sm:$0xff] %v1726
    %1794 = vst [vmem:[%s1758] ss:$9 sm:$0xff] %v1727
    %1796 = vst [vmem:[%s1761] ss:$9 sm:$0xff] %v1728
    %v1797 = vld [vmem:[#allocation1] sm:$0xff]
    %1799 = vst [vmem:[#allocation1] ss:$9 sm:$0xff] %v1729
    %1801 = vst [vmem:[%s1743] ss:$9 sm:$0xff] %v1730
    %1803 = vst [vmem:[%s1746] ss:$9 sm:$0xff] %v1731
    %1805 = vst [vmem:[%s1749] ss:$9 sm:$0xff] %v1732
    %1807 = vst [vmem:[%s1752] ss:$9 sm:$0xff] %v1733
    %1809 = vst [vmem:[%s1755] ss:$9 sm:$0xff] %v1734
    %1811 = vst [vmem:[%s1758] ss:$9 sm:$0xff] %v1735
    %1813 = vst [vmem:[%s1761] ss:$9 sm:$0xff] %v1736
    %v1814 = vld [vmem:[#allocation1] sm:$0xff]
    %1816 = vst [vmem:[#allocation1] ss:$9 sm:$0xff] %v1737
    %1818 = vst [vmem:[%s1743] ss:$9 sm:$0xff] %v1738
    %1820 = vst [vmem:[%s1746] ss:$9 sm:$0xff] %v1739
    %v1821 = vld [vmem:[#allocation1] sm:$0xff]
    %v1830 = vunpack.c.l.b16 %v1485
    %v1831 = vunpack.c.l.b16 %v1486
    %v1832 = vunpack.c.l.b16 %v1487
    %v1833 = vunpack.c.l.b16 %v1488
    %v1834 = vunpack.c.l.b16 %v1489
    %v1835 = vunpack.c.l.b16 %v1490
    %v1836 = vunpack.c.l.b16 %v1491
    %v1837 = vunpack.c.l.b16 %v1492
    %v1838 = vpack.c.b16 %v1831, %v1830
    %v1839 = vpack.c.b16 %v1833, %v1832
    %v1840 = vpack.c.b16 %v1835, %v1834
    %v1841 = vpack.c.b16 %v1837, %v1836
    %v1846 = vsel %vm1184, %v1763, 0
    %v1848 = vsel %vm1184, %v1780, 0
    %v1850 = vsel %vm1184, %v1797, 0
    %v1852 = vsel %vm1184, %v1814, 0
    %v1854 = vsel %vm1184, %v1821, 0
    %1856 = vmatpush.bf16.msra.mxu0 0
    %1857 = vmatpush.bf16.msra.mxu0 0
    %1858 = vmatpush.bf16.msra.mxu0 0
    %1859 = vmatpush.bf16.msra.mxu0 0
    %1860 = vmatpush.bf16.msra.mxu0 %v1841
    %1861 = vmatpush.bf16.msra.mxu0 %v1840
    %1862 = vmatpush.bf16.msra.mxu0 %v1839
    %1863 = vmatpush.bf16.msra.mxu0 %v1838
    %1864 = vmatmul.bf16.gmra.mxu0 %v1846
    %v1865 = vpop.f32.mrf.mxu0
    %v1866 = vadd.f32 0.0, %v1865
    %v1867 = vpop.f32.mrf.mxu0
    %v1868 = vadd.f32 0.0, %v1867
    %1869 = vmatmul.bf16.gmra.mxu0 %v1848
    %v1870 = vpop.f32.mrf.mxu0
    %v1871 = vadd.f32 0.0, %v1870
    %v1872 = vpop.f32.mrf.mxu0
    %v1873 = vadd.f32 0.0, %v1872
    %1874 = vmatmul.bf16.gmra.mxu0 %v1850
    %v1875 = vpop.f32.mrf.mxu0
    %v1876 = vadd.f32 0.0, %v1875
    %v1877 = vpop.f32.mrf.mxu0
    %v1878 = vadd.f32 0.0, %v1877
    %1879 = vmatmul.bf16.gmra.mxu0 %v1852
    %v1880 = vpop.f32.mrf.mxu0
    %v1881 = vadd.f32 0.0, %v1880
    %v1882 = vpop.f32.mrf.mxu0
    %v1883 = vadd.f32 0.0, %v1882
    %1884 = vmatmul.bf16.gmra.mxu0 %v1854
    %v1885 = vpop.f32.mrf.mxu0
    %v1886 = vadd.f32 0.0, %v1885
    %v1887 = vpop.f32.mrf.mxu0
    %1888 = vdwg.mxu0
    %v1899 = vrot.slane %v1446, 3
    %v1900 = vrot.slane %v1447, 3
    %v1901 = vrot.slane %v1448, 3
    %v1902 = vrot.slane %v1449, 3
    %v1903 = vrot.slane %v1450, 3
    %v1904 = vrot.slane %v1451, 3
    %v1905 = vrot.slane %v1452, 3
    %v1906 = vrot.slane %v1453, 3
    %v1907 = vrot.slane %v1454, 3
    %v1908 = vrot.slane %v1455, 3
    %v1911 = vsel %vm1513, %v1446, %v1899
    %v1913 = vsel %vm1518, %v1446, %v1899
    %v1915 = vrot.slane %v1913, 1
    %v1916 = vsel %vm1522, %v1446, %v1899
    %v1918 = vrot.slane %v1916, 2
    %v1919 = vsel %vm1526, %v1446, %v1899
    %v1921 = vrot.slane %v1919, 3
    %v1924 = vsel %vm1513, %v1447, %v1900
    %v1926 = vsel %vm1518, %v1447, %v1900
    %v1928 = vrot.slane %v1926, 1
    %v1929 = vsel %vm1522, %v1447, %v1900
    %v1931 = vrot.slane %v1929, 2
    %v1932 = vsel %vm1526, %v1447, %v1900
    %v1934 = vrot.slane %v1932, 3
    %v1937 = vsel %vm1513, %v1448, %v1901
    %v1939 = vsel %vm1518, %v1448, %v1901
    %v1941 = vrot.slane %v1939, 1
    %v1942 = vsel %vm1522, %v1448, %v1901
    %v1944 = vrot.slane %v1942, 2
    %v1945 = vsel %vm1526, %v1448, %v1901
    %v1947 = vrot.slane %v1945, 3
    %v1950 = vsel %vm1513, %v1449, %v1902
    %v1952 = vsel %vm1518, %v1449, %v1902
    %v1954 = vrot.slane %v1952, 1
    %v1955 = vsel %vm1522, %v1449, %v1902
    %v1957 = vrot.slane %v1955, 2
    %v1958 = vsel %vm1526, %v1449, %v1902
    %v1960 = vrot.slane %v1958, 3
    %v1963 = vsel %vm1513, %v1450, %v1903
    %v1965 = vsel %vm1518, %v1450, %v1903
    %v1967 = vrot.slane %v1965, 1
    %v1970 = vsel %vm1513, %v1451, %v1904
    %v1972 = vsel %vm1518, %v1451, %v1904
    %v1974 = vrot.slane %v1972, 1
    %v1975 = vsel %vm1522, %v1451, %v1904
    %v1977 = vrot.slane %v1975, 2
    %v1978 = vsel %vm1526, %v1451, %v1904
    %v1980 = vrot.slane %v1978, 3
    %v1983 = vsel %vm1513, %v1452, %v1905
    %v1985 = vsel %vm1518, %v1452, %v1905
    %v1987 = vrot.slane %v1985, 1
    %v1988 = vsel %vm1522, %v1452, %v1905
    %v1990 = vrot.slane %v1988, 2
    %v1991 = vsel %vm1526, %v1452, %v1905
    %v1993 = vrot.slane %v1991, 3
    %v1996 = vsel %vm1513, %v1453, %v1906
    %v1998 = vsel %vm1518, %v1453, %v1906
    %v2000 = vrot.slane %v1998, 1
    %v2001 = vsel %vm1522, %v1453, %v1906
    %v2003 = vrot.slane %v2001, 2
    %v2004 = vsel %vm1526, %v1453, %v1906
    %v2006 = vrot.slane %v2004, 3
    %v2009 = vsel %vm1513, %v1454, %v1907
    %v2011 = vsel %vm1518, %v1454, %v1907
    %v2013 = vrot.slane %v2011, 1
    %v2014 = vsel %vm1522, %v1454, %v1907
    %v2016 = vrot.slane %v2014, 2
    %v2017 = vsel %vm1526, %v1454, %v1907
    %v2019 = vrot.slane %v2017, 3
    %v2022 = vsel %vm1513, %v1455, %v1908
    %v2024 = vsel %vm1518, %v1455, %v1908
    %v2026 = vrot.slane %v2024, 1
    %v2027 = vunpack.i.l.s16 %v1911
    %v2028 = vunpack.i.h.s16 %v1911
    %v2029 = vunpack.i.l.s16 %v1915
    %v2030 = vunpack.i.h.s16 %v1915
    %v2031 = vunpack.i.l.s16 %v1918
    %v2032 = vunpack.i.h.s16 %v1918
    %v2033 = vunpack.i.l.s16 %v1921
    %v2034 = vunpack.i.h.s16 %v1921
    %v2035 = vunpack.i.l.s16 %v1924
    %v2036 = vunpack.i.h.s16 %v1924
    %v2037 = vunpack.i.l.s16 %v1928
    %v2038 = vunpack.i.h.s16 %v1928
    %v2039 = vunpack.i.l.s16 %v1931
    %v2040 = vunpack.i.h.s16 %v1931
    %v2041 = vunpack.i.l.s16 %v1934
    %v2042 = vunpack.i.h.s16 %v1934
    %v2043 = vunpack.i.l.s16 %v1937
    %v2044 = vunpack.i.h.s16 %v1937
    %v2045 = vunpack.i.l.s16 %v1941
    %v2046 = vunpack.i.h.s16 %v1941
    %v2047 = vunpack.i.l.s16 %v1944
    %v2048 = vunpack.i.h.s16 %v1944
    %v2049 = vunpack.i.l.s16 %v1947
    %v2050 = vunpack.i.h.s16 %v1947
    %v2051 = vunpack.i.l.s16 %v1950
    %v2052 = vunpack.i.h.s16 %v1950
    %v2053 = vunpack.i.l.s16 %v1954
    %v2054 = vunpack.i.h.s16 %v1954
    %v2055 = vunpack.i.l.s16 %v1957
    %v2056 = vunpack.i.h.s16 %v1957
    %v2057 = vunpack.i.l.s16 %v1960
    %v2058 = vunpack.i.h.s16 %v1960
    %v2059 = vunpack.i.l.s16 %v1963
    %v2060 = vunpack.i.h.s16 %v1963
    %v2061 = vunpack.i.l.s16 %v1967
    %v2062 = vunpack.i.l.s16 %v1970
    %v2063 = vunpack.i.h.s16 %v1970
    %v2064 = vunpack.i.l.s16 %v1974
    %v2065 = vunpack.i.h.s16 %v1974
    %v2066 = vunpack.i.l.s16 %v1977
    %v2067 = vunpack.i.h.s16 %v1977
    %v2068 = vunpack.i.l.s16 %v1980
    %v2069 = vunpack.i.h.s16 %v1980
    %v2070 = vunpack.i.l.s16 %v1983
    %v2071 = vunpack.i.h.s16 %v1983
    %v2072 = vunpack.i.l.s16 %v1987
    %v2073 = vunpack.i.h.s16 %v1987
    %v2074 = vunpack.i.l.s16 %v1990
    %v2075 = vunpack.i.h.s16 %v1990
    %v2076 = vunpack.i.l.s16 %v1993
    %v2077 = vunpack.i.h.s16 %v1993
    %v2078 = vunpack.i.l.s16 %v1996
    %v2079 = vunpack.i.h.s16 %v1996
    %v2080 = vunpack.i.l.s16 %v2000
    %v2081 = vunpack.i.h.s16 %v2000
    %v2082 = vunpack.i.l.s16 %v2003
    %v2083 = vunpack.i.h.s16 %v2003
    %v2084 = vunpack.i.l.s16 %v2006
    %v2085 = vunpack.i.h.s16 %v2006
    %v2086 = vunpack.i.l.s16 %v2009
    %v2087 = vunpack.i.h.s16 %v2009
    %v2088 = vunpack.i.l.s16 %v2013
    %v2089 = vunpack.i.h.s16 %v2013
    %v2090 = vunpack.i.l.s16 %v2016
    %v2091 = vunpack.i.h.s16 %v2016
    %v2092 = vunpack.i.l.s16 %v2019
    %v2093 = vunpack.i.h.s16 %v2019
    %v2094 = vunpack.i.l.s16 %v2022
    %v2095 = vunpack.i.h.s16 %v2022
    %v2096 = vunpack.i.l.s16 %v2026
    %v2097 = vpack.i.b16 %v2028, %v2027
    %v2098 = vpack.i.b16 %v2030, %v2029
    %v2099 = vpack.i.b16 %v2032, %v2031
    %v2100 = vpack.i.b16 %v2034, %v2033
    %v2101 = vpack.i.b16 %v2036, %v2035
    %v2102 = vpack.i.b16 %v2038, %v2037
    %v2103 = vpack.i.b16 %v2040, %v2039
    %v2104 = vpack.i.b16 %v2042, %v2041
    %v2105 = vpack.i.b16 %v2044, %v2043
    %v2106 = vpack.i.b16 %v2046, %v2045
    %v2107 = vpack.i.b16 %v2048, %v2047
    %v2108 = vpack.i.b16 %v2050, %v2049
    %v2109 = vpack.i.b16 %v2052, %v2051
    %v2110 = vpack.i.b16 %v2054, %v2053
    %v2111 = vpack.i.b16 %v2056, %v2055
    %v2112 = vpack.i.b16 %v2058, %v2057
    %v2113 = vpack.i.b16 %v2060, %v2059
    %v2114 = vpack.i.b16 %v2062, %v2061
    %v2115 = vpack.i.b16 %v2064, %v2063
    %v2116 = vpack.i.b16 %v2066, %v2065
    %v2117 = vpack.i.b16 %v2068, %v2067
    %v2118 = vpack.i.b16 %v2070, %v2069
    %v2119 = vpack.i.b16 %v2072, %v2071
    %v2120 = vpack.i.b16 %v2074, %v2073
    %v2121 = vpack.i.b16 %v2076, %v2075
    %v2122 = vpack.i.b16 %v2078, %v2077
    %v2123 = vpack.i.b16 %v2080, %v2079
    %v2124 = vpack.i.b16 %v2082, %v2081
    %v2125 = vpack.i.b16 %v2084, %v2083
    %v2126 = vpack.i.b16 %v2086, %v2085
    %v2127 = vpack.i.b16 %v2088, %v2087
    %v2128 = vpack.i.b16 %v2090, %v2089
    %v2129 = vpack.i.b16 %v2092, %v2091
    %v2130 = vpack.i.b16 %v2094, %v2093
    %v2131 = vpack.i.b16 %v2096, %v2095
    %2133 = vst [vmem:[#allocation1] ss:$9 sm:$0xff] %v2097
    %s2135 = scalar_lea.vmem [#allocation1], 1
    %2136 = vst [vmem:[%s2135] ss:$9 sm:$0xff] %v2098
    %s2138 = scalar_lea.vmem [#allocation1], 2
    %2139 = vst [vmem:[%s2138] ss:$9 sm:$0xff] %v2099
    %s2141 = scalar_lea.vmem [#allocation1], 3
    %2142 = vst [vmem:[%s2141] ss:$9 sm:$0xff] %v2100
    %s2144 = scalar_lea.vmem [#allocation1], 4
    %2145 = vst [vmem:[%s2144] ss:$9 sm:$0xff] %v2101
    %s2147 = scalar_lea.vmem [#allocation1], 5
    %2148 = vst [vmem:[%s2147] ss:$9 sm:$0xff] %v2102
    %s2150 = scalar_lea.vmem [#allocation1], 6
    %2151 = vst [vmem:[%s2150] ss:$9 sm:$0xff] %v2103
    %s2153 = scalar_lea.vmem [#allocation1], 7
    %2154 = vst [vmem:[%s2153] ss:$9 sm:$0xff] %v2104
    %v2155 = vld [vmem:[#allocation1] sm:$0xff]
    %2157 = vst [vmem:[#allocation1] ss:$9 sm:$0xff] %v2105
    %2159 = vst [vmem:[%s2135] ss:$9 sm:$0xff] %v2106
    %2161 = vst [vmem:[%s2138] ss:$9 sm:$0xff] %v2107
    %2163 = vst [vmem:[%s2141] ss:$9 sm:$0xff] %v2108
    %2165 = vst [vmem:[%s2144] ss:$9 sm:$0xff] %v2109
    %2167 = vst [vmem:[%s2147] ss:$9 sm:$0xff] %v2110
    %2169 = vst [vmem:[%s2150] ss:$9 sm:$0xff] %v2111
    %2171 = vst [vmem:[%s2153] ss:$9 sm:$0xff] %v2112
    %v2172 = vld [vmem:[#allocation1] sm:$0xff]
    %2174 = vst [vmem:[#allocation1] ss:$9 sm:$0xff] %v2113
    %2176 = vst [vmem:[%s2135] ss:$9 sm:$0xff] %v2114
    %2178 = vst [vmem:[%s2138] ss:$9 sm:$0xff] %v2115
    %2180 = vst [vmem:[%s2141] ss:$9 sm:$0xff] %v2116
    %2182 = vst [vmem:[%s2144] ss:$9 sm:$0xff] %v2117
    %2184 = vst [vmem:[%s2147] ss:$9 sm:$0xff] %v2118
    %2186 = vst [vmem:[%s2150] ss:$9 sm:$0xff] %v2119
    %2188 = vst [vmem:[%s2153] ss:$9 sm:$0xff] %v2120
    %v2189 = vld [vmem:[#allocation1] sm:$0xff]
    %2191 = vst [vmem:[#allocation1] ss:$9 sm:$0xff] %v2121
    %2193 = vst [vmem:[%s2135] ss:$9 sm:$0xff] %v2122
    %2195 = vst [vmem:[%s2138] ss:$9 sm:$0xff] %v2123
    %2197 = vst [vmem:[%s2141] ss:$9 sm:$0xff] %v2124
    %2199 = vst [vmem:[%s2144] ss:$9 sm:$0xff] %v2125
    %2201 = vst [vmem:[%s2147] ss:$9 sm:$0xff] %v2126
    %2203 = vst [vmem:[%s2150] ss:$9 sm:$0xff] %v2127
    %2205 = vst [vmem:[%s2153] ss:$9 sm:$0xff] %v2128
    %v2206 = vld [vmem:[#allocation1] sm:$0xff]
    %2208 = vst [vmem:[#allocation1] ss:$9 sm:$0xff] %v2129
    %2210 = vst [vmem:[%s2135] ss:$9 sm:$0xff] %v2130
    %2212 = vst [vmem:[%s2138] ss:$9 sm:$0xff] %v2131
    %v2213 = vld [vmem:[#allocation1] sm:$0xff]
    %v2222 = vunpack.c.l.b16 %v1456
    %v2223 = vunpack.c.l.b16 %v1457
    %v2224 = vunpack.c.l.b16 %v1458
    %v2225 = vunpack.c.l.b16 %v1459
    %v2226 = vunpack.c.l.b16 %v1460
    %v2227 = vunpack.c.l.b16 %v1461
    %v2228 = vunpack.c.l.b16 %v1462
    %v2229 = vunpack.c.l.b16 %v1463
    %v2230 = vpack.c.b16 %v2223, %v2222
    %v2231 = vpack.c.b16 %v2225, %v2224
    %v2232 = vpack.c.b16 %v2227, %v2226
    %v2233 = vpack.c.b16 %v2229, %v2228
    %v2238 = vsel %vm1184, %v2155, 0
    %v2240 = vsel %vm1184, %v2172, 0
    %v2242 = vsel %vm1184, %v2189, 0
    %v2244 = vsel %vm1184, %v2206, 0
    %v2246 = vsel %vm1184, %v2213, 0
    %2248 = vmatpush.bf16.msra.mxu0 0
    %2249 = vmatpush.bf16.msra.mxu0 0
    %2250 = vmatpush.bf16.msra.mxu0 0
    %2251 = vmatpush.bf16.msra.mxu0 0
    %2252 = vmatpush.bf16.msra.mxu0 %v2233
    %2253 = vmatpush.bf16.msra.mxu0 %v2232
    %2254 = vmatpush.bf16.msra.mxu0 %v2231
    %2255 = vmatpush.bf16.msra.mxu0 %v2230
    %2256 = vmatmul.bf16.gmra.mxu0 %v2238
    %v2257 = vpop.f32.mrf.mxu0
    %v2258 = vadd.f32 %v1866, %v2257
    %v2259 = vpop.f32.mrf.mxu0
    %v2260 = vadd.f32 %v1868, %v2259
    %2261 = vmatmul.bf16.gmra.mxu0 %v2240
    %v2262 = vpop.f32.mrf.mxu0
    %v2263 = vadd.f32 %v1871, %v2262
    %v2264 = vpop.f32.mrf.mxu0
    %v2265 = vadd.f32 %v1873, %v2264
    %2266 = vmatmul.bf16.gmra.mxu0 %v2242
    %v2267 = vpop.f32.mrf.mxu0
    %v2268 = vadd.f32 %v1876, %v2267
    %v2269 = vpop.f32.mrf.mxu0
    %v2270 = vadd.f32 %v1878, %v2269
    %2271 = vmatmul.bf16.gmra.mxu0 %v2244
    %v2272 = vpop.f32.mrf.mxu0
    %v2273 = vadd.f32 %v1881, %v2272
    %v2274 = vpop.f32.mrf.mxu0
    %v2275 = vadd.f32 %v1883, %v2274
    %2276 = vmatmul.bf16.gmra.mxu0 %v2246
    %v2277 = vpop.f32.mrf.mxu0
    %v2278 = vadd.f32 %v1886, %v2277
    %v2279 = vpop.f32.mrf.mxu0
    %2280 = vdwg.mxu0
    %v2290 = vrot.slane %v2258, 1
    %v2291 = vrot.slane %v2258, 2
    %v2292 = vrot.slane %v2258, 3
    %v2293 = vrot.slane %v2258, 4
    %v2294 = vrot.slane %v2258, 5
    %v2295 = vrot.slane %v2258, 6
    %v2296 = vrot.slane %v2258, 7
    %v2297 = vrot.slane %v2260, 1
    %v2298 = vrot.slane %v2260, 2
    %v2299 = vrot.slane %v2260, 3
    %v2300 = vrot.slane %v2260, 4
    %v2301 = vrot.slane %v2260, 5
    %v2302 = vrot.slane %v2260, 6
    %v2303 = vrot.slane %v2260, 7
    %v2304 = vrot.slane %v2263, 1
    %v2305 = vrot.slane %v2263, 2
    %v2306 = vrot.slane %v2263, 3
    %v2307 = vrot.slane %v2263, 4
    %v2308 = vrot.slane %v2263, 5
    %v2309 = vrot.slane %v2263, 6
    %v2310 = vrot.slane %v2263, 7
    %v2311 = vrot.slane %v2265, 1
    %v2312 = vrot.slane %v2265, 2
    %v2313 = vrot.slane %v2265, 3
    %v2314 = vrot.slane %v2265, 4
    %v2315 = vrot.slane %v2265, 5
    %v2316 = vrot.slane %v2265, 6
    %v2317 = vrot.slane %v2265, 7
    %v2318 = vrot.slane %v2268, 1
    %v2319 = vrot.slane %v2268, 2
    %v2320 = vrot.slane %v2268, 3
    %v2321 = vrot.slane %v2268, 4
    %v2322 = vrot.slane %v2268, 5
    %v2323 = vrot.slane %v2268, 6
    %v2324 = vrot.slane %v2268, 7
    %v2325 = vrot.slane %v2270, 1
    %v2326 = vrot.slane %v2270, 2
    %v2327 = vrot.slane %v2270, 3
    %v2328 = vrot.slane %v2270, 4
    %v2329 = vrot.slane %v2270, 5
    %v2330 = vrot.slane %v2270, 6
    %v2331 = vrot.slane %v2270, 7
    %v2332 = vrot.slane %v2273, 1
    %v2333 = vrot.slane %v2273, 2
    %v2334 = vrot.slane %v2273, 3
    %v2335 = vrot.slane %v2273, 4
    %v2336 = vrot.slane %v2273, 5
    %v2337 = vrot.slane %v2273, 6
    %v2338 = vrot.slane %v2273, 7
    %v2339 = vrot.slane %v2275, 1
    %v2340 = vrot.slane %v2275, 2
    %v2341 = vrot.slane %v2275, 3
    %v2342 = vrot.slane %v2275, 4
    %v2343 = vrot.slane %v2275, 5
    %v2344 = vrot.slane %v2275, 6
    %v2345 = vrot.slane %v2275, 7
    %v2346 = vrot.slane %v2278, 1
    %v2347 = vrot.slane %v2278, 2
    %v2348 = vrot.slane %v2278, 3
    %v2349 = vrot.slane %v2278, 4
    %v2350 = vrot.slane %v2278, 5
    %v2412 = vld [vmem:[#allocation2 + $0x2] sm:$0xff]
    %v2413 = vld [vmem:[#allocation2 + $0xa] sm:$0xff]
    %v2414 = vld [vmem:[#allocation2 + $0x12] sm:$0xff]
    %v2415 = vld [vmem:[#allocation2 + $0x1a] sm:$0xff]
    %v2416 = vld [vmem:[#allocation2 + $0x22] sm:$0x7]
    %v2417 = vld [vmem:[#allocation2 + $0x2a] sm:$0xff]
    %v2418 = vld [vmem:[#allocation2 + $0x32] sm:$0xff]
    %v2419 = vld [vmem:[#allocation2 + $0x3a] sm:$0xff]
    %v2420 = vld [vmem:[#allocation2 + $0x42] sm:$0xff]
    %v2421 = vld [vmem:[#allocation2 + $0x4a] sm:$0x7]
    %v2422 = vpack.c.bf16 %v2412, %v2412
    %v2423 = vpack.c.bf16 %v2413, %v2413
    %v2424 = vpack.c.bf16 %v2414, %v2414
    %v2425 = vpack.c.bf16 %v2415, %v2415
    %v2426 = vpack.c.bf16 %v2416, %v2416
    %v2427 = vpack.c.bf16 %v2417, %v2417
    %v2428 = vpack.c.bf16 %v2418, %v2418
    %v2429 = vpack.c.bf16 %v2419, %v2419
    %v2430 = vpack.c.bf16 %v2420, %v2420
    %v2431 = vpack.c.bf16 %v2421, %v2421
    %s2432 = scalar_lea.vmem [#allocation8], 64
    %v2433 = vld [vmem:[%s2432] sm:$0xf]
    %v2434 = vld [vmem:[%s2432 + $0x4] sm:$0xf]
    %v2435 = vld [vmem:[%s2432 + $0x8] sm:$0xf]
    %v2436 = vld [vmem:[%s2432 + $0xc] sm:$0xf]
    %v2437 = vld [vmem:[%s2432 + $0x10] sm:$0xf]
    %v2438 = vld [vmem:[%s2432 + $0x14] sm:$0xf]
    %v2439 = vld [vmem:[%s2432 + $0x18] sm:$0xf]
    %v2440 = vld [vmem:[%s2432 + $0x1c] sm:$0xf]
    %v2451 = vrot.slane %v2422, 3
    %v2452 = vrot.slane %v2423, 3
    %v2453 = vrot.slane %v2424, 3
    %v2454 = vrot.slane %v2425, 3
    %v2455 = vrot.slane %v2426, 3
    %v2456 = vrot.slane %v2427, 3
    %v2457 = vrot.slane %v2428, 3
    %v2458 = vrot.slane %v2429, 3
    %v2459 = vrot.slane %v2430, 3
    %v2460 = vrot.slane %v2431, 3
    %v2463 = vsel %vm1513, %v2422, %v2451
    %v2465 = vsel %vm1518, %v2422, %v2451
    %v2467 = vrot.slane %v2465, 1
    %v2468 = vsel %vm1522, %v2422, %v2451
    %v2470 = vrot.slane %v2468, 2
    %v2471 = vsel %vm1526, %v2422, %v2451
    %v2473 = vrot.slane %v2471, 3
    %v2476 = vsel %vm1513, %v2423, %v2452
    %v2478 = vsel %vm1518, %v2423, %v2452
    %v2480 = vrot.slane %v2478, 1
    %v2481 = vsel %vm1522, %v2423, %v2452
    %v2483 = vrot.slane %v2481, 2
    %v2484 = vsel %vm1526, %v2423, %v2452
    %v2486 = vrot.slane %v2484, 3
    %v2489 = vsel %vm1513, %v2424, %v2453
    %v2491 = vsel %vm1518, %v2424, %v2453
    %v2493 = vrot.slane %v2491, 1
    %v2494 = vsel %vm1522, %v2424, %v2453
    %v2496 = vrot.slane %v2494, 2
    %v2497 = vsel %vm1526, %v2424, %v2453
    %v2499 = vrot.slane %v2497, 3
    %v2502 = vsel %vm1513, %v2425, %v2454
    %v2504 = vsel %vm1518, %v2425, %v2454
    %v2506 = vrot.slane %v2504, 1
    %v2507 = vsel %vm1522, %v2425, %v2454
    %v2509 = vrot.slane %v2507, 2
    %v2510 = vsel %vm1526, %v2425, %v2454
    %v2512 = vrot.slane %v2510, 3
    %v2515 = vsel %vm1513, %v2426, %v2455
    %v2517 = vsel %vm1518, %v2426, %v2455
    %v2519 = vrot.slane %v2517, 1
    %v2522 = vsel %vm1513, %v2427, %v2456
    %v2524 = vsel %vm1518, %v2427, %v2456
    %v2526 = vrot.slane %v2524, 1
    %v2527 = vsel %vm1522, %v2427, %v2456
    %v2529 = vrot.slane %v2527, 2
    %v2530 = vsel %vm1526, %v2427, %v2456
    %v2532 = vrot.slane %v2530, 3
    %v2535 = vsel %vm1513, %v2428, %v2457
    %v2537 = vsel %vm1518, %v2428, %v2457
    %v2539 = vrot.slane %v2537, 1
    %v2540 = vsel %vm1522, %v2428, %v2457
    %v2542 = vrot.slane %v2540, 2
    %v2543 = vsel %vm1526, %v2428, %v2457
    %v2545 = vrot.slane %v2543, 3
    %v2548 = vsel %vm1513, %v2429, %v2458
    %v2550 = vsel %vm1518, %v2429, %v2458
    %v2552 = vrot.slane %v2550, 1
    %v2553 = vsel %vm1522, %v2429, %v2458
    %v2555 = vrot.slane %v2553, 2
    %v2556 = vsel %vm1526, %v2429, %v2458
    %v2558 = vrot.slane %v2556, 3
    %v2561 = vsel %vm1513, %v2430, %v2459
    %v2563 = vsel %vm1518, %v2430, %v2459
    %v2565 = vrot.slane %v2563, 1
    %v2566 = vsel %vm1522, %v2430, %v2459
    %v2568 = vrot.slane %v2566, 2
    %v2569 = vsel %vm1526, %v2430, %v2459
    %v2571 = vrot.slane %v2569, 3
    %v2574 = vsel %vm1513, %v2431, %v2460
    %v2576 = vsel %vm1518, %v2431, %v2460
    %v2578 = vrot.slane %v2576, 1
    %v2579 = vunpack.i.l.s16 %v2463
    %v2580 = vunpack.i.h.s16 %v2463
    %v2581 = vunpack.i.l.s16 %v2467
    %v2582 = vunpack.i.h.s16 %v2467
    %v2583 = vunpack.i.l.s16 %v2470
    %v2584 = vunpack.i.h.s16 %v2470
    %v2585 = vunpack.i.l.s16 %v2473
    %v2586 = vunpack.i.h.s16 %v2473
    %v2587 = vunpack.i.l.s16 %v2476
    %v2588 = vunpack.i.h.s16 %v2476
    %v2589 = vunpack.i.l.s16 %v2480
    %v2590 = vunpack.i.h.s16 %v2480
    %v2591 = vunpack.i.l.s16 %v2483
    %v2592 = vunpack.i.h.s16 %v2483
    %v2593 = vunpack.i.l.s16 %v2486
    %v2594 = vunpack.i.h.s16 %v2486
    %v2595 = vunpack.i.l.s16 %v2489
    %v2596 = vunpack.i.h.s16 %v2489
    %v2597 = vunpack.i.l.s16 %v2493
    %v2598 = vunpack.i.h.s16 %v2493
    %v2599 = vunpack.i.l.s16 %v2496
    %v2600 = vunpack.i.h.s16 %v2496
    %v2601 = vunpack.i.l.s16 %v2499
    %v2602 = vunpack.i.h.s16 %v2499
    %v2603 = vunpack.i.l.s16 %v2502
    %v2604 = vunpack.i.h.s16 %v2502
    %v2605 = vunpack.i.l.s16 %v2506
    %v2606 = vunpack.i.h.s16 %v2506
    %v2607 = vunpack.i.l.s16 %v2509
    %v2608 = vunpack.i.h.s16 %v2509
    %v2609 = vunpack.i.l.s16 %v2512
    %v2610 = vunpack.i.h.s16 %v2512
    %v2611 = vunpack.i.l.s16 %v2515
    %v2612 = vunpack.i.h.s16 %v2515
    %v2613 = vunpack.i.l.s16 %v2519
    %v2614 = vunpack.i.l.s16 %v2522
    %v2615 = vunpack.i.h.s16 %v2522
    %v2616 = vunpack.i.l.s16 %v2526
    %v2617 = vunpack.i.h.s16 %v2526
    %v2618 = vunpack.i.l.s16 %v2529
    %v2619 = vunpack.i.h.s16 %v2529
    %v2620 = vunpack.i.l.s16 %v2532
    %v2621 = vunpack.i.h.s16 %v2532
    %v2622 = vunpack.i.l.s16 %v2535
    %v2623 = vunpack.i.h.s16 %v2535
    %v2624 = vunpack.i.l.s16 %v2539
    %v2625 = vunpack.i.h.s16 %v2539
    %v2626 = vunpack.i.l.s16 %v2542
    %v2627 = vunpack.i.h.s16 %v2542
    %v2628 = vunpack.i.l.s16 %v2545
    %v2629 = vunpack.i.h.s16 %v2545
    %v2630 = vunpack.i.l.s16 %v2548
    %v2631 = vunpack.i.h.s16 %v2548
    %v2632 = vunpack.i.l.s16 %v2552
    %v2633 = vunpack.i.h.s16 %v2552
    %v2634 = vunpack.i.l.s16 %v2555
    %v2635 = vunpack.i.h.s16 %v2555
    %v2636 = vunpack.i.l.s16 %v2558
    %v2637 = vunpack.i.h.s16 %v2558
    %v2638 = vunpack.i.l.s16 %v2561
    %v2639 = vunpack.i.h.s16 %v2561
    %v2640 = vunpack.i.l.s16 %v2565
    %v2641 = vunpack.i.h.s16 %v2565
    %v2642 = vunpack.i.l.s16 %v2568
    %v2643 = vunpack.i.h.s16 %v2568
    %v2644 = vunpack.i.l.s16 %v2571
    %v2645 = vunpack.i.h.s16 %v2571
    %v2646 = vunpack.i.l.s16 %v2574
    %v2647 = vunpack.i.h.s16 %v2574
    %v2648 = vunpack.i.l.s16 %v2578
    %v2649 = vpack.i.b16 %v2580, %v2579
    %v2650 = vpack.i.b16 %v2582, %v2581
    %v2651 = vpack.i.b16 %v2584, %v2583
    %v2652 = vpack.i.b16 %v2586, %v2585
    %v2653 = vpack.i.b16 %v2588, %v2587
    %v2654 = vpack.i.b16 %v2590, %v2589
    %v2655 = vpack.i.b16 %v2592, %v2591
    %v2656 = vpack.i.b16 %v2594, %v2593
    %v2657 = vpack.i.b16 %v2596, %v2595
    %v2658 = vpack.i.b16 %v2598, %v2597
    %v2659 = vpack.i.b16 %v2600, %v2599
    %v2660 = vpack.i.b16 %v2602, %v2601
    %v2661 = vpack.i.b16 %v2604, %v2603
    %v2662 = vpack.i.b16 %v2606, %v2605
    %v2663 = vpack.i.b16 %v2608, %v2607
    %v2664 = vpack.i.b16 %v2610, %v2609
    %v2665 = vpack.i.b16 %v2612, %v2611
    %v2666 = vpack.i.b16 %v2614, %v2613
    %v2667 = vpack.i.b16 %v2616, %v2615
    %v2668 = vpack.i.b16 %v2618, %v2617
    %v2669 = vpack.i.b16 %v2620, %v2619
    %v2670 = vpack.i.b16 %v2622, %v2621
    %v2671 = vpack.i.b16 %v2624, %v2623
    %v2672 = vpack.i.b16 %v2626, %v2625
    %v2673 = vpack.i.b16 %v2628, %v2627
    %v2674 = vpack.i.b16 %v2630, %v2629
    %v2675 = vpack.i.b16 %v2632, %v2631
    %v2676 = vpack.i.b16 %v2634, %v2633
    %v2677 = vpack.i.b16 %v2636, %v2635
    %v2678 = vpack.i.b16 %v2638, %v2637
    %v2679 = vpack.i.b16 %v2640, %v2639
    %v2680 = vpack.i.b16 %v2642, %v2641
    %v2681 = vpack.i.b16 %v2644, %v2643
    %v2682 = vpack.i.b16 %v2646, %v2645
    %v2683 = vpack.i.b16 %v2648, %v2647
    %2685 = vst [vmem:[#allocation1] ss:$9 sm:$0xff] %v2649
    %s2687 = scalar_lea.vmem [#allocation1], 1
    %2688 = vst [vmem:[%s2687] ss:$9 sm:$0xff] %v2650
    %s2690 = scalar_lea.vmem [#allocation1], 2
    %2691 = vst [vmem:[%s2690] ss:$9 sm:$0xff] %v2651
    %s2693 = scalar_lea.vmem [#allocation1], 3
    %2694 = vst [vmem:[%s2693] ss:$9 sm:$0xff] %v2652
    %s2696 = scalar_lea.vmem [#allocation1], 4
    %2697 = vst [vmem:[%s2696] ss:$9 sm:$0xff] %v2653
    %s2699 = scalar_lea.vmem [#allocation1], 5
    %2700 = vst [vmem:[%s2699] ss:$9 sm:$0xff] %v2654
    %s2702 = scalar_lea.vmem [#allocation1], 6
    %2703 = vst [vmem:[%s2702] ss:$9 sm:$0xff] %v2655
    %s2705 = scalar_lea.vmem [#allocation1], 7
    %2706 = vst [vmem:[%s2705] ss:$9 sm:$0xff] %v2656
    %v2707 = vld [vmem:[#allocation1] sm:$0xff]
    %2709 = vst [vmem:[#allocation1] ss:$9 sm:$0xff] %v2657
    %2711 = vst [vmem:[%s2687] ss:$9 sm:$0xff] %v2658
    %2713 = vst [vmem:[%s2690] ss:$9 sm:$0xff] %v2659
    %2715 = vst [vmem:[%s2693] ss:$9 sm:$0xff] %v2660
    %2717 = vst [vmem:[%s2696] ss:$9 sm:$0xff] %v2661
    %2719 = vst [vmem:[%s2699] ss:$9 sm:$0xff] %v2662
    %2721 = vst [vmem:[%s2702] ss:$9 sm:$0xff] %v2663
    %2723 = vst [vmem:[%s2705] ss:$9 sm:$0xff] %v2664
    %v2724 = vld [vmem:[#allocation1] sm:$0xff]
    %2726 = vst [vmem:[#allocation1] ss:$9 sm:$0xff] %v2665
    %2728 = vst [vmem:[%s2687] ss:$9 sm:$0xff] %v2666
    %2730 = vst [vmem:[%s2690] ss:$9 sm:$0xff] %v2667
    %2732 = vst [vmem:[%s2693] ss:$9 sm:$0xff] %v2668
    %2734 = vst [vmem:[%s2696] ss:$9 sm:$0xff] %v2669
    %2736 = vst [vmem:[%s2699] ss:$9 sm:$0xff] %v2670
    %2738 = vst [vmem:[%s2702] ss:$9 sm:$0xff] %v2671
    %2740 = vst [vmem:[%s2705] ss:$9 sm:$0xff] %v2672
    %v2741 = vld [vmem:[#allocation1] sm:$0xff]
    %2743 = vst [vmem:[#allocation1] ss:$9 sm:$0xff] %v2673
    %2745 = vst [vmem:[%s2687] ss:$9 sm:$0xff] %v2674
    %2747 = vst [vmem:[%s2690] ss:$9 sm:$0xff] %v2675
    %2749 = vst [vmem:[%s2693] ss:$9 sm:$0xff] %v2676
    %2751 = vst [vmem:[%s2696] ss:$9 sm:$0xff] %v2677
    %2753 = vst [vmem:[%s2699] ss:$9 sm:$0xff] %v2678
    %2755 = vst [vmem:[%s2702] ss:$9 sm:$0xff] %v2679
    %2757 = vst [vmem:[%s2705] ss:$9 sm:$0xff] %v2680
    %v2758 = vld [vmem:[#allocation1] sm:$0xff]
    %2760 = vst [vmem:[#allocation1] ss:$9 sm:$0xff] %v2681
    %2762 = vst [vmem:[%s2687] ss:$9 sm:$0xff] %v2682
    %2764 = vst [vmem:[%s2690] ss:$9 sm:$0xff] %v2683
    %v2765 = vld [vmem:[#allocation1] sm:$0xff]
    %v2774 = vunpack.c.l.b16 %v2433
    %v2775 = vunpack.c.l.b16 %v2434
    %v2776 = vunpack.c.l.b16 %v2435
    %v2777 = vunpack.c.l.b16 %v2436
    %v2778 = vunpack.c.l.b16 %v2437
    %v2779 = vunpack.c.l.b16 %v2438
    %v2780 = vunpack.c.l.b16 %v2439
    %v2781 = vunpack.c.l.b16 %v2440
    %v2782 = vpack.c.b16 %v2775, %v2774
    %v2783 = vpack.c.b16 %v2777, %v2776
    %v2784 = vpack.c.b16 %v2779, %v2778
    %v2785 = vpack.c.b16 %v2781, %v2780
    %v2790 = vsel %vm1184, %v2707, 0
    %v2792 = vsel %vm1184, %v2724, 0
    %v2794 = vsel %vm1184, %v2741, 0
    %v2796 = vsel %vm1184, %v2758, 0
    %v2798 = vsel %vm1184, %v2765, 0
    %2800 = vmatpush.bf16.msra.mxu0 0
    %2801 = vmatpush.bf16.msra.mxu0 0
    %2802 = vmatpush.bf16.msra.mxu0 0
    %2803 = vmatpush.bf16.msra.mxu0 0
    %2804 = vmatpush.bf16.msra.mxu0 %v2785
    %2805 = vmatpush.bf16.msra.mxu0 %v2784
    %2806 = vmatpush.bf16.msra.mxu0 %v2783
    %2807 = vmatpush.bf16.msra.mxu0 %v2782
    %2808 = vmatmul.bf16.gmra.mxu0 %v2790
    %v2809 = vpop.f32.mrf.mxu0
    %v2810 = vadd.f32 0.0, %v2809
    %v2811 = vpop.f32.mrf.mxu0
    %v2812 = vadd.f32 0.0, %v2811
    %2813 = vmatmul.bf16.gmra.mxu0 %v2792
    %v2814 = vpop.f32.mrf.mxu0
    %v2815 = vadd.f32 0.0, %v2814
    %v2816 = vpop.f32.mrf.mxu0
    %v2817 = vadd.f32 0.0, %v2816
    %2818 = vmatmul.bf16.gmra.mxu0 %v2794
    %v2819 = vpop.f32.mrf.mxu0
    %v2820 = vadd.f32 0.0, %v2819
    %v2821 = vpop.f32.mrf.mxu0
    %v2822 = vadd.f32 0.0, %v2821
    %2823 = vmatmul.bf16.gmra.mxu0 %v2796
    %v2824 = vpop.f32.mrf.mxu0
    %v2825 = vadd.f32 0.0, %v2824
    %v2826 = vpop.f32.mrf.mxu0
    %v2827 = vadd.f32 0.0, %v2826
    %2828 = vmatmul.bf16.gmra.mxu0 %v2798
    %v2829 = vpop.f32.mrf.mxu0
    %v2830 = vadd.f32 0.0, %v2829
    %v2831 = vpop.f32.mrf.mxu0
    %2832 = vdwg.mxu0
    %v2842 = vrot.slane %v2810, 1
    %v2843 = vrot.slane %v2810, 2
    %v2844 = vrot.slane %v2810, 3
    %v2845 = vrot.slane %v2810, 4
    %v2846 = vrot.slane %v2810, 5
    %v2847 = vrot.slane %v2810, 6
    %v2848 = vrot.slane %v2810, 7
    %v2849 = vrot.slane %v2812, 1
    %v2850 = vrot.slane %v2812, 2
    %v2851 = vrot.slane %v2812, 3
    %v2852 = vrot.slane %v2812, 4
    %v2853 = vrot.slane %v2812, 5
    %v2854 = vrot.slane %v2812, 6
    %v2855 = vrot.slane %v2812, 7
    %v2856 = vrot.slane %v2815, 1
    %v2857 = vrot.slane %v2815, 2
    %v2858 = vrot.slane %v2815, 3
    %v2859 = vrot.slane %v2815, 4
    %v2860 = vrot.slane %v2815, 5
    %v2861 = vrot.slane %v2815, 6
    %v2862 = vrot.slane %v2815, 7
    %v2863 = vrot.slane %v2817, 1
    %v2864 = vrot.slane %v2817, 2
    %v2865 = vrot.slane %v2817, 3
    %v2866 = vrot.slane %v2817, 4
    %v2867 = vrot.slane %v2817, 5
    %v2868 = vrot.slane %v2817, 6
    %v2869 = vrot.slane %v2817, 7
    %v2870 = vrot.slane %v2820, 1
    %v2871 = vrot.slane %v2820, 2
    %v2872 = vrot.slane %v2820, 3
    %v2873 = vrot.slane %v2820, 4
    %v2874 = vrot.slane %v2820, 5
    %v2875 = vrot.slane %v2820, 6
    %v2876 = vrot.slane %v2820, 7
    %v2877 = vrot.slane %v2822, 1
    %v2878 = vrot.slane %v2822, 2
    %v2879 = vrot.slane %v2822, 3
    %v2880 = vrot.slane %v2822, 4
    %v2881 = vrot.slane %v2822, 5
    %v2882 = vrot.slane %v2822, 6
    %v2883 = vrot.slane %v2822, 7
    %v2884 = vrot.slane %v2825, 1
    %v2885 = vrot.slane %v2825, 2
    %v2886 = vrot.slane %v2825, 3
    %v2887 = vrot.slane %v2825, 4
    %v2888 = vrot.slane %v2825, 5
    %v2889 = vrot.slane %v2825, 6
    %v2890 = vrot.slane %v2825, 7
    %v2891 = vrot.slane %v2827, 1
    %v2892 = vrot.slane %v2827, 2
    %v2893 = vrot.slane %v2827, 3
    %v2894 = vrot.slane %v2827, 4
    %v2895 = vrot.slane %v2827, 5
    %v2896 = vrot.slane %v2827, 6
    %v2897 = vrot.slane %v2827, 7
    %v2898 = vrot.slane %v2830, 1
    %v2899 = vrot.slane %v2830, 2
    %v2900 = vrot.slane %v2830, 3
    %v2901 = vrot.slane %v2830, 4
    %v2902 = vrot.slane %v2830, 5
    %v2964 = vadd.f32 %v2258, %v2810
    %v2965 = vadd.f32 %v2290, %v2842
    %v2966 = vadd.f32 %v2291, %v2843
    %v2967 = vadd.f32 %v2292, %v2844
    %v2968 = vadd.f32 %v2293, %v2845
    %v2969 = vadd.f32 %v2294, %v2846
    %v2970 = vadd.f32 %v2295, %v2847
    %v2971 = vadd.f32 %v2296, %v2848
    %v2972 = vadd.f32 %v2260, %v2812
    %v2973 = vadd.f32 %v2297, %v2849
    %v2974 = vadd.f32 %v2298, %v2850
    %v2975 = vadd.f32 %v2299, %v2851
    %v2976 = vadd.f32 %v2300, %v2852
    %v2977 = vadd.f32 %v2301, %v2853
    %v2978 = vadd.f32 %v2302, %v2854
    %v2979 = vadd.f32 %v2303, %v2855
    %v2980 = vadd.f32 %v2263, %v2815
    %v2981 = vadd.f32 %v2304, %v2856
    %v2982 = vadd.f32 %v2305, %v2857
    %v2983 = vadd.f32 %v2306, %v2858
    %v2984 = vadd.f32 %v2307, %v2859
    %v2985 = vadd.f32 %v2308, %v2860
    %v2986 = vadd.f32 %v2309, %v2861
    %v2987 = vadd.f32 %v2310, %v2862
    %v2988 = vadd.f32 %v2265, %v2817
    %v2989 = vadd.f32 %v2311, %v2863
    %v2990 = vadd.f32 %v2312, %v2864
    %v2991 = vadd.f32 %v2313, %v2865
    %v2992 = vadd.f32 %v2314, %v2866
    %v2993 = vadd.f32 %v2315, %v2867
    %v2994 = vadd.f32 %v2316, %v2868
    %v2995 = vadd.f32 %v2317, %v2869
    %v2996 = vadd.f32 %v2268, %v2820
    %v2997 = vadd.f32 %v2318, %v2870
    %v2998 = vadd.f32 %v2319, %v2871
    %v2999 = vadd.f32 %v2320, %v2872
    %v3000 = vadd.f32 %v2321, %v2873
    %v3001 = vadd.f32 %v2322, %v2874
    %v3002 = vadd.f32 %v2323, %v2875
    %v3003 = vadd.f32 %v2324, %v2876
    %v3004 = vadd.f32 %v2270, %v2822
    %v3005 = vadd.f32 %v2325, %v2877
    %v3006 = vadd.f32 %v2326, %v2878
    %v3007 = vadd.f32 %v2327, %v2879
    %v3008 = vadd.f32 %v2328, %v2880
    %v3009 = vadd.f32 %v2329, %v2881
    %v3010 = vadd.f32 %v2330, %v2882
    %v3011 = vadd.f32 %v2331, %v2883
    %v3012 = vadd.f32 %v2273, %v2825
    %v3013 = vadd.f32 %v2332, %v2884
    %v3014 = vadd.f32 %v2333, %v2885
    %v3015 = vadd.f32 %v2334, %v2886
    %v3016 = vadd.f32 %v2335, %v2887
    %v3017 = vadd.f32 %v2336, %v2888
    %v3018 = vadd.f32 %v2337, %v2889
    %v3019 = vadd.f32 %v2338, %v2890
    %v3020 = vadd.f32 %v2275, %v2827
    %v3021 = vadd.f32 %v2339, %v2891
    %v3022 = vadd.f32 %v2340, %v2892
    %v3023 = vadd.f32 %v2341, %v2893
    %v3024 = vadd.f32 %v2342, %v2894
    %v3025 = vadd.f32 %v2343, %v2895
    %v3026 = vadd.f32 %v2344, %v2896
    %v3027 = vadd.f32 %v2345, %v2897
    %v3028 = vadd.f32 %v2278, %v2830
    %v3029 = vadd.f32 %v2346, %v2898
    %v3030 = vadd.f32 %v2347, %v2899
    %v3031 = vadd.f32 %v2348, %v2900
    %v3032 = vadd.f32 %v2349, %v2901
    %v3033 = vadd.f32 %v2350, %v2902
    %v3034 = vld [vmem:[#allocation2 + $0x3] sm:$0xff]
    %v3035 = vld [vmem:[#allocation2 + $0xb] sm:$0xff]
    %v3036 = vld [vmem:[#allocation2 + $0x13] sm:$0xff]
    %v3037 = vld [vmem:[#allocation2 + $0x1b] sm:$0xff]
    %v3038 = vld [vmem:[#allocation2 + $0x23] sm:$0x7]
    %v3039 = vld [vmem:[#allocation2 + $0x2b] sm:$0xff]
    %v3040 = vld [vmem:[#allocation2 + $0x33] sm:$0xff]
    %v3041 = vld [vmem:[#allocation2 + $0x3b] sm:$0xff]
    %v3042 = vld [vmem:[#allocation2 + $0x43] sm:$0xff]
    %v3043 = vld [vmem:[#allocation2 + $0x4b] sm:$0x7]
    %v3044 = vpack.c.bf16 %v3034, %v3034
    %v3045 = vpack.c.bf16 %v3035, %v3035
    %v3046 = vpack.c.bf16 %v3036, %v3036
    %v3047 = vpack.c.bf16 %v3037, %v3037
    %v3048 = vpack.c.bf16 %v3038, %v3038
    %v3049 = vpack.c.bf16 %v3039, %v3039
    %v3050 = vpack.c.bf16 %v3040, %v3040
    %v3051 = vpack.c.bf16 %v3041, %v3041
    %v3052 = vpack.c.bf16 %v3042, %v3042
    %v3053 = vpack.c.bf16 %v3043, %v3043
    %s3054 = scalar_lea.vmem [#allocation8], 96
    %v3055 = vld [vmem:[%s3054] sm:$0xf]
    %v3056 = vld [vmem:[%s3054 + $0x4] sm:$0xf]
    %v3057 = vld [vmem:[%s3054 + $0x8] sm:$0xf]
    %v3058 = vld [vmem:[%s3054 + $0xc] sm:$0xf]
    %v3059 = vld [vmem:[%s3054 + $0x10] sm:$0xf]
    %v3060 = vld [vmem:[%s3054 + $0x14] sm:$0xf]
    %v3061 = vld [vmem:[%s3054 + $0x18] sm:$0xf]
    %v3062 = vld [vmem:[%s3054 + $0x1c] sm:$0xf]
    %v3073 = vrot.slane %v3044, 3
    %v3074 = vrot.slane %v3045, 3
    %v3075 = vrot.slane %v3046, 3
    %v3076 = vrot.slane %v3047, 3
    %v3077 = vrot.slane %v3048, 3
    %v3078 = vrot.slane %v3049, 3
    %v3079 = vrot.slane %v3050, 3
    %v3080 = vrot.slane %v3051, 3
    %v3081 = vrot.slane %v3052, 3
    %v3082 = vrot.slane %v3053, 3
    %v3085 = vsel %vm1513, %v3044, %v3073
    %v3087 = vsel %vm1518, %v3044, %v3073
    %v3089 = vrot.slane %v3087, 1
    %v3090 = vsel %vm1522, %v3044, %v3073
    %v3092 = vrot.slane %v3090, 2
    %v3093 = vsel %vm1526, %v3044, %v3073
    %v3095 = vrot.slane %v3093, 3
    %v3098 = vsel %vm1513, %v3045, %v3074
    %v3100 = vsel %vm1518, %v3045, %v3074
    %v3102 = vrot.slane %v3100, 1
    %v3103 = vsel %vm1522, %v3045, %v3074
    %v3105 = vrot.slane %v3103, 2
    %v3106 = vsel %vm1526, %v3045, %v3074
    %v3108 = vrot.slane %v3106, 3
    %v3111 = vsel %vm1513, %v3046, %v3075
    %v3113 = vsel %vm1518, %v3046, %v3075
    %v3115 = vrot.slane %v3113, 1
    %v3116 = vsel %vm1522, %v3046, %v3075
    %v3118 = vrot.slane %v3116, 2
    %v3119 = vsel %vm1526, %v3046, %v3075
    %v3121 = vrot.slane %v3119, 3
    %v3124 = vsel %vm1513, %v3047, %v3076
    %v3126 = vsel %vm1518, %v3047, %v3076
    %v3128 = vrot.slane %v3126, 1
    %v3129 = vsel %vm1522, %v3047, %v3076
    %v3131 = vrot.slane %v3129, 2
    %v3132 = vsel %vm1526, %v3047, %v3076
    %v3134 = vrot.slane %v3132, 3
    %v3137 = vsel %vm1513, %v3048, %v3077
    %v3139 = vsel %vm1518, %v3048, %v3077
    %v3141 = vrot.slane %v3139, 1
    %v3144 = vsel %vm1513, %v3049, %v3078
    %v3146 = vsel %vm1518, %v3049, %v3078
    %v3148 = vrot.slane %v3146, 1
    %v3149 = vsel %vm1522, %v3049, %v3078
    %v3151 = vrot.slane %v3149, 2
    %v3152 = vsel %vm1526, %v3049, %v3078
    %v3154 = vrot.slane %v3152, 3
    %v3157 = vsel %vm1513, %v3050, %v3079
    %v3159 = vsel %vm1518, %v3050, %v3079
    %v3161 = vrot.slane %v3159, 1
    %v3162 = vsel %vm1522, %v3050, %v3079
    %v3164 = vrot.slane %v3162, 2
    %v3165 = vsel %vm1526, %v3050, %v3079
    %v3167 = vrot.slane %v3165, 3
    %v3170 = vsel %vm1513, %v3051, %v3080
    %v3172 = vsel %vm1518, %v3051, %v3080
    %v3174 = vrot.slane %v3172, 1
    %v3175 = vsel %vm1522, %v3051, %v3080
    %v3177 = vrot.slane %v3175, 2
    %v3178 = vsel %vm1526, %v3051, %v3080
    %v3180 = vrot.slane %v3178, 3
    %v3183 = vsel %vm1513, %v3052, %v3081
    %v3185 = vsel %vm1518, %v3052, %v3081
    %v3187 = vrot.slane %v3185, 1
    %v3188 = vsel %vm1522, %v3052, %v3081
    %v3190 = vrot.slane %v3188, 2
    %v3191 = vsel %vm1526, %v3052, %v3081
    %v3193 = vrot.slane %v3191, 3
    %v3196 = vsel %vm1513, %v3053, %v3082
    %v3198 = vsel %vm1518, %v3053, %v3082
    %v3200 = vrot.slane %v3198, 1
    %v3201 = vunpack.i.l.s16 %v3085
    %v3202 = vunpack.i.h.s16 %v3085
    %v3203 = vunpack.i.l.s16 %v3089
    %v3204 = vunpack.i.h.s16 %v3089
    %v3205 = vunpack.i.l.s16 %v3092
    %v3206 = vunpack.i.h.s16 %v3092
    %v3207 = vunpack.i.l.s16 %v3095
    %v3208 = vunpack.i.h.s16 %v3095
    %v3209 = vunpack.i.l.s16 %v3098
    %v3210 = vunpack.i.h.s16 %v3098
    %v3211 = vunpack.i.l.s16 %v3102
    %v3212 = vunpack.i.h.s16 %v3102
    %v3213 = vunpack.i.l.s16 %v3105
    %v3214 = vunpack.i.h.s16 %v3105
    %v3215 = vunpack.i.l.s16 %v3108
    %v3216 = vunpack.i.h.s16 %v3108
    %v3217 = vunpack.i.l.s16 %v3111
    %v3218 = vunpack.i.h.s16 %v3111
    %v3219 = vunpack.i.l.s16 %v3115
    %v3220 = vunpack.i.h.s16 %v3115
    %v3221 = vunpack.i.l.s16 %v3118
    %v3222 = vunpack.i.h.s16 %v3118
    %v3223 = vunpack.i.l.s16 %v3121
    %v3224 = vunpack.i.h.s16 %v3121
    %v3225 = vunpack.i.l.s16 %v3124
    %v3226 = vunpack.i.h.s16 %v3124
    %v3227 = vunpack.i.l.s16 %v3128
    %v3228 = vunpack.i.h.s16 %v3128
    %v3229 = vunpack.i.l.s16 %v3131
    %v3230 = vunpack.i.h.s16 %v3131
    %v3231 = vunpack.i.l.s16 %v3134
    %v3232 = vunpack.i.h.s16 %v3134
    %v3233 = vunpack.i.l.s16 %v3137
    %v3234 = vunpack.i.h.s16 %v3137
    %v3235 = vunpack.i.l.s16 %v3141
    %v3236 = vunpack.i.l.s16 %v3144
    %v3237 = vunpack.i.h.s16 %v3144
    %v3238 = vunpack.i.l.s16 %v3148
    %v3239 = vunpack.i.h.s16 %v3148
    %v3240 = vunpack.i.l.s16 %v3151
    %v3241 = vunpack.i.h.s16 %v3151
    %v3242 = vunpack.i.l.s16 %v3154
    %v3243 = vunpack.i.h.s16 %v3154
    %v3244 = vunpack.i.l.s16 %v3157
    %v3245 = vunpack.i.h.s16 %v3157
    %v3246 = vunpack.i.l.s16 %v3161
    %v3247 = vunpack.i.h.s16 %v3161
    %v3248 = vunpack.i.l.s16 %v3164
    %v3249 = vunpack.i.h.s16 %v3164
    %v3250 = vunpack.i.l.s16 %v3167
    %v3251 = vunpack.i.h.s16 %v3167
    %v3252 = vunpack.i.l.s16 %v3170
    %v3253 = vunpack.i.h.s16 %v3170
    %v3254 = vunpack.i.l.s16 %v3174
    %v3255 = vunpack.i.h.s16 %v3174
    %v3256 = vunpack.i.l.s16 %v3177
    %v3257 = vunpack.i.h.s16 %v3177
    %v3258 = vunpack.i.l.s16 %v3180
    %v3259 = vunpack.i.h.s16 %v3180
    %v3260 = vunpack.i.l.s16 %v3183
    %v3261 = vunpack.i.h.s16 %v3183
    %v3262 = vunpack.i.l.s16 %v3187
    %v3263 = vunpack.i.h.s16 %v3187
    %v3264 = vunpack.i.l.s16 %v3190
    %v3265 = vunpack.i.h.s16 %v3190
    %v3266 = vunpack.i.l.s16 %v3193
    %v3267 = vunpack.i.h.s16 %v3193
    %v3268 = vunpack.i.l.s16 %v3196
    %v3269 = vunpack.i.h.s16 %v3196
    %v3270 = vunpack.i.l.s16 %v3200
    %v3271 = vpack.i.b16 %v3202, %v3201
    %v3272 = vpack.i.b16 %v3204, %v3203
    %v3273 = vpack.i.b16 %v3206, %v3205
    %v3274 = vpack.i.b16 %v3208, %v3207
    %v3275 = vpack.i.b16 %v3210, %v3209
    %v3276 = vpack.i.b16 %v3212, %v3211
    %v3277 = vpack.i.b16 %v3214, %v3213
    %v3278 = vpack.i.b16 %v3216, %v3215
    %v3279 = vpack.i.b16 %v3218, %v3217
    %v3280 = vpack.i.b16 %v3220, %v3219
    %v3281 = vpack.i.b16 %v3222, %v3221
    %v3282 = vpack.i.b16 %v3224, %v3223
    %v3283 = vpack.i.b16 %v3226, %v3225
    %v3284 = vpack.i.b16 %v3228, %v3227
    %v3285 = vpack.i.b16 %v3230, %v3229
    %v3286 = vpack.i.b16 %v3232, %v3231
    %v3287 = vpack.i.b16 %v3234, %v3233
    %v3288 = vpack.i.b16 %v3236, %v3235
    %v3289 = vpack.i.b16 %v3238, %v3237
    %v3290 = vpack.i.b16 %v3240, %v3239
    %v3291 = vpack.i.b16 %v3242, %v3241
    %v3292 = vpack.i.b16 %v3244, %v3243
    %v3293 = vpack.i.b16 %v3246, %v3245
    %v3294 = vpack.i.b16 %v3248, %v3247
    %v3295 = vpack.i.b16 %v3250, %v3249
    %v3296 = vpack.i.b16 %v3252, %v3251
    %v3297 = vpack.i.b16 %v3254, %v3253
    %v3298 = vpack.i.b16 %v3256, %v3255
    %v3299 = vpack.i.b16 %v3258, %v3257
    %v3300 = vpack.i.b16 %v3260, %v3259
    %v3301 = vpack.i.b16 %v3262, %v3261
    %v3302 = vpack.i.b16 %v3264, %v3263
    %v3303 = vpack.i.b16 %v3266, %v3265
    %v3304 = vpack.i.b16 %v3268, %v3267
    %v3305 = vpack.i.b16 %v3270, %v3269
    %3307 = vst [vmem:[#allocation1] ss:$9 sm:$0xff] %v3271
    %s3309 = scalar_lea.vmem [#allocation1], 1
    %3310 = vst [vmem:[%s3309] ss:$9 sm:$0xff] %v3272
    %s3312 = scalar_lea.vmem [#allocation1], 2
    %3313 = vst [vmem:[%s3312] ss:$9 sm:$0xff] %v3273
    %s3315 = scalar_lea.vmem [#allocation1], 3
    %3316 = vst [vmem:[%s3315] ss:$9 sm:$0xff] %v3274
    %s3318 = scalar_lea.vmem [#allocation1], 4
    %3319 = vst [vmem:[%s3318] ss:$9 sm:$0xff] %v3275
    %s3321 = scalar_lea.vmem [#allocation1], 5
    %3322 = vst [vmem:[%s3321] ss:$9 sm:$0xff] %v3276
    %s3324 = scalar_lea.vmem [#allocation1], 6
    %3325 = vst [vmem:[%s3324] ss:$9 sm:$0xff] %v3277
    %s3327 = scalar_lea.vmem [#allocation1], 7
    %3328 = vst [vmem:[%s3327] ss:$9 sm:$0xff] %v3278
    %v3329 = vld [vmem:[#allocation1] sm:$0xff]
    %3331 = vst [vmem:[#allocation1] ss:$9 sm:$0xff] %v3279
    %3333 = vst [vmem:[%s3309] ss:$9 sm:$0xff] %v3280
    %3335 = vst [vmem:[%s3312] ss:$9 sm:$0xff] %v3281
    %3337 = vst [vmem:[%s3315] ss:$9 sm:$0xff] %v3282
    %3339 = vst [vmem:[%s3318] ss:$9 sm:$0xff] %v3283
    %3341 = vst [vmem:[%s3321] ss:$9 sm:$0xff] %v3284
    %3343 = vst [vmem:[%s3324] ss:$9 sm:$0xff] %v3285
    %3345 = vst [vmem:[%s3327] ss:$9 sm:$0xff] %v3286
    %v3346 = vld [vmem:[#allocation1] sm:$0xff]
    %3348 = vst [vmem:[#allocation1] ss:$9 sm:$0xff] %v3287
    %3350 = vst [vmem:[%s3309] ss:$9 sm:$0xff] %v3288
    %3352 = vst [vmem:[%s3312] ss:$9 sm:$0xff] %v3289
    %3354 = vst [vmem:[%s3315] ss:$9 sm:$0xff] %v3290
    %3356 = vst [vmem:[%s3318] ss:$9 sm:$0xff] %v3291
    %3358 = vst [vmem:[%s3321] ss:$9 sm:$0xff] %v3292
    %3360 = vst [vmem:[%s3324] ss:$9 sm:$0xff] %v3293
    %3362 = vst [vmem:[%s3327] ss:$9 sm:$0xff] %v3294
    %v3363 = vld [vmem:[#allocation1] sm:$0xff]
    %3365 = vst [vmem:[#allocation1] ss:$9 sm:$0xff] %v3295
    %3367 = vst [vmem:[%s3309] ss:$9 sm:$0xff] %v3296
    %3369 = vst [vmem:[%s3312] ss:$9 sm:$0xff] %v3297
    %3371 = vst [vmem:[%s3315] ss:$9 sm:$0xff] %v3298
    %3373 = vst [vmem:[%s3318] ss:$9 sm:$0xff] %v3299
    %3375 = vst [vmem:[%s3321] ss:$9 sm:$0xff] %v3300
    %3377 = vst [vmem:[%s3324] ss:$9 sm:$0xff] %v3301
    %3379 = vst [vmem:[%s3327] ss:$9 sm:$0xff] %v3302
    %v3380 = vld [vmem:[#allocation1] sm:$0xff]
    %3382 = vst [vmem:[#allocation1] ss:$9 sm:$0xff] %v3303
    %3384 = vst [vmem:[%s3309] ss:$9 sm:$0xff] %v3304
    %3386 = vst [vmem:[%s3312] ss:$9 sm:$0xff] %v3305
    %v3387 = vld [vmem:[#allocation1] sm:$0xff]
    %v3396 = vunpack.c.l.b16 %v3055
    %v3397 = vunpack.c.l.b16 %v3056
    %v3398 = vunpack.c.l.b16 %v3057
    %v3399 = vunpack.c.l.b16 %v3058
    %v3400 = vunpack.c.l.b16 %v3059
    %v3401 = vunpack.c.l.b16 %v3060
    %v3402 = vunpack.c.l.b16 %v3061
    %v3403 = vunpack.c.l.b16 %v3062
    %v3404 = vpack.c.b16 %v3397, %v3396
    %v3405 = vpack.c.b16 %v3399, %v3398
    %v3406 = vpack.c.b16 %v3401, %v3400
    %v3407 = vpack.c.b16 %v3403, %v3402
    %v3412 = vsel %vm1184, %v3329, 0
    %v3414 = vsel %vm1184, %v3346, 0
    %v3416 = vsel %vm1184, %v3363, 0
    %v3418 = vsel %vm1184, %v3380, 0
    %v3420 = vsel %vm1184, %v3387, 0
    %3422 = vmatpush.bf16.msra.mxu0 0
    %3423 = vmatpush.bf16.msra.mxu0 0
    %3424 = vmatpush.bf16.msra.mxu0 0
    %3425 = vmatpush.bf16.msra.mxu0 0
    %3426 = vmatpush.bf16.msra.mxu0 %v3407
    %3427 = vmatpush.bf16.msra.mxu0 %v3406
    %3428 = vmatpush.bf16.msra.mxu0 %v3405
    %3429 = vmatpush.bf16.msra.mxu0 %v3404
    %3430 = vmatmul.bf16.gmra.mxu0 %v3412
    %v3431 = vpop.f32.mrf.mxu0
    %v3432 = vadd.f32 0.0, %v3431
    %v3433 = vpop.f32.mrf.mxu0
    %v3434 = vadd.f32 0.0, %v3433
    %3435 = vmatmul.bf16.gmra.mxu0 %v3414
    %v3436 = vpop.f32.mrf.mxu0
    %v3437 = vadd.f32 0.0, %v3436
    %v3438 = vpop.f32.mrf.mxu0
    %v3439 = vadd.f32 0.0, %v3438
    %3440 = vmatmul.bf16.gmra.mxu0 %v3416
    %v3441 = vpop.f32.mrf.mxu0
    %v3442 = vadd.f32 0.0, %v3441
    %v3443 = vpop.f32.mrf.mxu0
    %v3444 = vadd.f32 0.0, %v3443
    %3445 = vmatmul.bf16.gmra.mxu0 %v3418
    %v3446 = vpop.f32.mrf.mxu0
    %v3447 = vadd.f32 0.0, %v3446
    %v3448 = vpop.f32.mrf.mxu0
    %v3449 = vadd.f32 0.0, %v3448
    %3450 = vmatmul.bf16.gmra.mxu0 %v3420
    %v3451 = vpop.f32.mrf.mxu0
    %v3452 = vadd.f32 0.0, %v3451
    %v3453 = vpop.f32.mrf.mxu0
    %3454 = vdwg.mxu0
    %v3464 = vrot.slane %v3432, 1
    %v3465 = vrot.slane %v3432, 2
    %v3466 = vrot.slane %v3432, 3
    %v3467 = vrot.slane %v3432, 4
    %v3468 = vrot.slane %v3432, 5
    %v3469 = vrot.slane %v3432, 6
    %v3470 = vrot.slane %v3432, 7
    %v3471 = vrot.slane %v3434, 1
    %v3472 = vrot.slane %v3434, 2
    %v3473 = vrot.slane %v3434, 3
    %v3474 = vrot.slane %v3434, 4
    %v3475 = vrot.slane %v3434, 5
    %v3476 = vrot.slane %v3434, 6
    %v3477 = vrot.slane %v3434, 7
    %v3478 = vrot.slane %v3437, 1
    %v3479 = vrot.slane %v3437, 2
    %v3480 = vrot.slane %v3437, 3
    %v3481 = vrot.slane %v3437, 4
    %v3482 = vrot.slane %v3437, 5
    %v3483 = vrot.slane %v3437, 6
    %v3484 = vrot.slane %v3437, 7
    %v3485 = vrot.slane %v3439, 1
    %v3486 = vrot.slane %v3439, 2
    %v3487 = vrot.slane %v3439, 3
    %v3488 = vrot.slane %v3439, 4
    %v3489 = vrot.slane %v3439, 5
    %v3490 = vrot.slane %v3439, 6
    %v3491 = vrot.slane %v3439, 7
    %v3492 = vrot.slane %v3442, 1
    %v3493 = vrot.slane %v3442, 2
    %v3494 = vrot.slane %v3442, 3
    %v3495 = vrot.slane %v3442, 4
    %v3496 = vrot.slane %v3442, 5
    %v3497 = vrot.slane %v3442, 6
    %v3498 = vrot.slane %v3442, 7
    %v3499 = vrot.slane %v3444, 1
    %v3500 = vrot.slane %v3444, 2
    %v3501 = vrot.slane %v3444, 3
    %v3502 = vrot.slane %v3444, 4
    %v3503 = vrot.slane %v3444, 5
    %v3504 = vrot.slane %v3444, 6
    %v3505 = vrot.slane %v3444, 7
    %v3506 = vrot.slane %v3447, 1
    %v3507 = vrot.slane %v3447, 2
    %v3508 = vrot.slane %v3447, 3
    %v3509 = vrot.slane %v3447, 4
    %v3510 = vrot.slane %v3447, 5
    %v3511 = vrot.slane %v3447, 6
    %v3512 = vrot.slane %v3447, 7
    %v3513 = vrot.slane %v3449, 1
    %v3514 = vrot.slane %v3449, 2
    %v3515 = vrot.slane %v3449, 3
    %v3516 = vrot.slane %v3449, 4
    %v3517 = vrot.slane %v3449, 5
    %v3518 = vrot.slane %v3449, 6
    %v3519 = vrot.slane %v3449, 7
    %v3520 = vrot.slane %v3452, 1
    %v3521 = vrot.slane %v3452, 2
    %v3522 = vrot.slane %v3452, 3
    %v3523 = vrot.slane %v3452, 4
    %v3524 = vrot.slane %v3452, 5
    %v3586 = vadd.f32 %v2964, %v3432
    %v3587 = vadd.f32 %v2965, %v3464
    %v3588 = vadd.f32 %v2966, %v3465
    %v3589 = vadd.f32 %v2967, %v3466
    %v3590 = vadd.f32 %v2968, %v3467
    %v3591 = vadd.f32 %v2969, %v3468
    %v3592 = vadd.f32 %v2970, %v3469
    %v3593 = vadd.f32 %v2971, %v3470
    %v3594 = vadd.f32 %v2972, %v3434
    %v3595 = vadd.f32 %v2973, %v3471
    %v3596 = vadd.f32 %v2974, %v3472
    %v3597 = vadd.f32 %v2975, %v3473
    %v3598 = vadd.f32 %v2976, %v3474
    %v3599 = vadd.f32 %v2977, %v3475
    %v3600 = vadd.f32 %v2978, %v3476
    %v3601 = vadd.f32 %v2979, %v3477
    %v3602 = vadd.f32 %v2980, %v3437
    %v3603 = vadd.f32 %v2981, %v3478
    %v3604 = vadd.f32 %v2982, %v3479
    %v3605 = vadd.f32 %v2983, %v3480
    %v3606 = vadd.f32 %v2984, %v3481
    %v3607 = vadd.f32 %v2985, %v3482
    %v3608 = vadd.f32 %v2986, %v3483
    %v3609 = vadd.f32 %v2987, %v3484
    %v3610 = vadd.f32 %v2988, %v3439
    %v3611 = vadd.f32 %v2989, %v3485
    %v3612 = vadd.f32 %v2990, %v3486
    %v3613 = vadd.f32 %v2991, %v3487
    %v3614 = vadd.f32 %v2992, %v3488
    %v3615 = vadd.f32 %v2993, %v3489
    %v3616 = vadd.f32 %v2994, %v3490
    %v3617 = vadd.f32 %v2995, %v3491
    %v3618 = vadd.f32 %v2996, %v3442
    %v3619 = vadd.f32 %v2997, %v3492
    %v3620 = vadd.f32 %v2998, %v3493
    %v3621 = vadd.f32 %v2999, %v3494
    %v3622 = vadd.f32 %v3000, %v3495
    %v3623 = vadd.f32 %v3001, %v3496
    %v3624 = vadd.f32 %v3002, %v3497
    %v3625 = vadd.f32 %v3003, %v3498
    %v3626 = vadd.f32 %v3004, %v3444
    %v3627 = vadd.f32 %v3005, %v3499
    %v3628 = vadd.f32 %v3006, %v3500
    %v3629 = vadd.f32 %v3007, %v3501
    %v3630 = vadd.f32 %v3008, %v3502
    %v3631 = vadd.f32 %v3009, %v3503
    %v3632 = vadd.f32 %v3010, %v3504
    %v3633 = vadd.f32 %v3011, %v3505
    %v3634 = vadd.f32 %v3012, %v3447
    %v3635 = vadd.f32 %v3013, %v3506
    %v3636 = vadd.f32 %v3014, %v3507
    %v3637 = vadd.f32 %v3015, %v3508
    %v3638 = vadd.f32 %v3016, %v3509
    %v3639 = vadd.f32 %v3017, %v3510
    %v3640 = vadd.f32 %v3018, %v3511
    %v3641 = vadd.f32 %v3019, %v3512
    %v3642 = vadd.f32 %v3020, %v3449
    %v3643 = vadd.f32 %v3021, %v3513
    %v3644 = vadd.f32 %v3022, %v3514
    %v3645 = vadd.f32 %v3023, %v3515
    %v3646 = vadd.f32 %v3024, %v3516
    %v3647 = vadd.f32 %v3025, %v3517
    %v3648 = vadd.f32 %v3026, %v3518
    %v3649 = vadd.f32 %v3027, %v3519
    %v3650 = vadd.f32 %v3028, %v3452
    %v3651 = vadd.f32 %v3029, %v3520
    %v3652 = vadd.f32 %v3030, %v3521
    %v3653 = vadd.f32 %v3031, %v3522
    %v3654 = vadd.f32 %v3032, %v3523
    %v3655 = vadd.f32 %v3033, %v3524
    %v3656 = vld [vmem:[%s6] sm:$0x1]
    %v3658 = vperm.slane %v3656, 0
    %v3660 = vrot.slane %v3658, 1
    %v3661 = vrot.slane %v3658, 2
    %v3662 = vrot.slane %v3658, 3
    %v3663 = vrot.slane %v3658, 4
    %v3664 = vrot.slane %v3658, 5
    %v3665 = vrot.slane %v3658, 6
    %v3666 = vrot.slane %v3658, 7
    %v3674 = vadd.f32 %v3586, %v3658
    %v3675 = vadd.f32 %v3587, %v3660
    %v3676 = vadd.f32 %v3588, %v3661
    %v3677 = vadd.f32 %v3589, %v3662
    %v3678 = vadd.f32 %v3590, %v3663
    %v3679 = vadd.f32 %v3591, %v3664
    %v3680 = vadd.f32 %v3592, %v3665
    %v3681 = vadd.f32 %v3593, %v3666
    %v3682 = vadd.f32 %v3594, %v3658
    %v3683 = vadd.f32 %v3595, %v3660
    %v3684 = vadd.f32 %v3596, %v3661
    %v3685 = vadd.f32 %v3597, %v3662
    %v3686 = vadd.f32 %v3598, %v3663
    %v3687 = vadd.f32 %v3599, %v3664
    %v3688 = vadd.f32 %v3600, %v3665
    %v3689 = vadd.f32 %v3601, %v3666
    %v3690 = vadd.f32 %v3602, %v3658
    %v3691 = vadd.f32 %v3603, %v3660
    %v3692 = vadd.f32 %v3604, %v3661
    %v3693 = vadd.f32 %v3605, %v3662
    %v3694 = vadd.f32 %v3606, %v3663
    %v3695 = vadd.f32 %v3607, %v3664
    %v3696 = vadd.f32 %v3608, %v3665
    %v3697 = vadd.f32 %v3609, %v3666
    %v3698 = vadd.f32 %v3610, %v3658
    %v3699 = vadd.f32 %v3611, %v3660
    %v3700 = vadd.f32 %v3612, %v3661
    %v3701 = vadd.f32 %v3613, %v3662
    %v3702 = vadd.f32 %v3614, %v3663
    %v3703 = vadd.f32 %v3615, %v3664
    %v3704 = vadd.f32 %v3616, %v3665
    %v3705 = vadd.f32 %v3617, %v3666
    %v3706 = vadd.f32 %v3618, %v3658
    %v3707 = vadd.f32 %v3619, %v3660
    %v3708 = vadd.f32 %v3620, %v3661
    %v3709 = vadd.f32 %v3621, %v3658
    %v3710 = vadd.f32 %v3622, %v3660
    %v3711 = vadd.f32 %v3623, %v3661
    %v3712 = vadd.f32 %v3624, %v3662
    %v3713 = vadd.f32 %v3625, %v3663
    %v3714 = vadd.f32 %v3626, %v3664
    %v3715 = vadd.f32 %v3627, %v3665
    %v3716 = vadd.f32 %v3628, %v3666
    %v3717 = vadd.f32 %v3629, %v3658
    %v3718 = vadd.f32 %v3630, %v3660
    %v3719 = vadd.f32 %v3631, %v3661
    %v3720 = vadd.f32 %v3632, %v3662
    %v3721 = vadd.f32 %v3633, %v3663
    %v3722 = vadd.f32 %v3634, %v3664
    %v3723 = vadd.f32 %v3635, %v3665
    %v3724 = vadd.f32 %v3636, %v3666
    %v3725 = vadd.f32 %v3637, %v3658
    %v3726 = vadd.f32 %v3638, %v3660
    %v3727 = vadd.f32 %v3639, %v3661
    %v3728 = vadd.f32 %v3640, %v3662
    %v3729 = vadd.f32 %v3641, %v3663
    %v3730 = vadd.f32 %v3642, %v3664
    %v3731 = vadd.f32 %v3643, %v3665
    %v3732 = vadd.f32 %v3644, %v3666
    %v3733 = vadd.f32 %v3645, %v3658
    %v3734 = vadd.f32 %v3646, %v3660
    %v3735 = vadd.f32 %v3647, %v3661
    %v3736 = vadd.f32 %v3648, %v3662
    %v3737 = vadd.f32 %v3649, %v3663
    %v3738 = vadd.f32 %v3650, %v3664
    %v3739 = vadd.f32 %v3651, %v3665
    %v3740 = vadd.f32 %v3652, %v3666
    %v3741 = vadd.f32 %v3653, %v3658
    %v3742 = vadd.f32 %v3654, %v3660
    %v3743 = vadd.f32 %v3655, %v3661
    %v3744 = vmax.f32 %v3674, 0.0
    %v3745 = vmax.f32 %v3675, 0.0
    %v3746 = vmax.f32 %v3676, 0.0
    %v3747 = vmax.f32 %v3677, 0.0
    %v3748 = vmax.f32 %v3678, 0.0
    %v3749 = vmax.f32 %v3679, 0.0
    %v3750 = vmax.f32 %v3680, 0.0
    %v3751 = vmax.f32 %v3681, 0.0
    %v3752 = vmax.f32 %v3682, 0.0
    %v3753 = vmax.f32 %v3683, 0.0
    %v3754 = vmax.f32 %v3684, 0.0
    %v3755 = vmax.f32 %v3685, 0.0
    %v3756 = vmax.f32 %v3686, 0.0
    %v3757 = vmax.f32 %v3687, 0.0
    %v3758 = vmax.f32 %v3688, 0.0
    %v3759 = vmax.f32 %v3689, 0.0
    %v3760 = vmax.f32 %v3690, 0.0
    %v3761 = vmax.f32 %v3691, 0.0
    %v3762 = vmax.f32 %v3692, 0.0
    %v3763 = vmax.f32 %v3693, 0.0
    %v3764 = vmax.f32 %v3694, 0.0
    %v3765 = vmax.f32 %v3695, 0.0
    %v3766 = vmax.f32 %v3696, 0.0
    %v3767 = vmax.f32 %v3697, 0.0
    %v3768 = vmax.f32 %v3698, 0.0
    %v3769 = vmax.f32 %v3699, 0.0
    %v3770 = vmax.f32 %v3700, 0.0
    %v3771 = vmax.f32 %v3701, 0.0
    %v3772 = vmax.f32 %v3702, 0.0
    %v3773 = vmax.f32 %v3703, 0.0
    %v3774 = vmax.f32 %v3704, 0.0
    %v3775 = vmax.f32 %v3705, 0.0
    %v3776 = vmax.f32 %v3706, 0.0
    %v3777 = vmax.f32 %v3707, 0.0
    %v3778 = vmax.f32 %v3708, 0.0
    %v3779 = vmax.f32 %v3709, 0.0
    %v3780 = vmax.f32 %v3710, 0.0
    %v3781 = vmax.f32 %v3711, 0.0
    %v3782 = vmax.f32 %v3712, 0.0
    %v3783 = vmax.f32 %v3713, 0.0
    %v3784 = vmax.f32 %v3714, 0.0
    %v3785 = vmax.f32 %v3715, 0.0
    %v3786 = vmax.f32 %v3716, 0.0
    %v3787 = vmax.f32 %v3717, 0.0
    %v3788 = vmax.f32 %v3718, 0.0
    %v3789 = vmax.f32 %v3719, 0.0
    %v3790 = vmax.f32 %v3720, 0.0
    %v3791 = vmax.f32 %v3721, 0.0
    %v3792 = vmax.f32 %v3722, 0.0
    %v3793 = vmax.f32 %v3723, 0.0
    %v3794 = vmax.f32 %v3724, 0.0
    %v3795 = vmax.f32 %v3725, 0.0
    %v3796 = vmax.f32 %v3726, 0.0
    %v3797 = vmax.f32 %v3727, 0.0
    %v3798 = vmax.f32 %v3728, 0.0
    %v3799 = vmax.f32 %v3729, 0.0
    %v3800 = vmax.f32 %v3730, 0.0
    %v3801 = vmax.f32 %v3731, 0.0
    %v3802 = vmax.f32 %v3732, 0.0
    %v3803 = vmax.f32 %v3733, 0.0
    %v3804 = vmax.f32 %v3734, 0.0
    %v3805 = vmax.f32 %v3735, 0.0
    %v3806 = vmax.f32 %v3736, 0.0
    %v3807 = vmax.f32 %v3737, 0.0
    %v3808 = vmax.f32 %v3738, 0.0
    %v3809 = vmax.f32 %v3739, 0.0
    %v3810 = vmax.f32 %v3740, 0.0
    %v3811 = vmax.f32 %v3741, 0.0
    %v3812 = vmax.f32 %v3742, 0.0
    %v3813 = vmax.f32 %v3743, 0.0
    %3884 = vst [vmem:[#allocation1] ss:$9 sm:$0xff] %v3744
    %s3885 = scalar_lea.vmem [#allocation1], 1
    %3886 = vst [vmem:[%s3885] ss:$9 sm:$0xff] %v3745
    %s3887 = scalar_lea.vmem [#allocation1], 2
    %3888 = vst [vmem:[%s3887] ss:$9 sm:$0xff] %v3746
    %s3889 = scalar_lea.vmem [#allocation1], 3
    %3890 = vst [vmem:[%s3889] ss:$9 sm:$0xff] %v3747
    %s3891 = scalar_lea.vmem [#allocation1], 4
    %3892 = vst [vmem:[%s3891] ss:$9 sm:$0xff] %v3748
    %s3893 = scalar_lea.vmem [#allocation1], 5
    %3894 = vst [vmem:[%s3893] ss:$9 sm:$0xff] %v3749
    %s3895 = scalar_lea.vmem [#allocation1], 6
    %3896 = vst [vmem:[%s3895] ss:$9 sm:$0xff] %v3750
    %s3897 = scalar_lea.vmem [#allocation1], 7
    %3898 = vst [vmem:[%s3897] ss:$9 sm:$0xff] %v3751
    %v3899 = vld [vmem:[#allocation1] sm:$0xff]
    %3900 = vst [vmem:[#allocation1] ss:$9 sm:$0xff] %v3752
    %3901 = vst [vmem:[%s3885] ss:$9 sm:$0xff] %v3753
    %3902 = vst [vmem:[%s3887] ss:$9 sm:$0xff] %v3754
    %3903 = vst [vmem:[%s3889] ss:$9 sm:$0xff] %v3755
    %3904 = vst [vmem:[%s3891] ss:$9 sm:$0xff] %v3756
    %3905 = vst [vmem:[%s3893] ss:$9 sm:$0xff] %v3757
    %3906 = vst [vmem:[%s3895] ss:$9 sm:$0xff] %v3758
    %3907 = vst [vmem:[%s3897] ss:$9 sm:$0xff] %v3759
    %v3908 = vld [vmem:[#allocation1] sm:$0xff]
    %3909 = vst [vmem:[#allocation1] ss:$9 sm:$0xff] %v3760
    %3910 = vst [vmem:[%s3885] ss:$9 sm:$0xff] %v3761
    %3911 = vst [vmem:[%s3887] ss:$9 sm:$0xff] %v3762
    %3912 = vst [vmem:[%s3889] ss:$9 sm:$0xff] %v3763
    %3913 = vst [vmem:[%s3891] ss:$9 sm:$0xff] %v3764
    %3914 = vst [vmem:[%s3893] ss:$9 sm:$0xff] %v3765
    %3915 = vst [vmem:[%s3895] ss:$9 sm:$0xff] %v3766
    %3916 = vst [vmem:[%s3897] ss:$9 sm:$0xff] %v3767
    %v3917 = vld [vmem:[#allocation1] sm:$0xff]
    %3918 = vst [vmem:[#allocation1] ss:$9 sm:$0xff] %v3768
    %3919 = vst [vmem:[%s3885] ss:$9 sm:$0xff] %v3769
    %3920 = vst [vmem:[%s3887] ss:$9 sm:$0xff] %v3770
    %3921 = vst [vmem:[%s3889] ss:$9 sm:$0xff] %v3771
    %3922 = vst [vmem:[%s3891] ss:$9 sm:$0xff] %v3772
    %3923 = vst [vmem:[%s3893] ss:$9 sm:$0xff] %v3773
    %3924 = vst [vmem:[%s3895] ss:$9 sm:$0xff] %v3774
    %3925 = vst [vmem:[%s3897] ss:$9 sm:$0xff] %v3775
    %v3926 = vld [vmem:[#allocation1] sm:$0xff]
    %3927 = vst [vmem:[#allocation1] ss:$9 sm:$0xff] %v3776
    %3928 = vst [vmem:[%s3885] ss:$9 sm:$0xff] %v3777
    %3929 = vst [vmem:[%s3887] ss:$9 sm:$0xff] %v3778
    %v3930 = vld [vmem:[#allocation1] sm:$0xff]
    %3931 = vst [vmem:[#allocation1] ss:$9 sm:$0xff] %v3779
    %3932 = vst [vmem:[%s3885] ss:$9 sm:$0xff] %v3780
    %3933 = vst [vmem:[%s3887] ss:$9 sm:$0xff] %v3781
    %3934 = vst [vmem:[%s3889] ss:$9 sm:$0xff] %v3782
    %3935 = vst [vmem:[%s3891] ss:$9 sm:$0xff] %v3783
    %3936 = vst [vmem:[%s3893] ss:$9 sm:$0xff] %v3784
    %3937 = vst [vmem:[%s3895] ss:$9 sm:$0xff] %v3785
    %3938 = vst [vmem:[%s3897] ss:$9 sm:$0xff] %v3786
    %v3939 = vld [vmem:[#allocation1] sm:$0xff]
    %3940 = vst [vmem:[#allocation1] ss:$9 sm:$0xff] %v3787
    %3941 = vst [vmem:[%s3885] ss:$9 sm:$0xff] %v3788
    %3942 = vst [vmem:[%s3887] ss:$9 sm:$0xff] %v3789
    %3943 = vst [vmem:[%s3889] ss:$9 sm:$0xff] %v3790
    %3944 = vst [vmem:[%s3891] ss:$9 sm:$0xff] %v3791
    %3945 = vst [vmem:[%s3893] ss:$9 sm:$0xff] %v3792
    %3946 = vst [vmem:[%s3895] ss:$9 sm:$0xff] %v3793
    %3947 = vst [vmem:[%s3897] ss:$9 sm:$0xff] %v3794
    %v3948 = vld [vmem:[#allocation1] sm:$0xff]
    %3949 = vst [vmem:[#allocation1] ss:$9 sm:$0xff] %v3795
    %3950 = vst [vmem:[%s3885] ss:$9 sm:$0xff] %v3796
    %3951 = vst [vmem:[%s3887] ss:$9 sm:$0xff] %v3797
    %3952 = vst [vmem:[%s3889] ss:$9 sm:$0xff] %v3798
    %3953 = vst [vmem:[%s3891] ss:$9 sm:$0xff] %v3799
    %3954 = vst [vmem:[%s3893] ss:$9 sm:$0xff] %v3800
    %3955 = vst [vmem:[%s3895] ss:$9 sm:$0xff] %v3801
    %3956 = vst [vmem:[%s3897] ss:$9 sm:$0xff] %v3802
    %v3957 = vld [vmem:[#allocation1] sm:$0xff]
    %3958 = vst [vmem:[#allocation1] ss:$9 sm:$0xff] %v3803
    %3959 = vst [vmem:[%s3885] ss:$9 sm:$0xff] %v3804
    %3960 = vst [vmem:[%s3887] ss:$9 sm:$0xff] %v3805
    %3961 = vst [vmem:[%s3889] ss:$9 sm:$0xff] %v3806
    %3962 = vst [vmem:[%s3891] ss:$9 sm:$0xff] %v3807
    %3963 = vst [vmem:[%s3893] ss:$9 sm:$0xff] %v3808
    %3964 = vst [vmem:[%s3895] ss:$9 sm:$0xff] %v3809
    %3965 = vst [vmem:[%s3897] ss:$9 sm:$0xff] %v3810
    %v3966 = vld [vmem:[#allocation1] sm:$0xff]
    %3967 = vst [vmem:[#allocation1] ss:$9 sm:$0xff] %v3811
    %3968 = vst [vmem:[%s3885] ss:$9 sm:$0xff] %v3812
    %3969 = vst [vmem:[%s3887] ss:$9 sm:$0xff] %v3813
    %v3970 = vld [vmem:[#allocation1] sm:$0xff]
    %v3981 = vsel %vm1184, %v3899, 0.0
    %v3982 = vsel %vm1184, %v3908, 0.0
    %v3983 = vadd.f32 %v3981, %v3982
    %v3984 = vsel %vm1184, %v3917, 0.0
    %v3985 = vadd.f32 %v3983, %v3984
    %v3986 = vsel %vm1184, %v3926, 0.0
    %v3987 = vadd.f32 %v3985, %v3986
    %vm3988 = vcmask 518144
    %v3989 = vsel %vm3988, %v3930, 0.0
    %v3990 = vadd.f32 %v3987, %v3989
    %v3991 = vsel %vm1184, %v3939, 0.0
    %v3992 = vadd.f32 %v3990, %v3991
    %v3993 = vsel %vm1184, %v3948, 0.0
    %v3994 = vadd.f32 %v3992, %v3993
    %v3995 = vsel %vm1184, %v3957, 0.0
    %v3996 = vadd.f32 %v3994, %v3995
    %v3997 = vsel %vm1184, %v3966, 0.0
    %v3998 = vadd.f32 %v3996, %v3997
    %v3999 = vsel %vm3988, %v3970, 0.0
    %v4000 = vadd.f32 %v3998, %v3999
    %v4001 = vrot.slane %v4000, 4
    %v4002 = vadd.f32 %v4000, %v4001
    %v4003 = vrot.slane %v4002, 2
    %v4004 = vadd.f32 %v4002, %v4003
    %v4005 = vrot.slane %v4004, 1
    %v4006 = vadd.f32 %v4004, %v4005
    %vm4007 = vcmask 1048064
    %4008 = vrot.lane.b32.xlu0 %v4006, 64
    %v4009 = vpop.permute.xlu0 %4008
    %v4010 = vsel %vm4007, %v4009, %v4006
    %4011 = vrot.lane.b32.xlu0 %v4010, 64
    %v4012 = vpop.permute.xlu0 %4011
    %v4013 = vsel %vm4007, %v4012, %v4006
    %4015 = vrot.lane.b32.xlu0 %v4013, 96
    %v4016 = vpop.permute.xlu0 %4015
    %v4018 = vadd.f32 %v4006, %v4016
    %v4019 = vrcp.pop 140.0
    %v4020 = vmul.f32 140.0, %v4019
    %v4021 = vsub.f32 1.0, %v4020
    %v4022 = vmul.f32 %v4019, %v4021
    %v4023 = vadd.f32 %v4019, %v4022
    %vm4024 = vweird.f32 %v4019
    %v4025 = vsel %vm4024, %v4019, %v4023
    %v4026 = vmul.f32 %v4018, %v4025
    %v4027 = vperm.slane %v4026, 0
    %v4029 = vrot.slane %v4027, 1
    %v4030 = vrot.slane %v4027, 2
    %v4031 = vrot.slane %v4027, 3
    %v4032 = vrot.slane %v4027, 4
    %v4033 = vrot.slane %v4027, 5
    %v4034 = vrot.slane %v4027, 6
    %v4035 = vrot.slane %v4027, 7
    %v4043 = vsub.f32 %v3744, %v4027
    %v4044 = vsub.f32 %v3745, %v4029
    %v4045 = vsub.f32 %v3746, %v4030
    %v4046 = vsub.f32 %v3747, %v4031
    %v4047 = vsub.f32 %v3748, %v4032
    %v4048 = vsub.f32 %v3749, %v4033
    %v4049 = vsub.f32 %v3750, %v4034
    %v4050 = vsub.f32 %v3751, %v4035
    %v4051 = vsub.f32 %v3752, %v4027
    %v4052 = vsub.f32 %v3753, %v4029
    %v4053 = vsub.f32 %v3754, %v4030
    %v4054 = vsub.f32 %v3755, %v4031
    %v4055 = vsub.f32 %v3756, %v4032
    %v4056 = vsub.f32 %v3757, %v4033
    %v4057 = vsub.f32 %v3758, %v4034
    %v4058 = vsub.f32 %v3759, %v4035
    %v4059 = vsub.f32 %v3760, %v4027
    %v4060 = vsub.f32 %v3761, %v4029
    %v4061 = vsub.f32 %v3762, %v4030
    %v4062 = vsub.f32 %v3763, %v4031
    %v4063 = vsub.f32 %v3764, %v4032
    %v4064 = vsub.f32 %v3765, %v4033
    %v4065 = vsub.f32 %v3766, %v4034
    %v4066 = vsub.f32 %v3767, %v4035
    %v4067 = vsub.f32 %v3768, %v4027
    %v4068 = vsub.f32 %v3769, %v4029
    %v4069 = vsub.f32 %v3770, %v4030
    %v4070 = vsub.f32 %v3771, %v4031
    %v4071 = vsub.f32 %v3772, %v4032
    %v4072 = vsub.f32 %v3773, %v4033
    %v4073 = vsub.f32 %v3774, %v4034
    %v4074 = vsub.f32 %v3775, %v4035
    %v4075 = vsub.f32 %v3776, %v4027
    %v4076 = vsub.f32 %v3777, %v4029
    %v4077 = vsub.f32 %v3778, %v4030
    %v4078 = vsub.f32 %v3779, %v4027
    %v4079 = vsub.f32 %v3780, %v4029
    %v4080 = vsub.f32 %v3781, %v4030
    %v4081 = vsub.f32 %v3782, %v4031
    %v4082 = vsub.f32 %v3783, %v4032
    %v4083 = vsub.f32 %v3784, %v4033
    %v4084 = vsub.f32 %v3785, %v4034
    %v4085 = vsub.f32 %v3786, %v4035
    %v4086 = vsub.f32 %v3787, %v4027
    %v4087 = vsub.f32 %v3788, %v4029
    %v4088 = vsub.f32 %v3789, %v4030
    %v4089 = vsub.f32 %v3790, %v4031
    %v4090 = vsub.f32 %v3791, %v4032
    %v4091 = vsub.f32 %v3792, %v4033
    %v4092 = vsub.f32 %v3793, %v4034
    %v4093 = vsub.f32 %v3794, %v4035
    %v4094 = vsub.f32 %v3795, %v4027
    %v4095 = vsub.f32 %v3796, %v4029
    %v4096 = vsub.f32 %v3797, %v4030
    %v4097 = vsub.f32 %v3798, %v4031
    %v4098 = vsub.f32 %v3799, %v4032
    %v4099 = vsub.f32 %v3800, %v4033
    %v4100 = vsub.f32 %v3801, %v4034
    %v4101 = vsub.f32 %v3802, %v4035
    %v4102 = vsub.f32 %v3803, %v4027
    %v4103 = vsub.f32 %v3804, %v4029
    %v4104 = vsub.f32 %v3805, %v4030
    %v4105 = vsub.f32 %v3806, %v4031
    %v4106 = vsub.f32 %v3807, %v4032
    %v4107 = vsub.f32 %v3808, %v4033
    %v4108 = vsub.f32 %v3809, %v4034
    %v4109 = vsub.f32 %v3810, %v4035
    %v4110 = vsub.f32 %v3811, %v4027
    %v4111 = vsub.f32 %v3812, %v4029
    %v4112 = vsub.f32 %v3813, %v4030
    %v4113 = vmul.f32 %v4043, %v4043
    %v4114 = vmul.f32 %v4044, %v4044
    %v4115 = vmul.f32 %v4045, %v4045
    %v4116 = vmul.f32 %v4046, %v4046
    %v4117 = vmul.f32 %v4047, %v4047
    %v4118 = vmul.f32 %v4048, %v4048
    %v4119 = vmul.f32 %v4049, %v4049
    %v4120 = vmul.f32 %v4050, %v4050
    %v4121 = vmul.f32 %v4051, %v4051
    %v4122 = vmul.f32 %v4052, %v4052
    %v4123 = vmul.f32 %v4053, %v4053
    %v4124 = vmul.f32 %v4054, %v4054
    %v4125 = vmul.f32 %v4055, %v4055
    %v4126 = vmul.f32 %v4056, %v4056
    %v4127 = vmul.f32 %v4057, %v4057
    %v4128 = vmul.f32 %v4058, %v4058
    %v4129 = vmul.f32 %v4059, %v4059
    %v4130 = vmul.f32 %v4060, %v4060
    %v4131 = vmul.f32 %v4061, %v4061
    %v4132 = vmul.f32 %v4062, %v4062
    %v4133 = vmul.f32 %v4063, %v4063
    %v4134 = vmul.f32 %v4064, %v4064
    %v4135 = vmul.f32 %v4065, %v4065
    %v4136 = vmul.f32 %v4066, %v4066
    %v4137 = vmul.f32 %v4067, %v4067
    %v4138 = vmul.f32 %v4068, %v4068
    %v4139 = vmul.f32 %v4069, %v4069
    %v4140 = vmul.f32 %v4070, %v4070
    %v4141 = vmul.f32 %v4071, %v4071
    %v4142 = vmul.f32 %v4072, %v4072
    %v4143 = vmul.f32 %v4073, %v4073
    %v4144 = vmul.f32 %v4074, %v4074
    %v4145 = vmul.f32 %v4075, %v4075
    %v4146 = vmul.f32 %v4076, %v4076
    %v4147 = vmul.f32 %v4077, %v4077
    %v4148 = vmul.f32 %v4078, %v4078
    %v4149 = vmul.f32 %v4079, %v4079
    %v4150 = vmul.f32 %v4080, %v4080
    %v4151 = vmul.f32 %v4081, %v4081
    %v4152 = vmul.f32 %v4082, %v4082
    %v4153 = vmul.f32 %v4083, %v4083
    %v4154 = vmul.f32 %v4084, %v4084
    %v4155 = vmul.f32 %v4085, %v4085
    %v4156 = vmul.f32 %v4086, %v4086
    %v4157 = vmul.f32 %v4087, %v4087
    %v4158 = vmul.f32 %v4088, %v4088
    %v4159 = vmul.f32 %v4089, %v4089
    %v4160 = vmul.f32 %v4090, %v4090
    %v4161 = vmul.f32 %v4091, %v4091
    %v4162 = vmul.f32 %v4092, %v4092
    %v4163 = vmul.f32 %v4093, %v4093
    %v4164 = vmul.f32 %v4094, %v4094
    %v4165 = vmul.f32 %v4095, %v4095
    %v4166 = vmul.f32 %v4096, %v4096
    %v4167 = vmul.f32 %v4097, %v4097
    %v4168 = vmul.f32 %v4098, %v4098
    %v4169 = vmul.f32 %v4099, %v4099
    %v4170 = vmul.f32 %v4100, %v4100
    %v4171 = vmul.f32 %v4101, %v4101
    %v4172 = vmul.f32 %v4102, %v4102
    %v4173 = vmul.f32 %v4103, %v4103
    %v4174 = vmul.f32 %v4104, %v4104
    %v4175 = vmul.f32 %v4105, %v4105
    %v4176 = vmul.f32 %v4106, %v4106
    %v4177 = vmul.f32 %v4107, %v4107
    %v4178 = vmul.f32 %v4108, %v4108
    %v4179 = vmul.f32 %v4109, %v4109
    %v4180 = vmul.f32 %v4110, %v4110
    %v4181 = vmul.f32 %v4111, %v4111
    %v4182 = vmul.f32 %v4112, %v4112
    %4253 = vst [vmem:[#allocation1] ss:$9 sm:$0xff] %v4113
    %s4254 = scalar_lea.vmem [#allocation1], 1
    %4255 = vst [vmem:[%s4254] ss:$9 sm:$0xff] %v4114
    %s4256 = scalar_lea.vmem [#allocation1], 2
    %4257 = vst [vmem:[%s4256] ss:$9 sm:$0xff] %v4115
    %s4258 = scalar_lea.vmem [#allocation1], 3
    %4259 = vst [vmem:[%s4258] ss:$9 sm:$0xff] %v4116
    %s4260 = scalar_lea.vmem [#allocation1], 4
    %4261 = vst [vmem:[%s4260] ss:$9 sm:$0xff] %v4117
    %s4262 = scalar_lea.vmem [#allocation1], 5
    %4263 = vst [vmem:[%s4262] ss:$9 sm:$0xff] %v4118
    %s4264 = scalar_lea.vmem [#allocation1], 6
    %4265 = vst [vmem:[%s4264] ss:$9 sm:$0xff] %v4119
    %s4266 = scalar_lea.vmem [#allocation1], 7
    %4267 = vst [vmem:[%s4266] ss:$9 sm:$0xff] %v4120
    %v4268 = vld [vmem:[#allocation1] sm:$0xff]
    %4269 = vst [vmem:[#allocation1] ss:$9 sm:$0xff] %v4121
    %4270 = vst [vmem:[%s4254] ss:$9 sm:$0xff] %v4122
    %4271 = vst [vmem:[%s4256] ss:$9 sm:$0xff] %v4123
    %4272 = vst [vmem:[%s4258] ss:$9 sm:$0xff] %v4124
    %4273 = vst [vmem:[%s4260] ss:$9 sm:$0xff] %v4125
    %4274 = vst [vmem:[%s4262] ss:$9 sm:$0xff] %v4126
    %4275 = vst [vmem:[%s4264] ss:$9 sm:$0xff] %v4127
    %4276 = vst [vmem:[%s4266] ss:$9 sm:$0xff] %v4128
    %v4277 = vld [vmem:[#allocation1] sm:$0xff]
    %4278 = vst [vmem:[#allocation1] ss:$9 sm:$0xff] %v4129
    %4279 = vst [vmem:[%s4254] ss:$9 sm:$0xff] %v4130
    %4280 = vst [vmem:[%s4256] ss:$9 sm:$0xff] %v4131
    %4281 = vst [vmem:[%s4258] ss:$9 sm:$0xff] %v4132
    %4282 = vst [vmem:[%s4260] ss:$9 sm:$0xff] %v4133
    %4283 = vst [vmem:[%s4262] ss:$9 sm:$0xff] %v4134
    %4284 = vst [vmem:[%s4264] ss:$9 sm:$0xff] %v4135
    %4285 = vst [vmem:[%s4266] ss:$9 sm:$0xff] %v4136
    %v4286 = vld [vmem:[#allocation1] sm:$0xff]
    %4287 = vst [vmem:[#allocation1] ss:$9 sm:$0xff] %v4137
    %4288 = vst [vmem:[%s4254] ss:$9 sm:$0xff] %v4138
    %4289 = vst [vmem:[%s4256] ss:$9 sm:$0xff] %v4139
    %4290 = vst [vmem:[%s4258] ss:$9 sm:$0xff] %v4140
    %4291 = vst [vmem:[%s4260] ss:$9 sm:$0xff] %v4141
    %4292 = vst [vmem:[%s4262] ss:$9 sm:$0xff] %v4142
    %4293 = vst [vmem:[%s4264] ss:$9 sm:$0xff] %v4143
    %4294 = vst [vmem:[%s4266] ss:$9 sm:$0xff] %v4144
    %v4295 = vld [vmem:[#allocation1] sm:$0xff]
    %4296 = vst [vmem:[#allocation1] ss:$9 sm:$0xff] %v4145
    %4297 = vst [vmem:[%s4254] ss:$9 sm:$0xff] %v4146
    %4298 = vst [vmem:[%s4256] ss:$9 sm:$0xff] %v4147
    %v4299 = vld [vmem:[#allocation1] sm:$0xff]
    %4300 = vst [vmem:[#allocation1] ss:$9 sm:$0xff] %v4148
    %4301 = vst [vmem:[%s4254] ss:$9 sm:$0xff] %v4149
    %4302 = vst [vmem:[%s4256] ss:$9 sm:$0xff] %v4150
    %4303 = vst [vmem:[%s4258] ss:$9 sm:$0xff] %v4151
    %4304 = vst [vmem:[%s4260] ss:$9 sm:$0xff] %v4152
    %4305 = vst [vmem:[%s4262] ss:$9 sm:$0xff] %v4153
    %4306 = vst [vmem:[%s4264] ss:$9 sm:$0xff] %v4154
    %4307 = vst [vmem:[%s4266] ss:$9 sm:$0xff] %v4155
    %v4308 = vld [vmem:[#allocation1] sm:$0xff]
    %4309 = vst [vmem:[#allocation1] ss:$9 sm:$0xff] %v4156
    %4310 = vst [vmem:[%s4254] ss:$9 sm:$0xff] %v4157
    %4311 = vst [vmem:[%s4256] ss:$9 sm:$0xff] %v4158
    %4312 = vst [vmem:[%s4258] ss:$9 sm:$0xff] %v4159
    %4313 = vst [vmem:[%s4260] ss:$9 sm:$0xff] %v4160
    %4314 = vst [vmem:[%s4262] ss:$9 sm:$0xff] %v4161
    %4315 = vst [vmem:[%s4264] ss:$9 sm:$0xff] %v4162
    %4316 = vst [vmem:[%s4266] ss:$9 sm:$0xff] %v4163
    %v4317 = vld [vmem:[#allocation1] sm:$0xff]
    %4318 = vst [vmem:[#allocation1] ss:$9 sm:$0xff] %v4164
    %4319 = vst [vmem:[%s4254] ss:$9 sm:$0xff] %v4165
    %4320 = vst [vmem:[%s4256] ss:$9 sm:$0xff] %v4166
    %4321 = vst [vmem:[%s4258] ss:$9 sm:$0xff] %v4167
    %4322 = vst [vmem:[%s4260] ss:$9 sm:$0xff] %v4168
    %4323 = vst [vmem:[%s4262] ss:$9 sm:$0xff] %v4169
    %4324 = vst [vmem:[%s4264] ss:$9 sm:$0xff] %v4170
    %4325 = vst [vmem:[%s4266] ss:$9 sm:$0xff] %v4171
    %v4326 = vld [vmem:[#allocation1] sm:$0xff]
    %4327 = vst [vmem:[#allocation1] ss:$9 sm:$0xff] %v4172
    %4328 = vst [vmem:[%s4254] ss:$9 sm:$0xff] %v4173
    %4329 = vst [vmem:[%s4256] ss:$9 sm:$0xff] %v4174
    %4330 = vst [vmem:[%s4258] ss:$9 sm:$0xff] %v4175
    %4331 = vst [vmem:[%s4260] ss:$9 sm:$0xff] %v4176
    %4332 = vst [vmem:[%s4262] ss:$9 sm:$0xff] %v4177
    %4333 = vst [vmem:[%s4264] ss:$9 sm:$0xff] %v4178
    %4334 = vst [vmem:[%s4266] ss:$9 sm:$0xff] %v4179
    %v4335 = vld [vmem:[#allocation1] sm:$0xff]
    %4336 = vst [vmem:[#allocation1] ss:$9 sm:$0xff] %v4180
    %4337 = vst [vmem:[%s4254] ss:$9 sm:$0xff] %v4181
    %4338 = vst [vmem:[%s4256] ss:$9 sm:$0xff] %v4182
    %v4339 = vld [vmem:[#allocation1] sm:$0xff]
    %v4350 = vsel %vm1184, %v4268, 0.0
    %v4351 = vsel %vm1184, %v4277, 0.0
    %v4352 = vadd.f32 %v4350, %v4351
    %v4353 = vsel %vm1184, %v4286, 0.0
    %v4354 = vadd.f32 %v4352, %v4353
    %v4355 = vsel %vm1184, %v4295, 0.0
    %v4356 = vadd.f32 %v4354, %v4355
    %v4357 = vsel %vm3988, %v4299, 0.0
    %v4358 = vadd.f32 %v4356, %v4357
    %v4359 = vsel %vm1184, %v4308, 0.0
    %v4360 = vadd.f32 %v4358, %v4359
    %v4361 = vsel %vm1184, %v4317, 0.0
    %v4362 = vadd.f32 %v4360, %v4361
    %v4363 = vsel %vm1184, %v4326, 0.0
    %v4364 = vadd.f32 %v4362, %v4363
    %v4365 = vsel %vm1184, %v4335, 0.0
    %v4366 = vadd.f32 %v4364, %v4365
    %v4367 = vsel %vm3988, %v4339, 0.0
    %v4368 = vadd.f32 %v4366, %v4367
    %v4369 = vrot.slane %v4368, 4
    %v4370 = vadd.f32 %v4368, %v4369
    %v4371 = vrot.slane %v4370, 2
    %v4372 = vadd.f32 %v4370, %v4371
    %v4373 = vrot.slane %v4372, 1
    %v4374 = vadd.f32 %v4372, %v4373
    %4375 = vrot.lane.b32.xlu0 %v4374, 64
    %v4376 = vpop.permute.xlu0 %4375
    %v4377 = vsel %vm4007, %v4376, %v4374
    %4378 = vrot.lane.b32.xlu0 %v4377, 64
    %v4379 = vpop.permute.xlu0 %4378
    %v4380 = vsel %vm4007, %v4379, %v4374
    %4382 = vrot.lane.b32.xlu0 %v4380, 96
    %v4383 = vpop.permute.xlu0 %4382
    %v4385 = vadd.f32 %v4374, %v4383
    %v4386 = vmul.f32 %v4385, %v4025
    %v4387 = vld [vmem:[%s7] sm:$0x1]
    %v4388 = vadd.f32 %v4386, 1e-05
    %v4389 = vrsqrt.pop %v4388
    %v4390 = vmul.f32 %v4389, %v4388
    %v4391 = vmul.f32 %v4390, %v4389
    %v4392 = vmul.f32 0.5, %v4391
    %v4393 = vsub.f32 1.5, %v4392
    %v4394 = vmul.f32 %v4389, %v4393
    %vm4395 = vweird.f32 %v4388
    %vm4396 = vweird.f32 %v4389
    %vm4397 = vmor %vm4395, %vm4396
    %v4398 = vsel %vm4397, %v4389, %v4394
    %v4399 = vmul.f32 %v4387, %v4398
    %v4401 = vperm.slane %v4399, 0
    %v4403 = vrot.slane %v4401, 1
    %v4404 = vrot.slane %v4401, 2
    %v4405 = vrot.slane %v4401, 3
    %v4406 = vrot.slane %v4401, 4
    %v4407 = vrot.slane %v4401, 5
    %v4408 = vrot.slane %v4401, 6
    %v4409 = vrot.slane %v4401, 7
    %v4417 = vmul.f32 %v4043, %v4401
    %v4418 = vmul.f32 %v4044, %v4403
    %v4419 = vmul.f32 %v4045, %v4404
    %v4420 = vmul.f32 %v4046, %v4405
    %v4421 = vmul.f32 %v4047, %v4406
    %v4422 = vmul.f32 %v4048, %v4407
    %v4423 = vmul.f32 %v4049, %v4408
    %v4424 = vmul.f32 %v4050, %v4409
    %v4425 = vmul.f32 %v4051, %v4401
    %v4426 = vmul.f32 %v4052, %v4403
    %v4427 = vmul.f32 %v4053, %v4404
    %v4428 = vmul.f32 %v4054, %v4405
    %v4429 = vmul.f32 %v4055, %v4406
    %v4430 = vmul.f32 %v4056, %v4407
    %v4431 = vmul.f32 %v4057, %v4408
    %v4432 = vmul.f32 %v4058, %v4409
    %v4433 = vmul.f32 %v4059, %v4401
    %v4434 = vmul.f32 %v4060, %v4403
    %v4435 = vmul.f32 %v4061, %v4404
    %v4436 = vmul.f32 %v4062, %v4405
    %v4437 = vmul.f32 %v4063, %v4406
    %v4438 = vmul.f32 %v4064, %v4407
    %v4439 = vmul.f32 %v4065, %v4408
    %v4440 = vmul.f32 %v4066, %v4409
    %v4441 = vmul.f32 %v4067, %v4401
    %v4442 = vmul.f32 %v4068, %v4403
    %v4443 = vmul.f32 %v4069, %v4404
    %v4444 = vmul.f32 %v4070, %v4405
    %v4445 = vmul.f32 %v4071, %v4406
    %v4446 = vmul.f32 %v4072, %v4407
    %v4447 = vmul.f32 %v4073, %v4408
    %v4448 = vmul.f32 %v4074, %v4409
    %v4449 = vmul.f32 %v4075, %v4401
    %v4450 = vmul.f32 %v4076, %v4403
    %v4451 = vmul.f32 %v4077, %v4404
    %v4452 = vmul.f32 %v4078, %v4401
    %v4453 = vmul.f32 %v4079, %v4403
    %v4454 = vmul.f32 %v4080, %v4404
    %v4455 = vmul.f32 %v4081, %v4405
    %v4456 = vmul.f32 %v4082, %v4406
    %v4457 = vmul.f32 %v4083, %v4407
    %v4458 = vmul.f32 %v4084, %v4408
    %v4459 = vmul.f32 %v4085, %v4409
    %v4460 = vmul.f32 %v4086, %v4401
    %v4461 = vmul.f32 %v4087, %v4403
    %v4462 = vmul.f32 %v4088, %v4404
    %v4463 = vmul.f32 %v4089, %v4405
    %v4464 = vmul.f32 %v4090, %v4406
    %v4465 = vmul.f32 %v4091, %v4407
    %v4466 = vmul.f32 %v4092, %v4408
    %v4467 = vmul.f32 %v4093, %v4409
    %v4468 = vmul.f32 %v4094, %v4401
    %v4469 = vmul.f32 %v4095, %v4403
    %v4470 = vmul.f32 %v4096, %v4404
    %v4471 = vmul.f32 %v4097, %v4405
    %v4472 = vmul.f32 %v4098, %v4406
    %v4473 = vmul.f32 %v4099, %v4407
    %v4474 = vmul.f32 %v4100, %v4408
    %v4475 = vmul.f32 %v4101, %v4409
    %v4476 = vmul.f32 %v4102, %v4401
    %v4477 = vmul.f32 %v4103, %v4403
    %v4478 = vmul.f32 %v4104, %v4404
    %v4479 = vmul.f32 %v4105, %v4405
    %v4480 = vmul.f32 %v4106, %v4406
    %v4481 = vmul.f32 %v4107, %v4407
    %v4482 = vmul.f32 %v4108, %v4408
    %v4483 = vmul.f32 %v4109, %v4409
    %v4484 = vmul.f32 %v4110, %v4401
    %v4485 = vmul.f32 %v4111, %v4403
    %v4486 = vmul.f32 %v4112, %v4404
    %v4487 = vld [vmem:[%s8] sm:$0x1]
    %v4489 = vperm.slane %v4487, 0
    %v4491 = vrot.slane %v4489, 1
    %v4492 = vrot.slane %v4489, 2
    %v4493 = vrot.slane %v4489, 3
    %v4494 = vrot.slane %v4489, 4
    %v4495 = vrot.slane %v4489, 5
    %v4496 = vrot.slane %v4489, 6
    %v4497 = vrot.slane %v4489, 7
    %v4505 = vadd.f32 %v4417, %v4489
    %v4506 = vadd.f32 %v4418, %v4491
    %v4507 = vadd.f32 %v4419, %v4492
    %v4508 = vadd.f32 %v4420, %v4493
    %v4509 = vadd.f32 %v4421, %v4494
    %v4510 = vadd.f32 %v4422, %v4495
    %v4511 = vadd.f32 %v4423, %v4496
    %v4512 = vadd.f32 %v4424, %v4497
    %v4513 = vadd.f32 %v4425, %v4489
    %v4514 = vadd.f32 %v4426, %v4491
    %v4515 = vadd.f32 %v4427, %v4492
    %v4516 = vadd.f32 %v4428, %v4493
    %v4517 = vadd.f32 %v4429, %v4494
    %v4518 = vadd.f32 %v4430, %v4495
    %v4519 = vadd.f32 %v4431, %v4496
    %v4520 = vadd.f32 %v4432, %v4497
    %v4521 = vadd.f32 %v4433, %v4489
    %v4522 = vadd.f32 %v4434, %v4491
    %v4523 = vadd.f32 %v4435, %v4492
    %v4524 = vadd.f32 %v4436, %v4493
    %v4525 = vadd.f32 %v4437, %v4494
    %v4526 = vadd.f32 %v4438, %v4495
    %v4527 = vadd.f32 %v4439, %v4496
    %v4528 = vadd.f32 %v4440, %v4497
    %v4529 = vadd.f32 %v4441, %v4489
    %v4530 = vadd.f32 %v4442, %v4491
    %v4531 = vadd.f32 %v4443, %v4492
    %v4532 = vadd.f32 %v4444, %v4493
    %v4533 = vadd.f32 %v4445, %v4494
    %v4534 = vadd.f32 %v4446, %v4495
    %v4535 = vadd.f32 %v4447, %v4496
    %v4536 = vadd.f32 %v4448, %v4497
    %v4537 = vadd.f32 %v4449, %v4489
    %v4538 = vadd.f32 %v4450, %v4491
    %v4539 = vadd.f32 %v4451, %v4492
    %v4540 = vadd.f32 %v4452, %v4489
    %v4541 = vadd.f32 %v4453, %v4491
    %v4542 = vadd.f32 %v4454, %v4492
    %v4543 = vadd.f32 %v4455, %v4493
    %v4544 = vadd.f32 %v4456, %v4494
    %v4545 = vadd.f32 %v4457, %v4495
    %v4546 = vadd.f32 %v4458, %v4496
    %v4547 = vadd.f32 %v4459, %v4497
    %v4548 = vadd.f32 %v4460, %v4489
    %v4549 = vadd.f32 %v4461, %v4491
    %v4550 = vadd.f32 %v4462, %v4492
    %v4551 = vadd.f32 %v4463, %v4493
    %v4552 = vadd.f32 %v4464, %v4494
    %v4553 = vadd.f32 %v4465, %v4495
    %v4554 = vadd.f32 %v4466, %v4496
    %v4555 = vadd.f32 %v4467, %v4497
    %v4556 = vadd.f32 %v4468, %v4489
    %v4557 = vadd.f32 %v4469, %v4491
    %v4558 = vadd.f32 %v4470, %v4492
    %v4559 = vadd.f32 %v4471, %v4493
    %v4560 = vadd.f32 %v4472, %v4494
    %v4561 = vadd.f32 %v4473, %v4495
    %v4562 = vadd.f32 %v4474, %v4496
    %v4563 = vadd.f32 %v4475, %v4497
    %v4564 = vadd.f32 %v4476, %v4489
    %v4565 = vadd.f32 %v4477, %v4491
    %v4566 = vadd.f32 %v4478, %v4492
    %v4567 = vadd.f32 %v4479, %v4493
    %v4568 = vadd.f32 %v4480, %v4494
    %v4569 = vadd.f32 %v4481, %v4495
    %v4570 = vadd.f32 %v4482, %v4496
    %v4571 = vadd.f32 %v4483, %v4497
    %v4572 = vadd.f32 %v4484, %v4489
    %v4573 = vadd.f32 %v4485, %v4491
    %v4574 = vadd.f32 %v4486, %v4492
    %4645 = vst [vmem:[#allocation1] ss:$9 sm:$0xff] %v4505
    %s4646 = scalar_lea.vmem [#allocation1], 1
    %4647 = vst [vmem:[%s4646] ss:$9 sm:$0xff] %v4506
    %s4648 = scalar_lea.vmem [#allocation1], 2
    %4649 = vst [vmem:[%s4648] ss:$9 sm:$0xff] %v4507
    %s4650 = scalar_lea.vmem [#allocation1], 3
    %4651 = vst [vmem:[%s4650] ss:$9 sm:$0xff] %v4508
    %s4652 = scalar_lea.vmem [#allocation1], 4
    %4653 = vst [vmem:[%s4652] ss:$9 sm:$0xff] %v4509
    %s4654 = scalar_lea.vmem [#allocation1], 5
    %4655 = vst [vmem:[%s4654] ss:$9 sm:$0xff] %v4510
    %s4656 = scalar_lea.vmem [#allocation1], 6
    %4657 = vst [vmem:[%s4656] ss:$9 sm:$0xff] %v4511
    %s4658 = scalar_lea.vmem [#allocation1], 7
    %4659 = vst [vmem:[%s4658] ss:$9 sm:$0xff] %v4512
    %v4660 = vld [vmem:[#allocation1] sm:$0xff]
    %4661 = vst [vmem:[#allocation1] ss:$9 sm:$0xff] %v4513
    %4662 = vst [vmem:[%s4646] ss:$9 sm:$0xff] %v4514
    %4663 = vst [vmem:[%s4648] ss:$9 sm:$0xff] %v4515
    %4664 = vst [vmem:[%s4650] ss:$9 sm:$0xff] %v4516
    %4665 = vst [vmem:[%s4652] ss:$9 sm:$0xff] %v4517
    %4666 = vst [vmem:[%s4654] ss:$9 sm:$0xff] %v4518
    %4667 = vst [vmem:[%s4656] ss:$9 sm:$0xff] %v4519
    %4668 = vst [vmem:[%s4658] ss:$9 sm:$0xff] %v4520
    %v4669 = vld [vmem:[#allocation1] sm:$0xff]
    %4670 = vst [vmem:[#allocation1] ss:$9 sm:$0xff] %v4521
    %4671 = vst [vmem:[%s4646] ss:$9 sm:$0xff] %v4522
    %4672 = vst [vmem:[%s4648] ss:$9 sm:$0xff] %v4523
    %4673 = vst [vmem:[%s4650] ss:$9 sm:$0xff] %v4524
    %4674 = vst [vmem:[%s4652] ss:$9 sm:$0xff] %v4525
    %4675 = vst [vmem:[%s4654] ss:$9 sm:$0xff] %v4526
    %4676 = vst [vmem:[%s4656] ss:$9 sm:$0xff] %v4527
    %4677 = vst [vmem:[%s4658] ss:$9 sm:$0xff] %v4528
    %v4678 = vld [vmem:[#allocation1] sm:$0xff]
    %4679 = vst [vmem:[#allocation1] ss:$9 sm:$0xff] %v4529
    %4680 = vst [vmem:[%s4646] ss:$9 sm:$0xff] %v4530
    %4681 = vst [vmem:[%s4648] ss:$9 sm:$0xff] %v4531
    %4682 = vst [vmem:[%s4650] ss:$9 sm:$0xff] %v4532
    %4683 = vst [vmem:[%s4652] ss:$9 sm:$0xff] %v4533
    %4684 = vst [vmem:[%s4654] ss:$9 sm:$0xff] %v4534
    %4685 = vst [vmem:[%s4656] ss:$9 sm:$0xff] %v4535
    %4686 = vst [vmem:[%s4658] ss:$9 sm:$0xff] %v4536
    %v4687 = vld [vmem:[#allocation1] sm:$0xff]
    %4688 = vst [vmem:[#allocation1] ss:$9 sm:$0xff] %v4537
    %4689 = vst [vmem:[%s4646] ss:$9 sm:$0xff] %v4538
    %4690 = vst [vmem:[%s4648] ss:$9 sm:$0xff] %v4539
    %v4691 = vld [vmem:[#allocation1] sm:$0xff]
    %4692 = vst [vmem:[#allocation1] ss:$9 sm:$0xff] %v4540
    %4693 = vst [vmem:[%s4646] ss:$9 sm:$0xff] %v4541
    %4694 = vst [vmem:[%s4648] ss:$9 sm:$0xff] %v4542
    %4695 = vst [vmem:[%s4650] ss:$9 sm:$0xff] %v4543
    %4696 = vst [vmem:[%s4652] ss:$9 sm:$0xff] %v4544
    %4697 = vst [vmem:[%s4654] ss:$9 sm:$0xff] %v4545
    %4698 = vst [vmem:[%s4656] ss:$9 sm:$0xff] %v4546
    %4699 = vst [vmem:[%s4658] ss:$9 sm:$0xff] %v4547
    %v4700 = vld [vmem:[#allocation1] sm:$0xff]
    %4701 = vst [vmem:[#allocation1] ss:$9 sm:$0xff] %v4548
    %4702 = vst [vmem:[%s4646] ss:$9 sm:$0xff] %v4549
    %4703 = vst [vmem:[%s4648] ss:$9 sm:$0xff] %v4550
    %4704 = vst [vmem:[%s4650] ss:$9 sm:$0xff] %v4551
    %4705 = vst [vmem:[%s4652] ss:$9 sm:$0xff] %v4552
    %4706 = vst [vmem:[%s4654] ss:$9 sm:$0xff] %v4553
    %4707 = vst [vmem:[%s4656] ss:$9 sm:$0xff] %v4554
    %4708 = vst [vmem:[%s4658] ss:$9 sm:$0xff] %v4555
    %v4709 = vld [vmem:[#allocation1] sm:$0xff]
    %4710 = vst [vmem:[#allocation1] ss:$9 sm:$0xff] %v4556
    %4711 = vst [vmem:[%s4646] ss:$9 sm:$0xff] %v4557
    %4712 = vst [vmem:[%s4648] ss:$9 sm:$0xff] %v4558
    %4713 = vst [vmem:[%s4650] ss:$9 sm:$0xff] %v4559
    %4714 = vst [vmem:[%s4652] ss:$9 sm:$0xff] %v4560
    %4715 = vst [vmem:[%s4654] ss:$9 sm:$0xff] %v4561
    %4716 = vst [vmem:[%s4656] ss:$9 sm:$0xff] %v4562
    %4717 = vst [vmem:[%s4658] ss:$9 sm:$0xff] %v4563
    %v4718 = vld [vmem:[#allocation1] sm:$0xff]
    %4719 = vst [vmem:[#allocation1] ss:$9 sm:$0xff] %v4564
    %4720 = vst [vmem:[%s4646] ss:$9 sm:$0xff] %v4565
    %4721 = vst [vmem:[%s4648] ss:$9 sm:$0xff] %v4566
    %4722 = vst [vmem:[%s4650] ss:$9 sm:$0xff] %v4567
    %4723 = vst [vmem:[%s4652] ss:$9 sm:$0xff] %v4568
    %4724 = vst [vmem:[%s4654] ss:$9 sm:$0xff] %v4569
    %4725 = vst [vmem:[%s4656] ss:$9 sm:$0xff] %v4570
    %4726 = vst [vmem:[%s4658] ss:$9 sm:$0xff] %v4571
    %v4727 = vld [vmem:[#allocation1] sm:$0xff]
    %4728 = vst [vmem:[#allocation1] ss:$9 sm:$0xff] %v4572
    %4729 = vst [vmem:[%s4646] ss:$9 sm:$0xff] %v4573
    %4730 = vst [vmem:[%s4648] ss:$9 sm:$0xff] %v4574
    %v4731 = vld [vmem:[#allocation1] sm:$0xff]
    %v4742 = vpack.c.bf16 %v4660, %v4660
    %v4743 = vpack.c.bf16 %v4669, %v4669
    %v4744 = vpack.c.bf16 %v4678, %v4678
    %v4745 = vpack.c.bf16 %v4687, %v4687
    %v4746 = vpack.c.bf16 %v4691, %v4691
    %v4747 = vpack.c.bf16 %v4700, %v4700
    %v4748 = vpack.c.bf16 %v4709, %v4709
    %v4749 = vpack.c.bf16 %v4718, %v4718
    %v4750 = vpack.c.bf16 %v4727, %v4727
    %v4751 = vpack.c.bf16 %v4731, %v4731
    %v4752 = vld [vmem:[#allocation10] sm:$0xf]
    %v4753 = vld [vmem:[#allocation10 + $0x4] sm:$0xf]
    %v4754 = vld [vmem:[#allocation10 + $0x8] sm:$0xf]
    %v4755 = vld [vmem:[#allocation10 + $0xc] sm:$0xf]
    %v4756 = vld [vmem:[#allocation10 + $0x10] sm:$0xf]
    %v4757 = vld [vmem:[#allocation10 + $0x14] sm:$0xf]
    %v4758 = vld [vmem:[#allocation10 + $0x18] sm:$0xf]
    %v4759 = vld [vmem:[#allocation10 + $0x1c] sm:$0xf]
    %v4760 = vld [vmem:[%s10] sm:$0x1]
    %v4762 = vperm.slane %v4760, 0
    %v4773 = vrot.slane %v4742, 3
    %v4774 = vrot.slane %v4743, 3
    %v4775 = vrot.slane %v4744, 3
    %v4776 = vrot.slane %v4745, 3
    %v4777 = vrot.slane %v4746, 3
    %v4778 = vrot.slane %v4747, 3
    %v4779 = vrot.slane %v4748, 3
    %v4780 = vrot.slane %v4749, 3
    %v4781 = vrot.slane %v4750, 3
    %v4782 = vrot.slane %v4751, 3
    %v4785 = vsel %vm1513, %v4742, %v4773
    %v4787 = vsel %vm1518, %v4742, %v4773
    %v4789 = vrot.slane %v4787, 1
    %v4790 = vsel %vm1522, %v4742, %v4773
    %v4792 = vrot.slane %v4790, 2
    %v4793 = vsel %vm1526, %v4742, %v4773
    %v4795 = vrot.slane %v4793, 3
    %v4798 = vsel %vm1513, %v4743, %v4774
    %v4800 = vsel %vm1518, %v4743, %v4774
    %v4802 = vrot.slane %v4800, 1
    %v4803 = vsel %vm1522, %v4743, %v4774
    %v4805 = vrot.slane %v4803, 2
    %v4806 = vsel %vm1526, %v4743, %v4774
    %v4808 = vrot.slane %v4806, 3
    %v4811 = vsel %vm1513, %v4744, %v4775
    %v4813 = vsel %vm1518, %v4744, %v4775
    %v4815 = vrot.slane %v4813, 1
    %v4816 = vsel %vm1522, %v4744, %v4775
    %v4818 = vrot.slane %v4816, 2
    %v4819 = vsel %vm1526, %v4744, %v4775
    %v4821 = vrot.slane %v4819, 3
    %v4824 = vsel %vm1513, %v4745, %v4776
    %v4826 = vsel %vm1518, %v4745, %v4776
    %v4828 = vrot.slane %v4826, 1
    %v4829 = vsel %vm1522, %v4745, %v4776
    %v4831 = vrot.slane %v4829, 2
    %v4832 = vsel %vm1526, %v4745, %v4776
    %v4834 = vrot.slane %v4832, 3
    %v4837 = vsel %vm1513, %v4746, %v4777
    %v4839 = vsel %vm1518, %v4746, %v4777
    %v4841 = vrot.slane %v4839, 1
    %v4844 = vsel %vm1513, %v4747, %v4778
    %v4846 = vsel %vm1518, %v4747, %v4778
    %v4848 = vrot.slane %v4846, 1
    %v4849 = vsel %vm1522, %v4747, %v4778
    %v4851 = vrot.slane %v4849, 2
    %v4852 = vsel %vm1526, %v4747, %v4778
    %v4854 = vrot.slane %v4852, 3
    %v4857 = vsel %vm1513, %v4748, %v4779
    %v4859 = vsel %vm1518, %v4748, %v4779
    %v4861 = vrot.slane %v4859, 1
    %v4862 = vsel %vm1522, %v4748, %v4779
    %v4864 = vrot.slane %v4862, 2
    %v4865 = vsel %vm1526, %v4748, %v4779
    %v4867 = vrot.slane %v4865, 3
    %v4870 = vsel %vm1513, %v4749, %v4780
    %v4872 = vsel %vm1518, %v4749, %v4780
    %v4874 = vrot.slane %v4872, 1
    %v4875 = vsel %vm1522, %v4749, %v4780
    %v4877 = vrot.slane %v4875, 2
    %v4878 = vsel %vm1526, %v4749, %v4780
    %v4880 = vrot.slane %v4878, 3
    %v4883 = vsel %vm1513, %v4750, %v4781
    %v4885 = vsel %vm1518, %v4750, %v4781
    %v4887 = vrot.slane %v4885, 1
    %v4888 = vsel %vm1522, %v4750, %v4781
    %v4890 = vrot.slane %v4888, 2
    %v4891 = vsel %vm1526, %v4750, %v4781
    %v4893 = vrot.slane %v4891, 3
    %v4896 = vsel %vm1513, %v4751, %v4782
    %v4898 = vsel %vm1518, %v4751, %v4782
    %v4900 = vrot.slane %v4898, 1
    %v4901 = vunpack.i.l.s16 %v4785
    %v4902 = vunpack.i.h.s16 %v4785
    %v4903 = vunpack.i.l.s16 %v4789
    %v4904 = vunpack.i.h.s16 %v4789
    %v4905 = vunpack.i.l.s16 %v4792
    %v4906 = vunpack.i.h.s16 %v4792
    %v4907 = vunpack.i.l.s16 %v4795
    %v4908 = vunpack.i.h.s16 %v4795
    %v4909 = vunpack.i.l.s16 %v4798
    %v4910 = vunpack.i.h.s16 %v4798
    %v4911 = vunpack.i.l.s16 %v4802
    %v4912 = vunpack.i.h.s16 %v4802
    %v4913 = vunpack.i.l.s16 %v4805
    %v4914 = vunpack.i.h.s16 %v4805
    %v4915 = vunpack.i.l.s16 %v4808
    %v4916 = vunpack.i.h.s16 %v4808
    %v4917 = vunpack.i.l.s16 %v4811
    %v4918 = vunpack.i.h.s16 %v4811
    %v4919 = vunpack.i.l.s16 %v4815
    %v4920 = vunpack.i.h.s16 %v4815
    %v4921 = vunpack.i.l.s16 %v4818
    %v4922 = vunpack.i.h.s16 %v4818
    %v4923 = vunpack.i.l.s16 %v4821
    %v4924 = vunpack.i.h.s16 %v4821
    %v4925 = vunpack.i.l.s16 %v4824
    %v4926 = vunpack.i.h.s16 %v4824
    %v4927 = vunpack.i.l.s16 %v4828
    %v4928 = vunpack.i.h.s16 %v4828
    %v4929 = vunpack.i.l.s16 %v4831
    %v4930 = vunpack.i.h.s16 %v4831
    %v4931 = vunpack.i.l.s16 %v4834
    %v4932 = vunpack.i.h.s16 %v4834
    %v4933 = vunpack.i.l.s16 %v4837
    %v4934 = vunpack.i.h.s16 %v4837
    %v4935 = vunpack.i.l.s16 %v4841
    %v4936 = vunpack.i.l.s16 %v4844
    %v4937 = vunpack.i.h.s16 %v4844
    %v4938 = vunpack.i.l.s16 %v4848
    %v4939 = vunpack.i.h.s16 %v4848
    %v4940 = vunpack.i.l.s16 %v4851
    %v4941 = vunpack.i.h.s16 %v4851
    %v4942 = vunpack.i.l.s16 %v4854
    %v4943 = vunpack.i.h.s16 %v4854
    %v4944 = vunpack.i.l.s16 %v4857
    %v4945 = vunpack.i.h.s16 %v4857
    %v4946 = vunpack.i.l.s16 %v4861
    %v4947 = vunpack.i.h.s16 %v4861
    %v4948 = vunpack.i.l.s16 %v4864
    %v4949 = vunpack.i.h.s16 %v4864
    %v4950 = vunpack.i.l.s16 %v4867
    %v4951 = vunpack.i.h.s16 %v4867
    %v4952 = vunpack.i.l.s16 %v4870
    %v4953 = vunpack.i.h.s16 %v4870
    %v4954 = vunpack.i.l.s16 %v4874
    %v4955 = vunpack.i.h.s16 %v4874
    %v4956 = vunpack.i.l.s16 %v4877
    %v4957 = vunpack.i.h.s16 %v4877
    %v4958 = vunpack.i.l.s16 %v4880
    %v4959 = vunpack.i.h.s16 %v4880
    %v4960 = vunpack.i.l.s16 %v4883
    %v4961 = vunpack.i.h.s16 %v4883
    %v4962 = vunpack.i.l.s16 %v4887
    %v4963 = vunpack.i.h.s16 %v4887
    %v4964 = vunpack.i.l.s16 %v4890
    %v4965 = vunpack.i.h.s16 %v4890
    %v4966 = vunpack.i.l.s16 %v4893
    %v4967 = vunpack.i.h.s16 %v4893
    %v4968 = vunpack.i.l.s16 %v4896
    %v4969 = vunpack.i.h.s16 %v4896
    %v4970 = vunpack.i.l.s16 %v4900
    %v4971 = vrot.slane %v4762, 1
    %v4972 = vrot.slane %v4762, 2
    %v4973 = vrot.slane %v4762, 3
    %v4974 = vrot.slane %v4762, 4
    %v4975 = vrot.slane %v4762, 5
    %v4976 = vrot.slane %v4762, 6
    %v4977 = vrot.slane %v4762, 7
    %v4978 = vpack.i.b16 %v4902, %v4901
    %v4979 = vpack.i.b16 %v4904, %v4903
    %v4980 = vpack.i.b16 %v4906, %v4905
    %v4981 = vpack.i.b16 %v4908, %v4907
    %v4982 = vpack.i.b16 %v4910, %v4909
    %v4983 = vpack.i.b16 %v4912, %v4911
    %v4984 = vpack.i.b16 %v4914, %v4913
    %v4985 = vpack.i.b16 %v4916, %v4915
    %v4986 = vpack.i.b16 %v4918, %v4917
    %v4987 = vpack.i.b16 %v4920, %v4919
    %v4988 = vpack.i.b16 %v4922, %v4921
    %v4989 = vpack.i.b16 %v4924, %v4923
    %v4990 = vpack.i.b16 %v4926, %v4925
    %v4991 = vpack.i.b16 %v4928, %v4927
    %v4992 = vpack.i.b16 %v4930, %v4929
    %v4993 = vpack.i.b16 %v4932, %v4931
    %v4994 = vpack.i.b16 %v4934, %v4933
    %v4995 = vpack.i.b16 %v4936, %v4935
    %v4996 = vpack.i.b16 %v4938, %v4937
    %v4997 = vpack.i.b16 %v4940, %v4939
    %v4998 = vpack.i.b16 %v4942, %v4941
    %v4999 = vpack.i.b16 %v4944, %v4943
    %v5000 = vpack.i.b16 %v4946, %v4945
    %v5001 = vpack.i.b16 %v4948, %v4947
    %v5002 = vpack.i.b16 %v4950, %v4949
    %v5003 = vpack.i.b16 %v4952, %v4951
    %v5004 = vpack.i.b16 %v4954, %v4953
    %v5005 = vpack.i.b16 %v4956, %v4955
    %v5006 = vpack.i.b16 %v4958, %v4957
    %v5007 = vpack.i.b16 %v4960, %v4959
    %v5008 = vpack.i.b16 %v4962, %v4961
    %v5009 = vpack.i.b16 %v4964, %v4963
    %v5010 = vpack.i.b16 %v4966, %v4965
    %v5011 = vpack.i.b16 %v4968, %v4967
    %v5012 = vpack.i.b16 %v4970, %v4969
    %5014 = vst [vmem:[#allocation1] ss:$9 sm:$0xff] %v4978
    %s5016 = scalar_lea.vmem [#allocation1], 1
    %5017 = vst [vmem:[%s5016] ss:$9 sm:$0xff] %v4979
    %s5019 = scalar_lea.vmem [#allocation1], 2
    %5020 = vst [vmem:[%s5019] ss:$9 sm:$0xff] %v4980
    %s5022 = scalar_lea.vmem [#allocation1], 3
    %5023 = vst [vmem:[%s5022] ss:$9 sm:$0xff] %v4981
    %s5025 = scalar_lea.vmem [#allocation1], 4
    %5026 = vst [vmem:[%s5025] ss:$9 sm:$0xff] %v4982
    %s5028 = scalar_lea.vmem [#allocation1], 5
    %5029 = vst [vmem:[%s5028] ss:$9 sm:$0xff] %v4983
    %s5031 = scalar_lea.vmem [#allocation1], 6
    %5032 = vst [vmem:[%s5031] ss:$9 sm:$0xff] %v4984
    %s5034 = scalar_lea.vmem [#allocation1], 7
    %5035 = vst [vmem:[%s5034] ss:$9 sm:$0xff] %v4985
    %v5036 = vld [vmem:[#allocation1] sm:$0xff]
    %5038 = vst [vmem:[#allocation1] ss:$9 sm:$0xff] %v4986
    %5040 = vst [vmem:[%s5016] ss:$9 sm:$0xff] %v4987
    %5042 = vst [vmem:[%s5019] ss:$9 sm:$0xff] %v4988
    %5044 = vst [vmem:[%s5022] ss:$9 sm:$0xff] %v4989
    %5046 = vst [vmem:[%s5025] ss:$9 sm:$0xff] %v4990
    %5048 = vst [vmem:[%s5028] ss:$9 sm:$0xff] %v4991
    %5050 = vst [vmem:[%s5031] ss:$9 sm:$0xff] %v4992
    %5052 = vst [vmem:[%s5034] ss:$9 sm:$0xff] %v4993
    %v5053 = vld [vmem:[#allocation1] sm:$0xff]
    %5055 = vst [vmem:[#allocation1] ss:$9 sm:$0xff] %v4994
    %5057 = vst [vmem:[%s5016] ss:$9 sm:$0xff] %v4995
    %5059 = vst [vmem:[%s5019] ss:$9 sm:$0xff] %v4996
    %5061 = vst [vmem:[%s5022] ss:$9 sm:$0xff] %v4997
    %5063 = vst [vmem:[%s5025] ss:$9 sm:$0xff] %v4998
    %5065 = vst [vmem:[%s5028] ss:$9 sm:$0xff] %v4999
    %5067 = vst [vmem:[%s5031] ss:$9 sm:$0xff] %v5000
    %5069 = vst [vmem:[%s5034] ss:$9 sm:$0xff] %v5001
    %v5070 = vld [vmem:[#allocation1] sm:$0xff]
    %5072 = vst [vmem:[#allocation1] ss:$9 sm:$0xff] %v5002
    %5074 = vst [vmem:[%s5016] ss:$9 sm:$0xff] %v5003
    %5076 = vst [vmem:[%s5019] ss:$9 sm:$0xff] %v5004
    %5078 = vst [vmem:[%s5022] ss:$9 sm:$0xff] %v5005
    %5080 = vst [vmem:[%s5025] ss:$9 sm:$0xff] %v5006
    %5082 = vst [vmem:[%s5028] ss:$9 sm:$0xff] %v5007
    %5084 = vst [vmem:[%s5031] ss:$9 sm:$0xff] %v5008
    %5086 = vst [vmem:[%s5034] ss:$9 sm:$0xff] %v5009
    %v5087 = vld [vmem:[#allocation1] sm:$0xff]
    %5089 = vst [vmem:[#allocation1] ss:$9 sm:$0xff] %v5010
    %5091 = vst [vmem:[%s5016] ss:$9 sm:$0xff] %v5011
    %5093 = vst [vmem:[%s5019] ss:$9 sm:$0xff] %v5012
    %v5094 = vld [vmem:[#allocation1] sm:$0xff]
    %v5103 = vunpack.c.l.b16 %v4752
    %v5104 = vunpack.c.l.b16 %v4753
    %v5105 = vunpack.c.l.b16 %v4754
    %v5106 = vunpack.c.l.b16 %v4755
    %v5107 = vunpack.c.l.b16 %v4756
    %v5108 = vunpack.c.l.b16 %v4757
    %v5109 = vunpack.c.l.b16 %v4758
    %v5110 = vunpack.c.l.b16 %v4759
    %v5111 = vpack.c.b16 %v5104, %v5103
    %v5112 = vpack.c.b16 %v5106, %v5105
    %v5113 = vpack.c.b16 %v5108, %v5107
    %v5114 = vpack.c.b16 %v5110, %v5109
    %5119 = vst [vmem:[#allocation1] ss:$9 sm:$0xff] %v4762
    %s5120 = scalar_lea.vmem [#allocation1], 1
    %5121 = vst [vmem:[%s5120] ss:$9 sm:$0xff] %v4971
    %s5122 = scalar_lea.vmem [#allocation1], 2
    %5123 = vst [vmem:[%s5122] ss:$9 sm:$0xff] %v4972
    %s5124 = scalar_lea.vmem [#allocation1], 3
    %5125 = vst [vmem:[%s5124] ss:$9 sm:$0xff] %v4973
    %s5126 = scalar_lea.vmem [#allocation1], 4
    %5127 = vst [vmem:[%s5126] ss:$9 sm:$0xff] %v4974
    %s5128 = scalar_lea.vmem [#allocation1], 5
    %5129 = vst [vmem:[%s5128] ss:$9 sm:$0xff] %v4975
    %s5130 = scalar_lea.vmem [#allocation1], 6
    %5131 = vst [vmem:[%s5130] ss:$9 sm:$0xff] %v4976
    %s5132 = scalar_lea.vmem [#allocation1], 7
    %5133 = vst [vmem:[%s5132] ss:$9 sm:$0xff] %v4977
    %v5134 = vld [vmem:[#allocation1] sm:$0xff]
    %5135 = vst [vmem:[#allocation1] ss:$9 sm:$0xff] %v4762
    %5136 = vst [vmem:[%s5120] ss:$9 sm:$0xff] %v4971
    %5137 = vst [vmem:[%s5122] ss:$9 sm:$0xff] %v4972
    %5138 = vst [vmem:[%s5124] ss:$9 sm:$0xff] %v4973
    %5139 = vst [vmem:[%s5126] ss:$9 sm:$0xff] %v4974
    %5140 = vst [vmem:[%s5128] ss:$9 sm:$0xff] %v4975
    %5141 = vst [vmem:[%s5130] ss:$9 sm:$0xff] %v4976
    %5142 = vst [vmem:[%s5132] ss:$9 sm:$0xff] %v4977
    %v5143 = vld [vmem:[#allocation1] sm:$0xff]
    %5144 = vst [vmem:[#allocation1] ss:$9 sm:$0xff] %v4762
    %5145 = vst [vmem:[%s5120] ss:$9 sm:$0xff] %v4971
    %5146 = vst [vmem:[%s5122] ss:$9 sm:$0xff] %v4972
    %5147 = vst [vmem:[%s5124] ss:$9 sm:$0xff] %v4973
    %5148 = vst [vmem:[%s5126] ss:$9 sm:$0xff] %v4974
    %5149 = vst [vmem:[%s5128] ss:$9 sm:$0xff] %v4975
    %5150 = vst [vmem:[%s5130] ss:$9 sm:$0xff] %v4976
    %5151 = vst [vmem:[%s5132] ss:$9 sm:$0xff] %v4977
    %v5152 = vld [vmem:[#allocation1] sm:$0xff]
    %5153 = vst [vmem:[#allocation1] ss:$9 sm:$0xff] %v4762
    %5154 = vst [vmem:[%s5120] ss:$9 sm:$0xff] %v4971
    %5155 = vst [vmem:[%s5122] ss:$9 sm:$0xff] %v4972
    %5156 = vst [vmem:[%s5124] ss:$9 sm:$0xff] %v4973
    %5157 = vst [vmem:[%s5126] ss:$9 sm:$0xff] %v4974
    %5158 = vst [vmem:[%s5128] ss:$9 sm:$0xff] %v4975
    %5159 = vst [vmem:[%s5130] ss:$9 sm:$0xff] %v4976
    %5160 = vst [vmem:[%s5132] ss:$9 sm:$0xff] %v4977
    %v5161 = vld [vmem:[#allocation1] sm:$0xff]
    %5162 = vst [vmem:[#allocation1] ss:$9 sm:$0xff] %v4762
    %5163 = vst [vmem:[%s5120] ss:$9 sm:$0xff] %v4971
    %5164 = vst [vmem:[%s5122] ss:$9 sm:$0xff] %v4972
    %5165 = vst [vmem:[%s5124] ss:$9 sm:$0xff] %v4762
    %5166 = vst [vmem:[%s5126] ss:$9 sm:$0xff] %v4971
    %5167 = vst [vmem:[%s5128] ss:$9 sm:$0xff] %v4972
    %5168 = vst [vmem:[%s5130] ss:$9 sm:$0xff] %v4973
    %5169 = vst [vmem:[%s5132] ss:$9 sm:$0xff] %v4974
    %v5170 = vld [vmem:[#allocation1] sm:$0xff]
    %5171 = vst [vmem:[#allocation1] ss:$9 sm:$0xff] %v4975
    %5172 = vst [vmem:[%s5120] ss:$9 sm:$0xff] %v4976
    %5173 = vst [vmem:[%s5122] ss:$9 sm:$0xff] %v4977
    %5174 = vst [vmem:[%s5124] ss:$9 sm:$0xff] %v4762
    %5175 = vst [vmem:[%s5126] ss:$9 sm:$0xff] %v4971
    %5176 = vst [vmem:[%s5128] ss:$9 sm:$0xff] %v4972
    %5177 = vst [vmem:[%s5130] ss:$9 sm:$0xff] %v4973
    %5178 = vst [vmem:[%s5132] ss:$9 sm:$0xff] %v4974
    %v5179 = vld [vmem:[#allocation1] sm:$0xff]
    %5180 = vst [vmem:[#allocation1] ss:$9 sm:$0xff] %v4975
    %5181 = vst [vmem:[%s5120] ss:$9 sm:$0xff] %v4976
    %5182 = vst [vmem:[%s5122] ss:$9 sm:$0xff] %v4977
    %5183 = vst [vmem:[%s5124] ss:$9 sm:$0xff] %v4762
    %5184 = vst [vmem:[%s5126] ss:$9 sm:$0xff] %v4971
    %5185 = vst [vmem:[%s5128] ss:$9 sm:$0xff] %v4972
    %5186 = vst [vmem:[%s5130] ss:$9 sm:$0xff] %v4973
    %5187 = vst [vmem:[%s5132] ss:$9 sm:$0xff] %v4974
    %v5188 = vld [vmem:[#allocation1] sm:$0xff]
    %5189 = vst [vmem:[#allocation1] ss:$9 sm:$0xff] %v4975
    %5190 = vst [vmem:[%s5120] ss:$9 sm:$0xff] %v4976
    %5191 = vst [vmem:[%s5122] ss:$9 sm:$0xff] %v4977
    %5192 = vst [vmem:[%s5124] ss:$9 sm:$0xff] %v4762
    %5193 = vst [vmem:[%s5126] ss:$9 sm:$0xff] %v4971
    %5194 = vst [vmem:[%s5128] ss:$9 sm:$0xff] %v4972
    %5195 = vst [vmem:[%s5130] ss:$9 sm:$0xff] %v4973
    %5196 = vst [vmem:[%s5132] ss:$9 sm:$0xff] %v4974
    %v5197 = vld [vmem:[#allocation1] sm:$0xff]
    %5198 = vst [vmem:[#allocation1] ss:$9 sm:$0xff] %v4975
    %5199 = vst [vmem:[%s5120] ss:$9 sm:$0xff] %v4976
    %5200 = vst [vmem:[%s5122] ss:$9 sm:$0xff] %v4977
    %5201 = vst [vmem:[%s5124] ss:$9 sm:$0xff] %v4762
    %5202 = vst [vmem:[%s5126] ss:$9 sm:$0xff] %v4971
    %5203 = vst [vmem:[%s5128] ss:$9 sm:$0xff] %v4972
    %v5204 = vld [vmem:[#allocation1] sm:$0xff]
    %v5214 = vsel %vm1184, %v5036, 0
    %v5216 = vsel %vm1184, %v5053, 0
    %v5218 = vsel %vm1184, %v5070, 0
    %v5220 = vsel %vm1184, %v5087, 0
    %v5222 = vsel %vm1184, %v5094, 0
    %5224 = vmatpush.bf16.msra.mxu0 0
    %5225 = vmatpush.bf16.msra.mxu0 0
    %5226 = vmatpush.bf16.msra.mxu0 0
    %5227 = vmatpush.bf16.msra.mxu0 0
    %5228 = vmatpush.bf16.msra.mxu0 %v5114
    %5229 = vmatpush.bf16.msra.mxu0 %v5113
    %5230 = vmatpush.bf16.msra.mxu0 %v5112
    %5231 = vmatpush.bf16.msra.mxu0 %v5111
    %5232 = vmatmul.bf16.gmra.mxu0 %v5214
    %v5233 = vpop.f32.mrf.mxu0
    %v5234 = vadd.f32 %v5134, %v5233
    %v5235 = vpop.f32.mrf.mxu0
    %v5236 = vadd.f32 %v5143, %v5235
    %5237 = vmatmul.bf16.gmra.mxu0 %v5216
    %v5238 = vpop.f32.mrf.mxu0
    %v5239 = vadd.f32 %v5152, %v5238
    %v5240 = vpop.f32.mrf.mxu0
    %v5241 = vadd.f32 %v5161, %v5240
    %5242 = vmatmul.bf16.gmra.mxu0 %v5218
    %v5243 = vpop.f32.mrf.mxu0
    %v5244 = vadd.f32 %v5170, %v5243
    %v5245 = vpop.f32.mrf.mxu0
    %v5246 = vadd.f32 %v5179, %v5245
    %5247 = vmatmul.bf16.gmra.mxu0 %v5220
    %v5248 = vpop.f32.mrf.mxu0
    %v5249 = vadd.f32 %v5188, %v5248
    %v5250 = vpop.f32.mrf.mxu0
    %v5251 = vadd.f32 %v5197, %v5250
    %5252 = vmatmul.bf16.gmra.mxu0 %v5222
    %v5253 = vpop.f32.mrf.mxu0
    %v5254 = vadd.f32 %v5204, %v5253
    %v5255 = vpop.f32.mrf.mxu0
    %5256 = vdwg.mxu0
    %v5266 = vrot.slane %v5234, 1
    %v5267 = vrot.slane %v5234, 2
    %v5268 = vrot.slane %v5234, 3
    %v5269 = vrot.slane %v5234, 4
    %v5270 = vrot.slane %v5234, 5
    %v5271 = vrot.slane %v5234, 6
    %v5272 = vrot.slane %v5234, 7
    %v5273 = vrot.slane %v5236, 1
    %v5274 = vrot.slane %v5236, 2
    %v5275 = vrot.slane %v5236, 3
    %v5276 = vrot.slane %v5236, 4
    %v5277 = vrot.slane %v5236, 5
    %v5278 = vrot.slane %v5236, 6
    %v5279 = vrot.slane %v5236, 7
    %v5280 = vrot.slane %v5239, 1
    %v5281 = vrot.slane %v5239, 2
    %v5282 = vrot.slane %v5239, 3
    %v5283 = vrot.slane %v5239, 4
    %v5284 = vrot.slane %v5239, 5
    %v5285 = vrot.slane %v5239, 6
    %v5286 = vrot.slane %v5239, 7
    %v5287 = vrot.slane %v5241, 1
    %v5288 = vrot.slane %v5241, 2
    %v5289 = vrot.slane %v5241, 3
    %v5290 = vrot.slane %v5241, 4
    %v5291 = vrot.slane %v5241, 5
    %v5292 = vrot.slane %v5241, 6
    %v5293 = vrot.slane %v5241, 7
    %v5294 = vrot.slane %v5244, 1
    %v5295 = vrot.slane %v5244, 2
    %v5296 = vrot.slane %v5244, 3
    %v5297 = vrot.slane %v5244, 4
    %v5298 = vrot.slane %v5244, 5
    %v5299 = vrot.slane %v5244, 6
    %v5300 = vrot.slane %v5244, 7
    %v5301 = vrot.slane %v5246, 1
    %v5302 = vrot.slane %v5246, 2
    %v5303 = vrot.slane %v5246, 3
    %v5304 = vrot.slane %v5246, 4
    %v5305 = vrot.slane %v5246, 5
    %v5306 = vrot.slane %v5246, 6
    %v5307 = vrot.slane %v5246, 7
    %v5308 = vrot.slane %v5249, 1
    %v5309 = vrot.slane %v5249, 2
    %v5310 = vrot.slane %v5249, 3
    %v5311 = vrot.slane %v5249, 4
    %v5312 = vrot.slane %v5249, 5
    %v5313 = vrot.slane %v5249, 6
    %v5314 = vrot.slane %v5249, 7
    %v5315 = vrot.slane %v5251, 1
    %v5316 = vrot.slane %v5251, 2
    %v5317 = vrot.slane %v5251, 3
    %v5318 = vrot.slane %v5251, 4
    %v5319 = vrot.slane %v5251, 5
    %v5320 = vrot.slane %v5251, 6
    %v5321 = vrot.slane %v5251, 7
    %v5322 = vrot.slane %v5254, 1
    %v5323 = vrot.slane %v5254, 2
    %v5324 = vrot.slane %v5254, 3
    %v5325 = vrot.slane %v5254, 4
    %v5326 = vrot.slane %v5254, 5
    %5327 = vst [vmem:[#allocation1] ss:$9 sm:$0xff] %v5234
    %s5328 = scalar_lea.vmem [#allocation1], 1
    %5329 = vst [vmem:[%s5328] ss:$9 sm:$0xff] %v5266
    %s5330 = scalar_lea.vmem [#allocation1], 2
    %5331 = vst [vmem:[%s5330] ss:$9 sm:$0xff] %v5267
    %s5332 = scalar_lea.vmem [#allocation1], 3
    %5333 = vst [vmem:[%s5332] ss:$9 sm:$0xff] %v5268
    %s5334 = scalar_lea.vmem [#allocation1], 4
    %5335 = vst [vmem:[%s5334] ss:$9 sm:$0xff] %v5269
    %s5336 = scalar_lea.vmem [#allocation1], 5
    %5337 = vst [vmem:[%s5336] ss:$9 sm:$0xff] %v5270
    %s5338 = scalar_lea.vmem [#allocation1], 6
    %5339 = vst [vmem:[%s5338] ss:$9 sm:$0xff] %v5271
    %s5340 = scalar_lea.vmem [#allocation1], 7
    %5341 = vst [vmem:[%s5340] ss:$9 sm:$0xff] %v5272
    %v5342 = vld [vmem:[#allocation1] sm:$0xff]
    %5343 = vst [vmem:[#allocation1] ss:$9 sm:$0xff] %v5236
    %5344 = vst [vmem:[%s5328] ss:$9 sm:$0xff] %v5273
    %5345 = vst [vmem:[%s5330] ss:$9 sm:$0xff] %v5274
    %5346 = vst [vmem:[%s5332] ss:$9 sm:$0xff] %v5275
    %5347 = vst [vmem:[%s5334] ss:$9 sm:$0xff] %v5276
    %5348 = vst [vmem:[%s5336] ss:$9 sm:$0xff] %v5277
    %5349 = vst [vmem:[%s5338] ss:$9 sm:$0xff] %v5278
    %5350 = vst [vmem:[%s5340] ss:$9 sm:$0xff] %v5279
    %v5351 = vld [vmem:[#allocation1] sm:$0xff]
    %5352 = vst [vmem:[#allocation1] ss:$9 sm:$0xff] %v5239
    %5353 = vst [vmem:[%s5328] ss:$9 sm:$0xff] %v5280
    %5354 = vst [vmem:[%s5330] ss:$9 sm:$0xff] %v5281
    %5355 = vst [vmem:[%s5332] ss:$9 sm:$0xff] %v5282
    %5356 = vst [vmem:[%s5334] ss:$9 sm:$0xff] %v5283
    %5357 = vst [vmem:[%s5336] ss:$9 sm:$0xff] %v5284
    %5358 = vst [vmem:[%s5338] ss:$9 sm:$0xff] %v5285
    %5359 = vst [vmem:[%s5340] ss:$9 sm:$0xff] %v5286
    %v5360 = vld [vmem:[#allocation1] sm:$0xff]
    %5361 = vst [vmem:[#allocation1] ss:$9 sm:$0xff] %v5241
    %5362 = vst [vmem:[%s5328] ss:$9 sm:$0xff] %v5287
    %5363 = vst [vmem:[%s5330] ss:$9 sm:$0xff] %v5288
    %5364 = vst [vmem:[%s5332] ss:$9 sm:$0xff] %v5289
    %5365 = vst [vmem:[%s5334] ss:$9 sm:$0xff] %v5290
    %5366 = vst [vmem:[%s5336] ss:$9 sm:$0xff] %v5291
    %5367 = vst [vmem:[%s5338] ss:$9 sm:$0xff] %v5292
    %5368 = vst [vmem:[%s5340] ss:$9 sm:$0xff] %v5293
    %v5369 = vld [vmem:[#allocation1] sm:$0xff]
    %5370 = vst [vmem:[#allocation1] ss:$9 sm:$0xff] %v5244
    %5371 = vst [vmem:[%s5328] ss:$9 sm:$0xff] %v5294
    %5372 = vst [vmem:[%s5330] ss:$9 sm:$0xff] %v5295
    %v5373 = vld [vmem:[#allocation1] sm:$0xff]
    %5374 = vst [vmem:[#allocation1] ss:$9 sm:$0xff] %v5296
    %5375 = vst [vmem:[%s5328] ss:$9 sm:$0xff] %v5297
    %5376 = vst [vmem:[%s5330] ss:$9 sm:$0xff] %v5298
    %5377 = vst [vmem:[%s5332] ss:$9 sm:$0xff] %v5299
    %5378 = vst [vmem:[%s5334] ss:$9 sm:$0xff] %v5300
    %5379 = vst [vmem:[%s5336] ss:$9 sm:$0xff] %v5246
    %5380 = vst [vmem:[%s5338] ss:$9 sm:$0xff] %v5301
    %5381 = vst [vmem:[%s5340] ss:$9 sm:$0xff] %v5302
    %v5382 = vld [vmem:[#allocation1] sm:$0xff]
    %5383 = vst [vmem:[#allocation1] ss:$9 sm:$0xff] %v5303
    %5384 = vst [vmem:[%s5328] ss:$9 sm:$0xff] %v5304
    %5385 = vst [vmem:[%s5330] ss:$9 sm:$0xff] %v5305
    %5386 = vst [vmem:[%s5332] ss:$9 sm:$0xff] %v5306
    %5387 = vst [vmem:[%s5334] ss:$9 sm:$0xff] %v5307
    %5388 = vst [vmem:[%s5336] ss:$9 sm:$0xff] %v5249
    %5389 = vst [vmem:[%s5338] ss:$9 sm:$0xff] %v5308
    %5390 = vst [vmem:[%s5340] ss:$9 sm:$0xff] %v5309
    %v5391 = vld [vmem:[#allocation1] sm:$0xff]
    %5392 = vst [vmem:[#allocation1] ss:$9 sm:$0xff] %v5310
    %5393 = vst [vmem:[%s5328] ss:$9 sm:$0xff] %v5311
    %5394 = vst [vmem:[%s5330] ss:$9 sm:$0xff] %v5312
    %5395 = vst [vmem:[%s5332] ss:$9 sm:$0xff] %v5313
    %5396 = vst [vmem:[%s5334] ss:$9 sm:$0xff] %v5314
    %5397 = vst [vmem:[%s5336] ss:$9 sm:$0xff] %v5251
    %5398 = vst [vmem:[%s5338] ss:$9 sm:$0xff] %v5315
    %5399 = vst [vmem:[%s5340] ss:$9 sm:$0xff] %v5316
    %v5400 = vld [vmem:[#allocation1] sm:$0xff]
    %5401 = vst [vmem:[#allocation1] ss:$9 sm:$0xff] %v5317
    %5402 = vst [vmem:[%s5328] ss:$9 sm:$0xff] %v5318
    %5403 = vst [vmem:[%s5330] ss:$9 sm:$0xff] %v5319
    %5404 = vst [vmem:[%s5332] ss:$9 sm:$0xff] %v5320
    %5405 = vst [vmem:[%s5334] ss:$9 sm:$0xff] %v5321
    %5406 = vst [vmem:[%s5336] ss:$9 sm:$0xff] %v5254
    %5407 = vst [vmem:[%s5338] ss:$9 sm:$0xff] %v5322
    %5408 = vst [vmem:[%s5340] ss:$9 sm:$0xff] %v5323
    %v5409 = vld [vmem:[#allocation1] sm:$0xff]
    %5410 = vst [vmem:[#allocation1] ss:$9 sm:$0xff] %v5324
    %5411 = vst [vmem:[%s5328] ss:$9 sm:$0xff] %v5325
    %5412 = vst [vmem:[%s5330] ss:$9 sm:$0xff] %v5326
    %v5413 = vld [vmem:[#allocation1] sm:$0xff]
    %vm5424 = vcmask 195584
    %5425 = vst.msk [vmem:[%s11] sm:$0xff] %vm5424, %v5342
    %5426 = vst.msk [vmem:[%s11 + $0x8] sm:$0xff] %vm5424, %v5351
    %5427 = vst.msk [vmem:[%s11 + $0x10] sm:$0xff] %vm5424, %v5360
    %5428 = vst.msk [vmem:[%s11 + $0x18] sm:$0xff] %vm5424, %v5369
    %vm5429 = vcmask 190464
    %5430 = vst.msk [vmem:[%s11 + $0x20] sm:$0x7] %vm5429, %v5373
    %5431 = vst.msk [vmem:[%s11 + $0x28] sm:$0xff] %vm5424, %v5382
    %5432 = vst.msk [vmem:[%s11 + $0x30] sm:$0xff] %vm5424, %v5391
    %5433 = vst.msk [vmem:[%s11 + $0x38] sm:$0xff] %vm5424, %v5400
    %5434 = vst.msk [vmem:[%s11 + $0x40] sm:$0xff] %vm5424, %v5409
    %5435 = vst.msk [vmem:[%s11 + $0x48] sm:$0x7] %vm5429, %v5413
    // Predicated region
    $region66: #{_lambda_.1} parent=1 // pred_check
      _
    $region67: #{_lambda_.1} parent=1 // pred_check_branch
      %5437 = sbr.rel (0) target = $region69
    $region68: #{_lambda_.1} parent=1 // pred_region
      _
    $region69: #{_lambda_.1} parent=1 // pred_fallthru
      _
    // Predicated region
    $region70: #{_lambda_.1} parent=1 // pred_check
      _
    $region71: #{_lambda_.1} parent=1 // pred_check_branch
      %5439 = sbr.rel (0) target = $region73
    $region72: #{_lambda_.1} parent=1 // pred_region
      _
    $region73: #{_lambda_.1} parent=1 // pred_fallthru
      _
    %5440 = vsyncpa [#allocation4], 1
    %5441 = vsyncpa [#allocation6], 1
    %5442 = vsyncpa [#allocation9], 1

</llo_original>
